<compile_context>
chip_gen: v7x
topology: tpu7x:2x2x1
jax: 0.10.0
libtpu: 0.0.40
codegen_flags: <defaults>
</compile_context>

<pallas_src>
import functools

import jax
import jax.numpy as jnp
from jax.experimental import pallas as pl
from jax.experimental.pallas import tpu as pltpu


# --------------------------------------------------------------------------
# Fused Pallas kernel: one batch element per grid step.
# --------------------------------------------------------------------------
def _dou_conv_fused_kernel(x_ref, band1_ref, b1_ref, band2_ref, b2_ref, o_ref,
                           h1pad_ref, *, D, H, W, k, C1, C2, act):
    # x_ref    : (1, Dp, Hp, Wp*Cin)      bf16  replicate-padded input, fused (w,c) minor
    # band1_ref: (k, k, Wp*Cin, W*C1)     bf16  banded conv1 weights per (kd,kh)
    # b1_ref   : (1, W*C1)                f32   bias tiled over w
    # band2_ref: (k, k, Wp*C1, W*C2)      bf16
    # b2_ref   : (1, W*C2)                f32
    # o_ref    : (1, D, H, W*C2)          f32   lane-dense output
    # h1pad_ref: VMEM scratch (Dp, Hp, Wp*C1) bf16 (padded conv1 output)
    M = D * H

    # ---------------- conv1 (9 banded MXU matmuls) + LeakyReLU ----------------
    acc = jnp.zeros((M, W * C1), jnp.float32)
    for kd in range(k):
        for kh in range(k):
            xs = x_ref[0, kd:kd + D, kh:kh + H, :]          # (D, H, Wp*Cin) bf16
            xs2 = xs.reshape(M, -1)                          # leading-dim collapse
            acc = acc + jnp.dot(xs2, band1_ref[kd, kh],
                                preferred_element_type=jnp.float32)
    acc = acc + b1_ref[...]                                  # bias once, after tap sum
    h1 = jnp.where(acc >= 0, acc, jnp.float32(0.01) * acc)   # LeakyReLU(0.01)
    h1 = h1.astype(jnp.bfloat16).reshape(D, H, W * C1)

    # ---- replicate-pad conv1 output in registers, one full-tile scratch store ----
    # W faces (fused minor: one C1-wide block each side), then H, then D; corners
    # end up equal to the nearest interior value, matching PyTorch 'replicate'.
    h1 = jnp.concatenate([h1[:, :, :C1], h1, h1[:, :, -C1:]], axis=2)  # (D, H, Wp*C1)
    h1 = jnp.concatenate([h1[:, :1], h1, h1[:, -1:]], axis=1)          # (D, Hp, Wp*C1)
    h1 = jnp.concatenate([h1[:1], h1, h1[-1:]], axis=0)                # (Dp, Hp, Wp*C1)
    h1pad_ref[...] = h1

    # ---------------- conv2 (9 banded MXU matmuls) + final activation ----------
    acc2 = jnp.zeros((M, W * C2), jnp.float32)
    for kd in range(k):
        for kh in range(k):
            hs = h1pad_ref[kd:kd + D, kh:kh + H, :].reshape(M, -1)     # (M, Wp*C1) bf16
            acc2 = acc2 + jnp.dot(hs, band2_ref[kd, kh],
                                  preferred_element_type=jnp.float32)
    acc2 = acc2 + b2_ref[...]
    if act == "relu":
        acc2 = jnp.maximum(acc2, jnp.float32(0.0))
    elif act == "tanh" or act is None:
        acc2 = jnp.tanh(acc2)
    elif act == "LeakyReLU":
        acc2 = jnp.where(acc2 >= 0, acc2, jnp.float32(0.01) * acc2)
    # act == "linear": identity
    o_ref[0] = acc2.reshape(D, H, W * C2).astype(o_ref.dtype)


# --------------------------------------------------------------------------
# Wrapper: layout prep (fused channels-last halo slab, banded weights) + pallas_call
# --------------------------------------------------------------------------
def _make_band(w, Wp, W):
    """w: (Cout, Cin, k, k, k) PyTorch layout -> banded (k, k, Wp*Cin, W*Cout) bf16.

    band[kd, kh, (wp, cin), (w, cout)] = w[cout, cin, kd, kh, wp - w]
    for 0 <= wp - w < k, else 0.  Folds the W-axis taps into the contraction dim.
    """
    Cout, Cin, k = w.shape[0], w.shape[1], w.shape[2]
    wt = jnp.transpose(w, (2, 3, 4, 1, 0))                   # (kd, kh, kw, Cin, Cout)
    band = jnp.zeros((k, k, Wp, Cin, W, Cout), jnp.float32)
    for wi in range(W):
        band = band.at[:, :, wi:wi + k, :, wi, :].set(wt)
    return band.reshape(k, k, Wp * Cin, W * Cout).astype(jnp.bfloat16)


def dou_conv_forward(x, params, act="relu"):
    """x: (N, Cin, D, H, W) f32; params use the PyTorch Conv3d weight layout."""
    N, Cin, D, H, W = x.shape
    w1, b1, w2, b2 = params["w1"], params["b1"], params["w2"], params["b2"]
    C1, C2 = w1.shape[0], w2.shape[0]
    k = w1.shape[-1]
    p = k // 2
    Dp, Hp, Wp = D + 2 * p, H + 2 * p, W + 2 * p

    # Channels-last + replicate ("edge") halo; fuse (W, Cin) into the minor dim;
    # activation stream travels as bf16.
    xcl = jnp.transpose(x, (0, 2, 3, 4, 1))                       # (N, D, H, W, Cin)
    xpad = jnp.pad(xcl, ((0, 0), (p, p), (p, p), (p, p), (0, 0)), mode="edge")
    xpad = xpad.reshape(N, Dp, Hp, Wp * Cin).astype(jnp.bfloat16)

    # Banded bf16 weights (W-taps folded into K); biases tiled over w (f32).
    band1 = _make_band(w1, Wp, W)                                 # (k, k, Wp*Cin, W*C1)
    band2 = _make_band(w2, Wp, W)                                 # (k, k, Wp*C1,  W*C2)
    b1_row = jnp.tile(b1[None, :], (W, 1)).reshape(1, W * C1).astype(jnp.float32)
    b2_row = jnp.tile(b2[None, :], (W, 1)).reshape(1, W * C2).astype(jnp.float32)

    kernel = functools.partial(_dou_conv_fused_kernel,
                               D=D, H=H, W=W, k=k, C1=C1, C2=C2, act=act)

    # Actual MACs performed (banded form ~ Wp/k x the true conv FLOPs).
    flops = 2 * N * (D * H) * (k * k) * (Wp * Cin * W * C1 + Wp * C1 * W * C2)
    transcendentals = N * D * H * W * C2 if (act == "tanh" or act is None) else 0
    bytes_accessed = (int(xpad.size) * 2 + int(band1.size) * 2 + int(band2.size) * 2
                      + (W * C1 + W * C2) * 4 + N * D * H * W * C2 * 4)

    out_cl = pl.pallas_call(
        kernel,
        out_shape=jax.ShapeDtypeStruct((N, D, H, W * C2), jnp.float32),
        grid=(N,),
        in_specs=[
            pl.BlockSpec((1, Dp, Hp, Wp * Cin), lambda n: (n, 0, 0, 0)),
            pl.BlockSpec((k, k, Wp * Cin, W * C1), lambda n: (0, 0, 0, 0)),
            pl.BlockSpec((1, W * C1), lambda n: (0, 0)),
            pl.BlockSpec((k, k, Wp * C1, W * C2), lambda n: (0, 0, 0, 0)),
            pl.BlockSpec((1, W * C2), lambda n: (0, 0)),
        ],
        out_specs=pl.BlockSpec((1, D, H, W * C2), lambda n: (n, 0, 0, 0)),
        scratch_shapes=[pltpu.VMEM((Dp, Hp, Wp * C1), jnp.bfloat16)],
        compiler_params=pltpu.CompilerParams(
            dimension_semantics=("parallel",),        # batch shards across v7x's 2 TCs
            vmem_limit_bytes=32 * 1024 * 1024,        # explicit budget (v5e/v6e/v7x safe)
        ),
        cost_estimate=pl.CostEstimate(flops=flops,
                                      transcendentals=transcendentals,
                                      bytes_accessed=bytes_accessed),
    )(xpad, band1, b1_row, band2, b2_row)

    # Un-fuse the lane-dense output and return NCDHW (outside-kernel layout fixup).
    out = out_cl.reshape(N, D, H, W, C2)
    return jnp.transpose(out, (0, 4, 1, 2, 3))


def init_params(key, in_channel, out_channel, ksize):
    k1, k2, k3, k4 = jax.random.split(key, 4)
    co1, co2 = out_channel
    # Deterministic small-scale init (synthetic; no checkpoint load).
    w1 = 0.1 * jax.random.normal(k1, (co1, in_channel, ksize, ksize, ksize), jnp.float32)
    b1 = 0.1 * jax.random.normal(k2, (co1,), jnp.float32)
    w2 = 0.1 * jax.random.normal(k3, (co2, co1, ksize, ksize, ksize), jnp.float32)
    b2 = 0.1 * jax.random.normal(k4, (co2,), jnp.float32)
    return {"w1": w1, "b1": b1, "w2": w2, "b2": b2}


# --------------------------------------------------------------------------
# Pure-JAX f32 reference (XLA conv) for the correctness check.
# --------------------------------------------------------------------------
def _ref_conv3d_replicate(x, w, b):
    p = w.shape[-1] // 2
    xp = jnp.pad(x, ((0, 0), (0, 0), (p, p), (p, p), (p, p)), mode="edge")
    y = jax.lax.conv_general_dilated(
        xp, w, window_strides=(1, 1, 1), padding="VALID",
        dimension_numbers=("NCDHW", "OIDHW", "NCDHW"))
    return y + b[None, :, None, None, None]


def _ref_dou_conv(x, params, act="relu"):
    h = _ref_conv3d_replicate(x, params["w1"], params["b1"])
    h = jnp.where(h >= 0, h, 0.01 * h)                          # LeakyReLU
    y = _ref_conv3d_replicate(h, params["w2"], params["b2"])
    if act == "relu":
        y = jnp.maximum(y, 0.0)
    elif act == "tanh" or act is None:
        y = jnp.tanh(y)
    elif act == "LeakyReLU":
        y = jnp.where(y >= 0, y, 0.01 * y)
    return y


if __name__ == "__main__":
    # Small 5-D input consistent with Conv3d: (N, C, D, H, W)
    N, Cin, D, H, W = 2, 3, 4, 8, 8
    out_channel = [16, 16]
    ksize = 3

    key = jax.random.PRNGKey(0)
    kx, kp = jax.random.split(key)
    x = jax.random.normal(kx, (N, Cin, D, H, W), jnp.float32)
    params = init_params(kp, Cin, out_channel, ksize)

    y = dou_conv_forward(x, params, act="relu")
    y = jax.block_until_ready(y)

    ref = _ref_dou_conv(x, params, act="relu")
    assert y.shape == (N, out_channel[1], D, H, W)
    max_err = float(jnp.max(jnp.abs(y - ref)))
    # Activations AND weights are bf16 on the MXU (per perf review); accumulation
    # is f32, so the error stays well inside this tolerance.
    assert jnp.allclose(y, ref, atol=8e-2, rtol=8e-2), f"max abs err {max_err}"

    print("KERNEL_OK")
</pallas_src>

<mosaic_0001>
module attributes {stable_mosaic.version = 11 : i64} {
  func.func @_dou_conv_fused_kernel(%arg0: i32, %arg1: memref<1x6x10x30xbf16, #tpu.memory_space<vmem>>, %arg2: memref<3x3x30x128xbf16, #tpu.memory_space<vmem>>, %arg3: memref<1x128xf32, #tpu.memory_space<vmem>>, %arg4: memref<3x3x160x128xbf16, #tpu.memory_space<vmem>>, %arg5: memref<1x128xf32, #tpu.memory_space<vmem>>, %arg6: memref<1x4x8x128xf32, #tpu.memory_space<vmem>>, %arg7: memref<6x10x160xbf16, #tpu.memory_space<vmem>>) attributes {dimension_semantics = [#tpu.dimension_semantics<parallel>], iteration_bounds = array<i64: 2>, scalar_prefetch = 0 : i64, scratch_operands = 1 : i64, tpu.core_type = #tpu.core_type<tc>, window_params = [{transform_indices = @transform_0, window_bounds = array<i64: 1, 6, 10, 30>}, {pipeline_mode = #tpu.pipeline_mode<synchronous>, transform_indices = @transform_1, window_bounds = array<i64: 3, 3, 30, 128>}, {pipeline_mode = #tpu.pipeline_mode<synchronous>, transform_indices = @transform_2, window_bounds = array<i64: 1, 128>}, {pipeline_mode = #tpu.pipeline_mode<synchronous>, transform_indices = @transform_3, window_bounds = array<i64: 3, 3, 160, 128>}, {pipeline_mode = #tpu.pipeline_mode<synchronous>, transform_indices = @transform_4, window_bounds = array<i64: 1, 128>}, {transform_indices = @transform_5, window_bounds = array<i64: 1, 4, 8, 128>}]} {
    %cst = arith.constant 0.000000e+00 : f32
    %0 = vector.broadcast %cst : f32 to vector<32x128xf32>
    %c0 = arith.constant 0 : index
    %c0_0 = arith.constant 0 : index
    %c0_1 = arith.constant 0 : index
    %c0_2 = arith.constant 0 : index
    %1 = vector.load %arg1[%c0, %c0_0, %c0_1, %c0_2] : memref<1x6x10x30xbf16, #tpu.memory_space<vmem>>, vector<1x4x8x30xbf16>
    %2 = vector.shape_cast %1 : vector<1x4x8x30xbf16> to vector<4x8x30xbf16>
    %3 = vector.shape_cast %2 : vector<4x8x30xbf16> to vector<32x30xbf16>
    %c0_3 = arith.constant 0 : index
    %c0_4 = arith.constant 0 : index
    %c0_5 = arith.constant 0 : index
    %c0_6 = arith.constant 0 : index
    %4 = vector.load %arg2[%c0_3, %c0_4, %c0_5, %c0_6] : memref<3x3x30x128xbf16, #tpu.memory_space<vmem>>, vector<1x1x30x128xbf16>
    %5 = vector.shape_cast %4 : vector<1x1x30x128xbf16> to vector<30x128xbf16>
    %cst_7 = arith.constant dense<0.000000e+00> : vector<32x128xf32>
    %6 = tpu.matmul %3, %5, %cst_7 {dimension_numbers = #tpu.dot_dimension_numbers<[1], [0], [0], [1], [0, 0, 1, 1], [], []>} : vector<32x30xbf16>, vector<30x128xbf16>, vector<32x128xf32> -> vector<32x128xf32>
    %7 = arith.addf %0, %6 : vector<32x128xf32>
    %c0_8 = arith.constant 0 : index
    %c0_9 = arith.constant 0 : index
    %c1 = arith.constant 1 : index
    %c0_10 = arith.constant 0 : index
    %8 = vector.load %arg1[%c0_8, %c0_9, %c1, %c0_10] : memref<1x6x10x30xbf16, #tpu.memory_space<vmem>>, vector<1x4x8x30xbf16>
    %9 = vector.shape_cast %8 : vector<1x4x8x30xbf16> to vector<4x8x30xbf16>
    %10 = vector.shape_cast %9 : vector<4x8x30xbf16> to vector<32x30xbf16>
    %c0_11 = arith.constant 0 : index
    %c1_12 = arith.constant 1 : index
    %c0_13 = arith.constant 0 : index
    %c0_14 = arith.constant 0 : index
    %11 = vector.load %arg2[%c0_11, %c1_12, %c0_13, %c0_14] : memref<3x3x30x128xbf16, #tpu.memory_space<vmem>>, vector<1x1x30x128xbf16>
    %12 = vector.shape_cast %11 : vector<1x1x30x128xbf16> to vector<30x128xbf16>
    %cst_15 = arith.constant dense<0.000000e+00> : vector<32x128xf32>
    %13 = tpu.matmul %10, %12, %cst_15 {dimension_numbers = #tpu.dot_dimension_numbers<[1], [0], [0], [1], [0, 0, 1, 1], [], []>} : vector<32x30xbf16>, vector<30x128xbf16>, vector<32x128xf32> -> vector<32x128xf32>
    %14 = arith.addf %7, %13 : vector<32x128xf32>
    %c0_16 = arith.constant 0 : index
    %c0_17 = arith.constant 0 : index
    %c2 = arith.constant 2 : index
    %c0_18 = arith.constant 0 : index
    %15 = vector.load %arg1[%c0_16, %c0_17, %c2, %c0_18] : memref<1x6x10x30xbf16, #tpu.memory_space<vmem>>, vector<1x4x8x30xbf16>
    %16 = vector.shape_cast %15 : vector<1x4x8x30xbf16> to vector<4x8x30xbf16>
    %17 = vector.shape_cast %16 : vector<4x8x30xbf16> to vector<32x30xbf16>
    %c0_19 = arith.constant 0 : index
    %c2_20 = arith.constant 2 : index
    %c0_21 = arith.constant 0 : index
    %c0_22 = arith.constant 0 : index
    %18 = vector.load %arg2[%c0_19, %c2_20, %c0_21, %c0_22] : memref<3x3x30x128xbf16, #tpu.memory_space<vmem>>, vector<1x1x30x128xbf16>
    %19 = vector.shape_cast %18 : vector<1x1x30x128xbf16> to vector<30x128xbf16>
    %cst_23 = arith.constant dense<0.000000e+00> : vector<32x128xf32>
    %20 = tpu.matmul %17, %19, %cst_23 {dimension_numbers = #tpu.dot_dimension_numbers<[1], [0], [0], [1], [0, 0, 1, 1], [], []>} : vector<32x30xbf16>, vector<30x128xbf16>, vector<32x128xf32> -> vector<32x128xf32>
    %21 = arith.addf %14, %20 : vector<32x128xf32>
    %c0_24 = arith.constant 0 : index
    %c1_25 = arith.constant 1 : index
    %c0_26 = arith.constant 0 : index
    %c0_27 = arith.constant 0 : index
    %22 = vector.load %arg1[%c0_24, %c1_25, %c0_26, %c0_27] : memref<1x6x10x30xbf16, #tpu.memory_space<vmem>>, vector<1x4x8x30xbf16>
    %23 = vector.shape_cast %22 : vector<1x4x8x30xbf16> to vector<4x8x30xbf16>
    %24 = vector.shape_cast %23 : vector<4x8x30xbf16> to vector<32x30xbf16>
    %c1_28 = arith.constant 1 : index
    %c0_29 = arith.constant 0 : index
    %c0_30 = arith.constant 0 : index
    %c0_31 = arith.constant 0 : index
    %25 = vector.load %arg2[%c1_28, %c0_29, %c0_30, %c0_31] : memref<3x3x30x128xbf16, #tpu.memory_space<vmem>>, vector<1x1x30x128xbf16>
    %26 = vector.shape_cast %25 : vector<1x1x30x128xbf16> to vector<30x128xbf16>
    %cst_32 = arith.constant dense<0.000000e+00> : vector<32x128xf32>
    %27 = tpu.matmul %24, %26, %cst_32 {dimension_numbers = #tpu.dot_dimension_numbers<[1], [0], [0], [1], [0, 0, 1, 1], [], []>} : vector<32x30xbf16>, vector<30x128xbf16>, vector<32x128xf32> -> vector<32x128xf32>
    %28 = arith.addf %21, %27 : vector<32x128xf32>
    %c0_33 = arith.constant 0 : index
    %c1_34 = arith.constant 1 : index
    %c1_35 = arith.constant 1 : index
    %c0_36 = arith.constant 0 : index
    %29 = vector.load %arg1[%c0_33, %c1_34, %c1_35, %c0_36] : memref<1x6x10x30xbf16, #tpu.memory_space<vmem>>, vector<1x4x8x30xbf16>
    %30 = vector.shape_cast %29 : vector<1x4x8x30xbf16> to vector<4x8x30xbf16>
    %31 = vector.shape_cast %30 : vector<4x8x30xbf16> to vector<32x30xbf16>
    %c1_37 = arith.constant 1 : index
    %c1_38 = arith.constant 1 : index
    %c0_39 = arith.constant 0 : index
    %c0_40 = arith.constant 0 : index
    %32 = vector.load %arg2[%c1_37, %c1_38, %c0_39, %c0_40] : memref<3x3x30x128xbf16, #tpu.memory_space<vmem>>, vector<1x1x30x128xbf16>
    %33 = vector.shape_cast %32 : vector<1x1x30x128xbf16> to vector<30x128xbf16>
    %cst_41 = arith.constant dense<0.000000e+00> : vector<32x128xf32>
    %34 = tpu.matmul %31, %33, %cst_41 {dimension_numbers = #tpu.dot_dimension_numbers<[1], [0], [0], [1], [0, 0, 1, 1], [], []>} : vector<32x30xbf16>, vector<30x128xbf16>, vector<32x128xf32> -> vector<32x128xf32>
    %35 = arith.addf %28, %34 : vector<32x128xf32>
    %c0_42 = arith.constant 0 : index
    %c1_43 = arith.constant 1 : index
    %c2_44 = arith.constant 2 : index
    %c0_45 = arith.constant 0 : index
    %36 = vector.load %arg1[%c0_42, %c1_43, %c2_44, %c0_45] : memref<1x6x10x30xbf16, #tpu.memory_space<vmem>>, vector<1x4x8x30xbf16>
    %37 = vector.shape_cast %36 : vector<1x4x8x30xbf16> to vector<4x8x30xbf16>
    %38 = vector.shape_cast %37 : vector<4x8x30xbf16> to vector<32x30xbf16>
    %c1_46 = arith.constant 1 : index
    %c2_47 = arith.constant 2 : index
    %c0_48 = arith.constant 0 : index
    %c0_49 = arith.constant 0 : index
    %39 = vector.load %arg2[%c1_46, %c2_47, %c0_48, %c0_49] : memref<3x3x30x128xbf16, #tpu.memory_space<vmem>>, vector<1x1x30x128xbf16>
    %40 = vector.shape_cast %39 : vector<1x1x30x128xbf16> to vector<30x128xbf16>
    %cst_50 = arith.constant dense<0.000000e+00> : vector<32x128xf32>
    %41 = tpu.matmul %38, %40, %cst_50 {dimension_numbers = #tpu.dot_dimension_numbers<[1], [0], [0], [1], [0, 0, 1, 1], [], []>} : vector<32x30xbf16>, vector<30x128xbf16>, vector<32x128xf32> -> vector<32x128xf32>
    %42 = arith.addf %35, %41 : vector<32x128xf32>
    %c0_51 = arith.constant 0 : index
    %c2_52 = arith.constant 2 : index
    %c0_53 = arith.constant 0 : index
    %c0_54 = arith.constant 0 : index
    %43 = vector.load %arg1[%c0_51, %c2_52, %c0_53, %c0_54] : memref<1x6x10x30xbf16, #tpu.memory_space<vmem>>, vector<1x4x8x30xbf16>
    %44 = vector.shape_cast %43 : vector<1x4x8x30xbf16> to vector<4x8x30xbf16>
    %45 = vector.shape_cast %44 : vector<4x8x30xbf16> to vector<32x30xbf16>
    %c2_55 = arith.constant 2 : index
    %c0_56 = arith.constant 0 : index
    %c0_57 = arith.constant 0 : index
    %c0_58 = arith.constant 0 : index
    %46 = vector.load %arg2[%c2_55, %c0_56, %c0_57, %c0_58] : memref<3x3x30x128xbf16, #tpu.memory_space<vmem>>, vector<1x1x30x128xbf16>
    %47 = vector.shape_cast %46 : vector<1x1x30x128xbf16> to vector<30x128xbf16>
    %cst_59 = arith.constant dense<0.000000e+00> : vector<32x128xf32>
    %48 = tpu.matmul %45, %47, %cst_59 {dimension_numbers = #tpu.dot_dimension_numbers<[1], [0], [0], [1], [0, 0, 1, 1], [], []>} : vector<32x30xbf16>, vector<30x128xbf16>, vector<32x128xf32> -> vector<32x128xf32>
    %49 = arith.addf %42, %48 : vector<32x128xf32>
    %c0_60 = arith.constant 0 : index
    %c2_61 = arith.constant 2 : index
    %c1_62 = arith.constant 1 : index
    %c0_63 = arith.constant 0 : index
    %50 = vector.load %arg1[%c0_60, %c2_61, %c1_62, %c0_63] : memref<1x6x10x30xbf16, #tpu.memory_space<vmem>>, vector<1x4x8x30xbf16>
    %51 = vector.shape_cast %50 : vector<1x4x8x30xbf16> to vector<4x8x30xbf16>
    %52 = vector.shape_cast %51 : vector<4x8x30xbf16> to vector<32x30xbf16>
    %c2_64 = arith.constant 2 : index
    %c1_65 = arith.constant 1 : index
    %c0_66 = arith.constant 0 : index
    %c0_67 = arith.constant 0 : index
    %53 = vector.load %arg2[%c2_64, %c1_65, %c0_66, %c0_67] : memref<3x3x30x128xbf16, #tpu.memory_space<vmem>>, vector<1x1x30x128xbf16>
    %54 = vector.shape_cast %53 : vector<1x1x30x128xbf16> to vector<30x128xbf16>
    %cst_68 = arith.constant dense<0.000000e+00> : vector<32x128xf32>
    %55 = tpu.matmul %52, %54, %cst_68 {dimension_numbers = #tpu.dot_dimension_numbers<[1], [0], [0], [1], [0, 0, 1, 1], [], []>} : vector<32x30xbf16>, vector<30x128xbf16>, vector<32x128xf32> -> vector<32x128xf32>
    %56 = arith.addf %49, %55 : vector<32x128xf32>
    %c0_69 = arith.constant 0 : index
    %c2_70 = arith.constant 2 : index
    %c2_71 = arith.constant 2 : index
    %c0_72 = arith.constant 0 : index
    %57 = vector.load %arg1[%c0_69, %c2_70, %c2_71, %c0_72] : memref<1x6x10x30xbf16, #tpu.memory_space<vmem>>, vector<1x4x8x30xbf16>
    %58 = vector.shape_cast %57 : vector<1x4x8x30xbf16> to vector<4x8x30xbf16>
    %59 = vector.shape_cast %58 : vector<4x8x30xbf16> to vector<32x30xbf16>
    %c2_73 = arith.constant 2 : index
    %c2_74 = arith.constant 2 : index
    %c0_75 = arith.constant 0 : index
    %c0_76 = arith.constant 0 : index
    %60 = vector.load %arg2[%c2_73, %c2_74, %c0_75, %c0_76] : memref<3x3x30x128xbf16, #tpu.memory_space<vmem>>, vector<1x1x30x128xbf16>
    %61 = vector.shape_cast %60 : vector<1x1x30x128xbf16> to vector<30x128xbf16>
    %cst_77 = arith.constant dense<0.000000e+00> : vector<32x128xf32>
    %62 = tpu.matmul %59, %61, %cst_77 {dimension_numbers = #tpu.dot_dimension_numbers<[1], [0], [0], [1], [0, 0, 1, 1], [], []>} : vector<32x30xbf16>, vector<30x128xbf16>, vector<32x128xf32> -> vector<32x128xf32>
    %63 = arith.addf %56, %62 : vector<32x128xf32>
    %c0_78 = arith.constant 0 : index
    %c0_79 = arith.constant 0 : index
    %64 = vector.load %arg3[%c0_78, %c0_79] : memref<1x128xf32, #tpu.memory_space<vmem>>, vector<1x128xf32>
    %65 = vector.broadcast %64 : vector<1x128xf32> to vector<32x128xf32>
    %66 = arith.addf %63, %65 : vector<32x128xf32>
    %cst_80 = arith.constant 0.000000e+00 : f32
    %67 = vector.broadcast %cst_80 : f32 to vector<32x128xf32>
    %68 = arith.cmpf oge, %66, %67 : vector<32x128xf32>
    %cst_81 = arith.constant 0.00999999977 : f32
    %69 = vector.broadcast %cst_81 : f32 to vector<32x128xf32>
    %70 = arith.mulf %69, %66 : vector<32x128xf32>
    %71 = arith.select %68, %66, %70 : vector<32x128xi1>, vector<32x128xf32>
    %72 = arith.truncf %71 : vector<32x128xf32> to vector<32x128xbf16>
    %73 = vector.shape_cast %72 : vector<32x128xbf16> to vector<4x8x128xbf16>
    %74 = vector.extract_strided_slice %73 {offsets = [0, 0, 0], sizes = [4, 8, 16], strides = [1, 1, 1]} : vector<4x8x128xbf16> to vector<4x8x16xbf16>
    %75 = vector.extract_strided_slice %73 {offsets = [0, 0, 112], sizes = [4, 8, 16], strides = [1, 1, 1]} : vector<4x8x128xbf16> to vector<4x8x16xbf16>
    %76 = tpu.concatenate %74, %73, %75 in 2 : vector<4x8x16xbf16>, vector<4x8x128xbf16>, vector<4x8x16xbf16> -> vector<4x8x160xbf16>
    %77 = vector.extract_strided_slice %76 {offsets = [0, 0, 0], sizes = [4, 1, 160], strides = [1, 1, 1]} : vector<4x8x160xbf16> to vector<4x1x160xbf16>
    %78 = vector.extract_strided_slice %76 {offsets = [0, 7, 0], sizes = [4, 1, 160], strides = [1, 1, 1]} : vector<4x8x160xbf16> to vector<4x1x160xbf16>
    %79 = tpu.concatenate %77, %76, %78 in 1 : vector<4x1x160xbf16>, vector<4x8x160xbf16>, vector<4x1x160xbf16> -> vector<4x10x160xbf16>
    %80 = vector.extract_strided_slice %79 {offsets = [0, 0, 0], sizes = [1, 10, 160], strides = [1, 1, 1]} : vector<4x10x160xbf16> to vector<1x10x160xbf16>
    %81 = vector.extract_strided_slice %79 {offsets = [3, 0, 0], sizes = [1, 10, 160], strides = [1, 1, 1]} : vector<4x10x160xbf16> to vector<1x10x160xbf16>
    %82 = tpu.concatenate %80, %79, %81 in 0 : vector<1x10x160xbf16>, vector<4x10x160xbf16>, vector<1x10x160xbf16> -> vector<6x10x160xbf16>
    %c0_82 = arith.constant 0 : index
    %c0_83 = arith.constant 0 : index
    %c0_84 = arith.constant 0 : index
    %83 = vector.load %arg7[%c0_82, %c0_83, %c0_84] : memref<6x10x160xbf16, #tpu.memory_space<vmem>>, vector<6x10x160xbf16>
    tpu.vector_store %arg7[%c0_82, %c0_83, %c0_84], %82 {strides = array<i32>} : memref<6x10x160xbf16, #tpu.memory_space<vmem>>, vector<6x10x160xbf16>,
    %cst_85 = arith.constant 0.000000e+00 : f32
    %84 = vector.broadcast %cst_85 : f32 to vector<32x128xf32>
    %c0_86 = arith.constant 0 : index
    %c0_87 = arith.constant 0 : index
    %c0_88 = arith.constant 0 : index
    %85 = vector.load %arg7[%c0_86, %c0_87, %c0_88] : memref<6x10x160xbf16, #tpu.memory_space<vmem>>, vector<4x8x160xbf16>
    %86 = vector.shape_cast %85 : vector<4x8x160xbf16> to vector<32x160xbf16>
    %c0_89 = arith.constant 0 : index
    %c0_90 = arith.constant 0 : index
    %c0_91 = arith.constant 0 : index
    %c0_92 = arith.constant 0 : index
    %87 = vector.load %arg4[%c0_89, %c0_90, %c0_91, %c0_92] : memref<3x3x160x128xbf16, #tpu.memory_space<vmem>>, vector<1x1x160x128xbf16>
    %88 = vector.shape_cast %87 : vector<1x1x160x128xbf16> to vector<160x128xbf16>
    %cst_93 = arith.constant dense<0.000000e+00> : vector<32x128xf32>
    %89 = tpu.matmul %86, %88, %cst_93 {dimension_numbers = #tpu.dot_dimension_numbers<[1], [0], [0], [1], [0, 0, 1, 1], [], []>} : vector<32x160xbf16>, vector<160x128xbf16>, vector<32x128xf32> -> vector<32x128xf32>
    %90 = arith.addf %84, %89 : vector<32x128xf32>
    %c0_94 = arith.constant 0 : index
    %c1_95 = arith.constant 1 : index
    %c0_96 = arith.constant 0 : index
    %91 = vector.load %arg7[%c0_94, %c1_95, %c0_96] : memref<6x10x160xbf16, #tpu.memory_space<vmem>>, vector<4x8x160xbf16>
    %92 = vector.shape_cast %91 : vector<4x8x160xbf16> to vector<32x160xbf16>
    %c0_97 = arith.constant 0 : index
    %c1_98 = arith.constant 1 : index
    %c0_99 = arith.constant 0 : index
    %c0_100 = arith.constant 0 : index
    %93 = vector.load %arg4[%c0_97, %c1_98, %c0_99, %c0_100] : memref<3x3x160x128xbf16, #tpu.memory_space<vmem>>, vector<1x1x160x128xbf16>
    %94 = vector.shape_cast %93 : vector<1x1x160x128xbf16> to vector<160x128xbf16>
    %cst_101 = arith.constant dense<0.000000e+00> : vector<32x128xf32>
    %95 = tpu.matmul %92, %94, %cst_101 {dimension_numbers = #tpu.dot_dimension_numbers<[1], [0], [0], [1], [0, 0, 1, 1], [], []>} : vector<32x160xbf16>, vector<160x128xbf16>, vector<32x128xf32> -> vector<32x128xf32>
    %96 = arith.addf %90, %95 : vector<32x128xf32>
    %c0_102 = arith.constant 0 : index
    %c2_103 = arith.constant 2 : index
    %c0_104 = arith.constant 0 : index
    %97 = vector.load %arg7[%c0_102, %c2_103, %c0_104] : memref<6x10x160xbf16, #tpu.memory_space<vmem>>, vector<4x8x160xbf16>
    %98 = vector.shape_cast %97 : vector<4x8x160xbf16> to vector<32x160xbf16>
    %c0_105 = arith.constant 0 : index
    %c2_106 = arith.constant 2 : index
    %c0_107 = arith.constant 0 : index
    %c0_108 = arith.constant 0 : index
    %99 = vector.load %arg4[%c0_105, %c2_106, %c0_107, %c0_108] : memref<3x3x160x128xbf16, #tpu.memory_space<vmem>>, vector<1x1x160x128xbf16>
    %100 = vector.shape_cast %99 : vector<1x1x160x128xbf16> to vector<160x128xbf16>
    %cst_109 = arith.constant dense<0.000000e+00> : vector<32x128xf32>
    %101 = tpu.matmul %98, %100, %cst_109 {dimension_numbers = #tpu.dot_dimension_numbers<[1], [0], [0], [1], [0, 0, 1, 1], [], []>} : vector<32x160xbf16>, vector<160x128xbf16>, vector<32x128xf32> -> vector<32x128xf32>
    %102 = arith.addf %96, %101 : vector<32x128xf32>
    %c1_110 = arith.constant 1 : index
    %c0_111 = arith.constant 0 : index
    %c0_112 = arith.constant 0 : index
    %103 = vector.load %arg7[%c1_110, %c0_111, %c0_112] : memref<6x10x160xbf16, #tpu.memory_space<vmem>>, vector<4x8x160xbf16>
    %104 = vector.shape_cast %103 : vector<4x8x160xbf16> to vector<32x160xbf16>
    %c1_113 = arith.constant 1 : index
    %c0_114 = arith.constant 0 : index
    %c0_115 = arith.constant 0 : index
    %c0_116 = arith.constant 0 : index
    %105 = vector.load %arg4[%c1_113, %c0_114, %c0_115, %c0_116] : memref<3x3x160x128xbf16, #tpu.memory_space<vmem>>, vector<1x1x160x128xbf16>
    %106 = vector.shape_cast %105 : vector<1x1x160x128xbf16> to vector<160x128xbf16>
    %cst_117 = arith.constant dense<0.000000e+00> : vector<32x128xf32>
    %107 = tpu.matmul %104, %106, %cst_117 {dimension_numbers = #tpu.dot_dimension_numbers<[1], [0], [0], [1], [0, 0, 1, 1], [], []>} : vector<32x160xbf16>, vector<160x128xbf16>, vector<32x128xf32> -> vector<32x128xf32>
    %108 = arith.addf %102, %107 : vector<32x128xf32>
    %c1_118 = arith.constant 1 : index
    %c1_119 = arith.constant 1 : index
    %c0_120 = arith.constant 0 : index
    %109 = vector.load %arg7[%c1_118, %c1_119, %c0_120] : memref<6x10x160xbf16, #tpu.memory_space<vmem>>, vector<4x8x160xbf16>
    %110 = vector.shape_cast %109 : vector<4x8x160xbf16> to vector<32x160xbf16>
    %c1_121 = arith.constant 1 : index
    %c1_122 = arith.constant 1 : index
    %c0_123 = arith.constant 0 : index
    %c0_124 = arith.constant 0 : index
    %111 = vector.load %arg4[%c1_121, %c1_122, %c0_123, %c0_124] : memref<3x3x160x128xbf16, #tpu.memory_space<vmem>>, vector<1x1x160x128xbf16>
    %112 = vector.shape_cast %111 : vector<1x1x160x128xbf16> to vector<160x128xbf16>
    %cst_125 = arith.constant dense<0.000000e+00> : vector<32x128xf32>
    %113 = tpu.matmul %110, %112, %cst_125 {dimension_numbers = #tpu.dot_dimension_numbers<[1], [0], [0], [1], [0, 0, 1, 1], [], []>} : vector<32x160xbf16>, vector<160x128xbf16>, vector<32x128xf32> -> vector<32x128xf32>
    %114 = arith.addf %108, %113 : vector<32x128xf32>
    %c1_126 = arith.constant 1 : index
    %c2_127 = arith.constant 2 : index
    %c0_128 = arith.constant 0 : index
    %115 = vector.load %arg7[%c1_126, %c2_127, %c0_128] : memref<6x10x160xbf16, #tpu.memory_space<vmem>>, vector<4x8x160xbf16>
    %116 = vector.shape_cast %115 : vector<4x8x160xbf16> to vector<32x160xbf16>
    %c1_129 = arith.constant 1 : index
    %c2_130 = arith.constant 2 : index
    %c0_131 = arith.constant 0 : index
    %c0_132 = arith.constant 0 : index
    %117 = vector.load %arg4[%c1_129, %c2_130, %c0_131, %c0_132] : memref<3x3x160x128xbf16, #tpu.memory_space<vmem>>, vector<1x1x160x128xbf16>
    %118 = vector.shape_cast %117 : vector<1x1x160x128xbf16> to vector<160x128xbf16>
    %cst_133 = arith.constant dense<0.000000e+00> : vector<32x128xf32>
    %119 = tpu.matmul %116, %118, %cst_133 {dimension_numbers = #tpu.dot_dimension_numbers<[1], [0], [0], [1], [0, 0, 1, 1], [], []>} : vector<32x160xbf16>, vector<160x128xbf16>, vector<32x128xf32> -> vector<32x128xf32>
    %120 = arith.addf %114, %119 : vector<32x128xf32>
    %c2_134 = arith.constant 2 : index
    %c0_135 = arith.constant 0 : index
    %c0_136 = arith.constant 0 : index
    %121 = vector.load %arg7[%c2_134, %c0_135, %c0_136] : memref<6x10x160xbf16, #tpu.memory_space<vmem>>, vector<4x8x160xbf16>
    %122 = vector.shape_cast %121 : vector<4x8x160xbf16> to vector<32x160xbf16>
    %c2_137 = arith.constant 2 : index
    %c0_138 = arith.constant 0 : index
    %c0_139 = arith.constant 0 : index
    %c0_140 = arith.constant 0 : index
    %123 = vector.load %arg4[%c2_137, %c0_138, %c0_139, %c0_140] : memref<3x3x160x128xbf16, #tpu.memory_space<vmem>>, vector<1x1x160x128xbf16>
    %124 = vector.shape_cast %123 : vector<1x1x160x128xbf16> to vector<160x128xbf16>
    %cst_141 = arith.constant dense<0.000000e+00> : vector<32x128xf32>
    %125 = tpu.matmul %122, %124, %cst_141 {dimension_numbers = #tpu.dot_dimension_numbers<[1], [0], [0], [1], [0, 0, 1, 1], [], []>} : vector<32x160xbf16>, vector<160x128xbf16>, vector<32x128xf32> -> vector<32x128xf32>
    %126 = arith.addf %120, %125 : vector<32x128xf32>
    %c2_142 = arith.constant 2 : index
    %c1_143 = arith.constant 1 : index
    %c0_144 = arith.constant 0 : index
    %127 = vector.load %arg7[%c2_142, %c1_143, %c0_144] : memref<6x10x160xbf16, #tpu.memory_space<vmem>>, vector<4x8x160xbf16>
    %128 = vector.shape_cast %127 : vector<4x8x160xbf16> to vector<32x160xbf16>
    %c2_145 = arith.constant 2 : index
    %c1_146 = arith.constant 1 : index
    %c0_147 = arith.constant 0 : index
    %c0_148 = arith.constant 0 : index
    %129 = vector.load %arg4[%c2_145, %c1_146, %c0_147, %c0_148] : memref<3x3x160x128xbf16, #tpu.memory_space<vmem>>, vector<1x1x160x128xbf16>
    %130 = vector.shape_cast %129 : vector<1x1x160x128xbf16> to vector<160x128xbf16>
    %cst_149 = arith.constant dense<0.000000e+00> : vector<32x128xf32>
    %131 = tpu.matmul %128, %130, %cst_149 {dimension_numbers = #tpu.dot_dimension_numbers<[1], [0], [0], [1], [0, 0, 1, 1], [], []>} : vector<32x160xbf16>, vector<160x128xbf16>, vector<32x128xf32> -> vector<32x128xf32>
    %132 = arith.addf %126, %131 : vector<32x128xf32>
    %c2_150 = arith.constant 2 : index
    %c2_151 = arith.constant 2 : index
    %c0_152 = arith.constant 0 : index
    %133 = vector.load %arg7[%c2_150, %c2_151, %c0_152] : memref<6x10x160xbf16, #tpu.memory_space<vmem>>, vector<4x8x160xbf16>
    %134 = vector.shape_cast %133 : vector<4x8x160xbf16> to vector<32x160xbf16>
    %c2_153 = arith.constant 2 : index
    %c2_154 = arith.constant 2 : index
    %c0_155 = arith.constant 0 : index
    %c0_156 = arith.constant 0 : index
    %135 = vector.load %arg4[%c2_153, %c2_154, %c0_155, %c0_156] : memref<3x3x160x128xbf16, #tpu.memory_space<vmem>>, vector<1x1x160x128xbf16>
    %136 = vector.shape_cast %135 : vector<1x1x160x128xbf16> to vector<160x128xbf16>
    %cst_157 = arith.constant dense<0.000000e+00> : vector<32x128xf32>
    %137 = tpu.matmul %134, %136, %cst_157 {dimension_numbers = #tpu.dot_dimension_numbers<[1], [0], [0], [1], [0, 0, 1, 1], [], []>} : vector<32x160xbf16>, vector<160x128xbf16>, vector<32x128xf32> -> vector<32x128xf32>
    %138 = arith.addf %132, %137 : vector<32x128xf32>
    %c0_158 = arith.constant 0 : index
    %c0_159 = arith.constant 0 : index
    %139 = vector.load %arg5[%c0_158, %c0_159] : memref<1x128xf32, #tpu.memory_space<vmem>>, vector<1x128xf32>
    %140 = vector.broadcast %139 : vector<1x128xf32> to vector<32x128xf32>
    %141 = arith.addf %138, %140 : vector<32x128xf32>
    %cst_160 = arith.constant 0.000000e+00 : f32
    %142 = vector.broadcast %cst_160 : f32 to vector<32x128xf32>
    %143 = arith.maximumf %141, %142 : vector<32x128xf32>
    %144 = vector.shape_cast %143 : vector<32x128xf32> to vector<4x8x128xf32>
    %c0_161 = arith.constant 0 : index
    %c0_162 = arith.constant 0 : index
    %c0_163 = arith.constant 0 : index
    %c0_164 = arith.constant 0 : index
    %145 = vector.load %arg6[%c0_161, %c0_162, %c0_163, %c0_164] : memref<1x4x8x128xf32, #tpu.memory_space<vmem>>, vector<1x4x8x128xf32>
    %146 = vector.shape_cast %145 : vector<1x4x8x128xf32> to vector<4x8x128xf32>
    %147 = vector.shape_cast %144 : vector<4x8x128xf32> to vector<1x4x8x128xf32>
    tpu.vector_store %arg6[%c0_161, %c0_162, %c0_163, %c0_164], %147 {strides = array<i32>} : memref<1x4x8x128xf32, #tpu.memory_space<vmem>>, vector<1x4x8x128xf32>,
    return
  }
  func.func @transform_0(%arg0: i32) -> (i32, i32, i32, i32) {
    %c0_i32 = arith.constant 0 : i32
    %c0_i32_0 = arith.constant 0 : i32
    %c0_i32_1 = arith.constant 0 : i32
    %c0_i32_2 = arith.constant 0 : i32
    return %arg0, %c0_i32, %c0_i32_0, %c0_i32_1 : i32, i32, i32, i32
  }
  func.func @transform_1(%arg0: i32) -> (i32, i32, i32, i32) {
    %c0_i32 = arith.constant 0 : i32
    %c0_i32_0 = arith.constant 0 : i32
    %c0_i32_1 = arith.constant 0 : i32
    %c0_i32_2 = arith.constant 0 : i32
    %c0_i32_3 = arith.constant 0 : i32
    return %c0_i32, %c0_i32_0, %c0_i32_1, %c0_i32_2 : i32, i32, i32, i32
  }
  func.func @transform_2(%arg0: i32) -> (i32, i32) {
    %c0_i32 = arith.constant 0 : i32
    %c0_i32_0 = arith.constant 0 : i32
    %c0_i32_1 = arith.constant 0 : i32
    return %c0_i32, %c0_i32_0 : i32, i32
  }
  func.func @transform_3(%arg0: i32) -> (i32, i32, i32, i32) {
    %c0_i32 = arith.constant 0 : i32
    %c0_i32_0 = arith.constant 0 : i32
    %c0_i32_1 = arith.constant 0 : i32
    %c0_i32_2 = arith.constant 0 : i32
    %c0_i32_3 = arith.constant 0 : i32
    return %c0_i32, %c0_i32_0, %c0_i32_1, %c0_i32_2 : i32, i32, i32, i32
  }
  func.func @transform_4(%arg0: i32) -> (i32, i32) {
    %c0_i32 = arith.constant 0 : i32
    %c0_i32_0 = arith.constant 0 : i32
    %c0_i32_1 = arith.constant 0 : i32
    return %c0_i32, %c0_i32_0 : i32, i32
  }
  func.func @transform_5(%arg0: i32) -> (i32, i32, i32, i32) {
    %c0_i32 = arith.constant 0 : i32
    %c0_i32_0 = arith.constant 0 : i32
    %c0_i32_1 = arith.constant 0 : i32
    %c0_i32_2 = arith.constant 0 : i32
    return %arg0, %c0_i32, %c0_i32_0, %c0_i32_1 : i32, i32, i32, i32
  }
}

</mosaic_0001>

<llo_original>
// kernel: tpu_custom_call.1
$region0: #{tpu_custom_call.1}
  #allocation0 [shape = 'u32[]', space=smem, size = 0x4, offset = 0x4, fixed_abs, tag = 'smem constant byte address 0x4 - core index']
  #allocation1 [shape = 'u32[144,128]{1,0:T(1,128)}', space=vmem, size = 0x12000, scoped, tag = 'internal scratch']
  #allocation2 [shape = 'bf16[6,10,160]{2,1,0:T(8,128)(2,1)}', space=vmem, size = 0xc000, scoped, tag = 'scratch operand']
  %s0 = inlined_call_operand.vmem [shape: bf16[2,6,10,30], index: 0, kind: input, shape index: {}]
  %s1 = inlined_call_operand.vmem [shape: bf16[3,3,30,128], index: 1, kind: input, shape index: {}]
  %s2 = inlined_call_operand.vmem [shape: f32[1,128], index: 2, kind: input, shape index: {}]
  %s3 = inlined_call_operand.hbm [shape: bf16[3,3,160,128], index: 3, kind: input, shape index: {}]
  %s4 = inlined_call_operand.vmem [shape: f32[1,128], index: 4, kind: input, shape index: {}]
  %s5 = inlined_call_operand.hbm [shape: f32[2,4,8,128], index: 5, kind: output, shape index: {}]
  %s6 = sld [smem:[#allocation0]]
  $region57: #{tpu_custom_call.1} parent=0
    _
  %s8 = ssub.s32 1, %s6
  %s9 = scalar_select 0, %s8, %s6
  $region1: #{tpu_custom_call.1} parent=0
    #allocation3 [shape = 'u8[368640]{0}', space=vmem, size = 0x5a000, scoped, tag = 'input window, operand 3, single buffered']
    #allocation4 [shape = 's32[2]{0}', space=sflag, size = 0x8, scoped, tag = 'scoped memory for tpu_custom_call.1']
    #allocation5 [shape = 's32[2]{0}', space=sflag, size = 0x8, scoped, tag = 'scoped memory for tpu_custom_call.1']
    #allocation6 [shape = 'u8[32768]{0}', space=vmem, size = 0x8000, scoped, tag = 'output window, operand 0']
    %10 = vsyncpa [#allocation4], 0
    %11 = vsyncpa [#allocation5], 0
    %s12 = scalar_lea.sflag [#allocation5], 1
    %13 = vsyncpa %s12, 0
    loop: start=0, step=1, limit=4
    $region2: #{tpu_custom_call.1} parent=1 // loop_pre_header
      _
    $region3: #{tpu_custom_call.1} parent=1 // loop_header
      %s15 = sphi 0, %s19
      %p16 = scmp.ge.s32.totalorder %s15, 4
      %s25 = sphi 0, %s27
      %s28 = sphi 0, %s25
      %s29 = sphi 0, %s28
      %s45 = sphi 0, %s29
      %s49 = sphi 0, %s49
      %s51 = sphi 0, %s49
      %s52 = sphi 0, %s51
      %s66 = sphi 0, %s52
      %s70 = sphi 0, %s70
      %s72 = sphi 0, %s70
      %s73 = sphi 0, %s72
      %s87 = sphi 0, %s73
      %s91 = sphi 0, %s91
      %s93 = sphi 0, %s91
      %s94 = sphi 0, %s93
      %s108 = sphi 0, %s94
      %s112 = sphi 0, %s112
      %s114 = sphi 0, %s112
      %s115 = sphi 0, %s114
      %s129 = sphi 0, %s115
      %s135 = sphi 0, %s137
      %s138 = sphi 0, %s135
      %s139 = sphi 0, %s138
      %s155 = sphi 0, %s139
    $region4: #{tpu_custom_call.1} parent=1 // loop_header_branch
      %18 = sbr.rel (%p16) target = $region8
    $region5: #{tpu_custom_call.1} parent=1 // loop_body
      %s20 = ssub.s32 %s15, 1
      %s21 = ssub.s32 %s15, 2
      %s22 = sadd.s32 %s15, 1
      %s23 = ssub.s32 %s15, %s22
      %p24 = scmp.eq.s32.totalorder %s23, 0
      %s26 = sadd.s32 %s25, 1
      %s27 = scalar_select %p24, %s25, %s26
      %p30 = pneg %p24
      %p31 = scmp.eq.s32.totalorder %s15, 1
      %p32 = por %p30, %p31
      %p33 = scmp.ne.s32.totalorder %s25, %s28
      %p34 = scmp.eq.s32.totalorder %s15, 0
      %p35 = por %p33, %p34
      %p36 = scmp.ne.s32.totalorder %s25, %s28
      %p37 = scmp.eq.s32.totalorder %s20, 1
      %p38 = por %p36, %p37
      %p39 = scmp.ne.s32.totalorder %s28, %s29
      %p40 = scmp.eq.s32.totalorder %s20, 0
      %p41 = por %p39, %p40
      %p42 = scmp.ne.s32.totalorder %s28, %s29
      %p43 = scmp.eq.s32.totalorder %s21, 1
      %p44 = por %p42, %p43
      %p46 = scmp.ne.s32.totalorder %s29, %s45
      %p47 = scmp.eq.s32.totalorder %s21, 0
      %p48 = por %p46, %p47
      %s50 = sadd.s32 %s49, 1
      %p53 = scmp.eq.s32.totalorder %s15, 1
      %p54 = scmp.ne.s32.totalorder %s49, %s51
      %p55 = scmp.eq.s32.totalorder %s15, 0
      %p56 = por %p54, %p55
      %p57 = scmp.ne.s32.totalorder %s49, %s51
      %p58 = scmp.eq.s32.totalorder %s20, 1
      %p59 = por %p57, %p58
      %p60 = scmp.ne.s32.totalorder %s51, %s52
      %p61 = scmp.eq.s32.totalorder %s20, 0
      %p62 = por %p60, %p61
      %p63 = scmp.ne.s32.totalorder %s51, %s52
      %p64 = scmp.eq.s32.totalorder %s21, 1
      %p65 = por %p63, %p64
      %p67 = scmp.ne.s32.totalorder %s52, %s66
      %p68 = scmp.eq.s32.totalorder %s21, 0
      %p69 = por %p67, %p68
      %s71 = sadd.s32 %s70, 1
      %p74 = scmp.eq.s32.totalorder %s15, 1
      %p75 = scmp.ne.s32.totalorder %s70, %s72
      %p76 = scmp.eq.s32.totalorder %s15, 0
      %p77 = por %p75, %p76
      %p78 = scmp.ne.s32.totalorder %s70, %s72
      %p79 = scmp.eq.s32.totalorder %s20, 1
      %p80 = por %p78, %p79
      %p81 = scmp.ne.s32.totalorder %s72, %s73
      %p82 = scmp.eq.s32.totalorder %s20, 0
      %p83 = por %p81, %p82
      %p84 = scmp.ne.s32.totalorder %s72, %s73
      %p85 = scmp.eq.s32.totalorder %s21, 1
      %p86 = por %p84, %p85
      %p88 = scmp.ne.s32.totalorder %s73, %s87
      %p89 = scmp.eq.s32.totalorder %s21, 0
      %p90 = por %p88, %p89
      %s92 = sadd.s32 %s91, 1
      %p95 = scmp.eq.s32.totalorder %s15, 1
      %p96 = scmp.ne.s32.totalorder %s91, %s93
      %p97 = scmp.eq.s32.totalorder %s15, 0
      %p98 = por %p96, %p97
      %p99 = scmp.ne.s32.totalorder %s91, %s93
      %p100 = scmp.eq.s32.totalorder %s20, 1
      %p101 = por %p99, %p100
      %p102 = scmp.ne.s32.totalorder %s93, %s94
      %p103 = scmp.eq.s32.totalorder %s20, 0
      %p104 = por %p102, %p103
      %p105 = scmp.ne.s32.totalorder %s93, %s94
      %p106 = scmp.eq.s32.totalorder %s21, 1
      %p107 = por %p105, %p106
      %p109 = scmp.ne.s32.totalorder %s94, %s108
      %p110 = scmp.eq.s32.totalorder %s21, 0
      %p111 = por %p109, %p110
      %s113 = sadd.s32 %s112, 1
      %p116 = scmp.eq.s32.totalorder %s15, 1
      %p117 = scmp.ne.s32.totalorder %s112, %s114
      %p118 = scmp.eq.s32.totalorder %s15, 0
      %p119 = por %p117, %p118
      %p120 = scmp.ne.s32.totalorder %s112, %s114
      %p121 = scmp.eq.s32.totalorder %s20, 1
      %p122 = por %p120, %p121
      %p123 = scmp.ne.s32.totalorder %s114, %s115
      %p124 = scmp.eq.s32.totalorder %s20, 0
      %p125 = por %p123, %p124
      %p126 = scmp.ne.s32.totalorder %s114, %s115
      %p127 = scmp.eq.s32.totalorder %s21, 1
      %p128 = por %p126, %p127
      %p130 = scmp.ne.s32.totalorder %s115, %s129
      %p131 = scmp.eq.s32.totalorder %s21, 0
      %p132 = por %p130, %p131
      %s133 = ssub.s32 %s15, %s22
      %p134 = scmp.eq.s32.totalorder %s133, 0
      %s136 = sadd.s32 %s135, 1
      %s137 = scalar_select %p134, %s135, %s136
      %p140 = pneg %p134
      %p141 = scmp.eq.s32.totalorder %s15, 1
      %p142 = por %p140, %p141
      %p143 = scmp.ne.s32.totalorder %s135, %s138
      %p144 = scmp.eq.s32.totalorder %s15, 0
      %p145 = por %p143, %p144
      %p146 = scmp.ne.s32.totalorder %s135, %s138
      %p147 = scmp.eq.s32.totalorder %s20, 1
      %p148 = por %p146, %p147
      %p149 = scmp.ne.s32.totalorder %s138, %s139
      %p150 = scmp.eq.s32.totalorder %s20, 0
      %p151 = por %p149, %p150
      %p152 = scmp.ne.s32.totalorder %s138, %s139
      %p153 = scmp.eq.s32.totalorder %s21, 1
      %p154 = por %p152, %p153
      %p156 = scmp.ne.s32.totalorder %s139, %s155
      %p157 = scmp.eq.s32.totalorder %s21, 0
      %p158 = por %p156, %p157
      %p159 = scmp.le.s32.totalorder 1, %s15
      %p160 = scmp.lt.s32.totalorder %s15, 3
      %p161 = pnand %p159, %p160
      %p162 = pneg %p161
      // Predicated region
      $region9: #{tpu_custom_call.1} parent=5 // pred_check
        _
      $region10: #{tpu_custom_call.1} parent=5 // pred_check_branch
        %164 = sbr.rel (%p161) target = $region12
      $region11: #{tpu_custom_call.1} parent=5 // pred_region
        %s165 = ssub.s32 %s15, 1
        // Predicated region
        $region13: #{tpu_custom_call.1} parent=11 // pred_check
          %p166 = pneg %p62
        $region14: #{tpu_custom_call.1} parent=11 // pred_check_branch
          %168 = sbr.rel (%p166) target = $region16
        $region15: #{tpu_custom_call.1} parent=11 // pred_region
          _
        $region16: #{tpu_custom_call.1} parent=11 // pred_fallthru
          _
        // Predicated region
        $region17: #{tpu_custom_call.1} parent=11 // pred_check
          %p169 = pneg %p83
        $region18: #{tpu_custom_call.1} parent=11 // pred_check_branch
          %171 = sbr.rel (%p169) target = $region20
        $region19: #{tpu_custom_call.1} parent=11 // pred_region
          _
        $region20: #{tpu_custom_call.1} parent=11 // pred_fallthru
          _
        // Predicated region
        $region21: #{tpu_custom_call.1} parent=11 // pred_check
          %p172 = pneg %p104
        $region22: #{tpu_custom_call.1} parent=11 // pred_check_branch
          %174 = sbr.rel (%p172) target = $region24
        $region23: #{tpu_custom_call.1} parent=11 // pred_region
          %s176 = ssub.s32 11520, 11520
          %177 = vsyncadd [#allocation4], %s176
          %s178 = sshll.u32 [#allocation3], 4
          %s179 = int_to_ptr.vmem [resolvable:$true] %s178
          %184 = dma.hbm_to_vmem [thread:$0]  %s3, 11520, %s179, [#allocation4], 64, 64, 4
        $region24: #{tpu_custom_call.1} parent=11 // pred_fallthru
          _
        // Predicated region
        $region25: #{tpu_custom_call.1} parent=11 // pred_check
          %p185 = pneg %p125
        $region26: #{tpu_custom_call.1} parent=11 // pred_check_branch
          %187 = sbr.rel (%p185) target = $region28
        $region27: #{tpu_custom_call.1} parent=11 // pred_region
          _
        $region28: #{tpu_custom_call.1} parent=11 // pred_fallthru
          _
      $region12: #{tpu_custom_call.1} parent=5 // pred_fallthru
        _
      %p188 = scmp.lt.s32.totalorder %s15, 2
      // Predicated region
      $region29: #{tpu_custom_call.1} parent=5 // pred_check
        %p189 = pneg %p188
      $region30: #{tpu_custom_call.1} parent=5 // pred_check_branch
        %191 = sbr.rel (%p189) target = $region32
      $region31: #{tpu_custom_call.1} parent=5 // pred_region
        // Predicated region
        $region33: #{tpu_custom_call.1} parent=31 // pred_check
          %p192 = pneg %p35
        $region34: #{tpu_custom_call.1} parent=31 // pred_check_branch
          %194 = sbr.rel (%p192) target = $region36
        $region35: #{tpu_custom_call.1} parent=31 // pred_region
          %p195 = scmp.lt.s32.totalorder %s15, 1
          %s196 = scalar_select %p195, %s15, 1
          %s197 = smul.addr %s196, 12
          %s198 = smul.addr %s197, 4
          %s199 = scalar_lea.vmem %s0, %s198
        $region36: #{tpu_custom_call.1} parent=31 // pred_fallthru
          _
      $region32: #{tpu_custom_call.1} parent=5 // pred_fallthru
        _
      %p200 = scmp.le.s32.totalorder 1, %s15
      %p201 = scmp.lt.s32.totalorder %s15, 3
      %p202 = pnand %p200, %p201
      %p203 = pneg %p202
      // Predicated region
      $region37: #{tpu_custom_call.1} parent=5 // pred_check
        _
      $region38: #{tpu_custom_call.1} parent=5 // pred_check_branch
        %205 = sbr.rel (%p202) target = $region40
      $region39: #{tpu_custom_call.1} parent=5 // pred_region
        %s206 = ssub.s32 %s15, 1
        // Predicated region
        $region41: #{tpu_custom_call.1} parent=39 // pred_check
          %p207 = pneg %p104
        $region42: #{tpu_custom_call.1} parent=39 // pred_check_branch
          %209 = sbr.rel (%p207) target = $region44
        $region43: #{tpu_custom_call.1} parent=39 // pred_region
          %210 = dma.done [#allocation4], 11520
        $region44: #{tpu_custom_call.1} parent=39 // pred_fallthru
          _
        %p211 = scmp.lt.s32.totalorder %s20, 1
        %s212 = scalar_select %p211, %s20, 1
        %s213 = smul.addr %s212, 12
        %s214 = smul.addr %s213, 4
        %s215 = scalar_lea.vmem %s0, %s214
        %p216 = pneg %p41
        %p217 = pneg %p38
        %p218 = pneg %p62
        %p219 = pneg %p59
        %p220 = pneg %p83
        %p221 = pneg %p80
        %p222 = pneg %p104
        %p223 = pneg %p101
        %p224 = pneg %p125
        %p225 = pneg %p122
        %p226 = pneg %p151
        %p227 = pneg %p148
        %s228 = sand.u32 %s138, 1
        %s229 = scalar_lea.sflag [#allocation5], %s228
        %s230 = sand.u32 %s138, 1
        %s231 = smul.addr %s230, 32
        %s232 = scalar_lea.vmem [#allocation6], %s231
        %p233 = scmp.lt.s32.totalorder %s20, 1
        %s234 = scalar_select %p233, %s20, 1
        %s235 = smul.addr %s234, 12
        %s236 = smul.addr %s235, 4
        %s237 = scalar_lea.vmem %s0, %s236
        %v239 = vld [vmem:[%s237] sm:$0xf]
        %v240 = vld [vmem:[%s237 + $0x8] sm:$0xf]
        %v241 = vld [vmem:[%s237 + $0x10] sm:$0xf]
        %v242 = vld [vmem:[%s237 + $0x18] sm:$0xf]
        %v243 = vld [vmem:[%s1] sm:$0xf]
        %v244 = vld [vmem:[%s1 + $0x4] sm:$0xf]
        %v245 = vld [vmem:[%s1 + $0x8] sm:$0xf]
        %v246 = vld [vmem:[%s1 + $0xc] sm:$0x7]
        %v247 = vld [vmem:[%s237 + $0x4] sm:$0x1]
        %v248 = vld [vmem:[%s237 + $0xc] sm:$0x1]
        %v249 = vld [vmem:[%s237 + $0x14] sm:$0x1]
        %v250 = vld [vmem:[%s237 + $0x1c] sm:$0x1]
        %vm251 = vsmask.f32 3328
        %vm252 = vsmask.f32 7440
        %vm253 = vmor %vm251, %vm252
        %v255 = vshrl.u32 %v239, 16
        %v257 = vrot.slane %v255, 4
        %v258 = vshll.u32 %v239, 16
        %v260 = vrot.slane %v258, 5
        %v261 = vor.u32 %v257, %v260
        %v262 = vrot.slane %v261, 4
        %v264 = vshll.u32 %v247, 16
        %v266 = vrot.slane %v264, 5
        %v267 = vsel %vm253, %v262, %v266
        %v269 = vshrl.u32 %v240, 16
        %v271 = vrot.slane %v269, 4
        %v272 = vshll.u32 %v240, 16
        %v274 = vrot.slane %v272, 5
        %v275 = vor.u32 %v271, %v274
        %v276 = vrot.slane %v275, 4
        %v278 = vshll.u32 %v248, 16
        %v280 = vrot.slane %v278, 5
        %v281 = vsel %vm253, %v276, %v280
        %v283 = vshrl.u32 %v241, 16
        %v285 = vrot.slane %v283, 4
        %v286 = vshll.u32 %v241, 16
        %v288 = vrot.slane %v286, 5
        %v289 = vor.u32 %v285, %v288
        %v290 = vrot.slane %v289, 4
        %v292 = vshll.u32 %v249, 16
        %v294 = vrot.slane %v292, 5
        %v295 = vsel %vm253, %v290, %v294
        %v297 = vshrl.u32 %v242, 16
        %v299 = vrot.slane %v297, 4
        %v300 = vshll.u32 %v242, 16
        %v302 = vrot.slane %v300, 5
        %v303 = vor.u32 %v299, %v302
        %v304 = vrot.slane %v303, 4
        %v306 = vshll.u32 %v250, 16
        %v308 = vrot.slane %v306, 5
        %v309 = vsel %vm253, %v304, %v308
        %s310 = scalar_lea.vmem %s1, 16
        %v311 = vld [vmem:[%s310] sm:$0xf]
        %v312 = vld [vmem:[%s310 + $0x4] sm:$0xf]
        %v313 = vld [vmem:[%s310 + $0x8] sm:$0xf]
        %v314 = vld [vmem:[%s310 + $0xc] sm:$0x7]
        %v315 = vunpack.c.l.b16 %v267
        %v316 = vunpack.c.l.b16 %v281
        %v317 = vunpack.c.l.b16 %v295
        %v318 = vunpack.c.l.b16 %v309
        %v319 = vpack.c.b16 %v316, %v315
        %v320 = vpack.c.b16 %v318, %v317
        %v325 = vunpack.c.l.b16 %v311
        %v326 = vunpack.c.l.b16 %v312
        %v327 = vunpack.c.l.b16 %v313
        %v328 = vunpack.c.l.b16 %v314
        %v329 = vpack.c.b16 %v326, %v325
        %v330 = vpack.c.b16 %v328, %v327
        %vm332 = vcmask 244736
        %v334 = vsel %vm332, %v319, 0
        %v337 = vsel %vm332, %v320, 0
        %vm339 = vcmask 1046528
        %v341 = vsel %vm339, %v330, 0
        %343 = vmatprep.subr.bf16.mxu0 0
        %344 = vmatpush1.bf16.msra.mxu0 %v329
        %345 = vmatprep.subr.bf16.mxu0 0
        %346 = vmatpush1.bf16.msra.mxu0 %v341
        %347 = vmatprep.subr.bf16.mxu0 0
        %348 = vmatpush1.bf16.msra.mxu0 0
        %349 = vmatprep.subr.bf16.mxu0 0
        %350 = vmatpush1.bf16.msra.mxu0 0
        %351 = vmatprep.subr.bf16.mxu0 0
        %352 = vmatpush1.bf16.msra.mxu0 0
        %353 = vmatprep.subr.bf16.mxu0 0
        %354 = vmatpush1.bf16.msra.mxu0 0
        %355 = vmatprep.subr.bf16.mxu0 0
        %356 = vmatpush1.bf16.msra.mxu0 0
        %357 = vmatprep.subr.bf16.mxu0 0
        %358 = vmatpush1.bf16.msra.mxu0 0
        %359 = vmatprep.subr.bf16.mxu0 0
        %360 = vmatpush1.bf16.msra.mxu0 0
        %361 = vmatprep.subr.bf16.mxu0 0
        %362 = vmatpush1.bf16.msra.mxu0 0
        %363 = vmatprep.subr.bf16.mxu0 0
        %364 = vmatpush1.bf16.msra.mxu0 0
        %365 = vmatprep.subr.bf16.mxu0 0
        %366 = vmatpush1.bf16.msra.mxu0 0
        %367 = vmatprep.subr.bf16.mxu0 0
        %368 = vmatpush1.bf16.msra.mxu0 0
        %369 = vmatprep.subr.bf16.mxu0 0
        %370 = vmatpush1.bf16.msra.mxu0 0
        %371 = vmatprep.subr.bf16.mxu0 0
        %372 = vmatpush1.bf16.msra.mxu0 0
        %373 = vmatprep.subr.bf16.mxu0 0
        %374 = vmatpush1.bf16.msra.mxu0 0
        %375 = vmatprep.mubr.bf16.mxu0 0
        %376 = vmatmul.mubr.bf16.gmra.mrb[0].mxu0 %v334
        %v377 = vpop.f32.mrb[0].mxu0
        %v378 = vadd.f32 0.0, %v377
        %v379 = vpop.f32.mrb[0].mxu0
        %v380 = vpop.f32.mrb[0].mxu0
        %v381 = vadd.f32 0.0, %v380
        %v382 = vpop.f32.mrb[0].mxu0
        %383 = vmatprep.mubr.bf16.mxu0 0
        %384 = vmatmul.mubr.bf16.gmra.mrb[0].mxu0 %v337
        %v385 = vpop.f32.mrb[0].mxu0
        %v386 = vadd.f32 0.0, %v385
        %v387 = vpop.f32.mrb[0].mxu0
        %v388 = vpop.f32.mrb[0].mxu0
        %v389 = vadd.f32 0.0, %v388
        %v390 = vpop.f32.mrb[0].mxu0
        %391 = vdwg.mxu0
        %v396 = vunpack.c.l.b16 %v239
        %v397 = vunpack.c.l.b16 %v240
        %v398 = vunpack.c.l.b16 %v241
        %v399 = vunpack.c.l.b16 %v242
        %v400 = vpack.c.b16 %v397, %v396
        %v401 = vpack.c.b16 %v399, %v398
        %v406 = vunpack.c.l.b16 %v243
        %v407 = vunpack.c.l.b16 %v244
        %v408 = vunpack.c.l.b16 %v245
        %v409 = vunpack.c.l.b16 %v246
        %v410 = vpack.c.b16 %v407, %v406
        %v411 = vpack.c.b16 %v409, %v408
        %v414 = vsel %vm332, %v400, 0
        %v417 = vsel %vm332, %v401, 0
        %v420 = vsel %vm339, %v411, 0
        %422 = vmatprep.subr.bf16.mxu0 0
        %423 = vmatpush1.bf16.msra.mxu0 %v410
        %424 = vmatprep.subr.bf16.mxu0 0
        %425 = vmatpush1.bf16.msra.mxu0 %v420
        %426 = vmatprep.subr.bf16.mxu0 0
        %427 = vmatpush1.bf16.msra.mxu0 0
        %428 = vmatprep.subr.bf16.mxu0 0
        %429 = vmatpush1.bf16.msra.mxu0 0
        %430 = vmatprep.subr.bf16.mxu0 0
        %431 = vmatpush1.bf16.msra.mxu0 0
        %432 = vmatprep.subr.bf16.mxu0 0
        %433 = vmatpush1.bf16.msra.mxu0 0
        %434 = vmatprep.subr.bf16.mxu0 0
        %435 = vmatpush1.bf16.msra.mxu0 0
        %436 = vmatprep.subr.bf16.mxu0 0
        %437 = vmatpush1.bf16.msra.mxu0 0
        %438 = vmatprep.subr.bf16.mxu0 0
        %439 = vmatpush1.bf16.msra.mxu0 0
        %440 = vmatprep.subr.bf16.mxu0 0
        %441 = vmatpush1.bf16.msra.mxu0 0
        %442 = vmatprep.subr.bf16.mxu0 0
        %443 = vmatpush1.bf16.msra.mxu0 0
        %444 = vmatprep.subr.bf16.mxu0 0
        %445 = vmatpush1.bf16.msra.mxu0 0
        %446 = vmatprep.subr.bf16.mxu0 0
        %447 = vmatpush1.bf16.msra.mxu0 0
        %448 = vmatprep.subr.bf16.mxu0 0
        %449 = vmatpush1.bf16.msra.mxu0 0
        %450 = vmatprep.subr.bf16.mxu0 0
        %451 = vmatpush1.bf16.msra.mxu0 0
        %452 = vmatprep.subr.bf16.mxu0 0
        %453 = vmatpush1.bf16.msra.mxu0 0
        %454 = vmatprep.mubr.bf16.mxu0 0
        %455 = vmatmul.mubr.bf16.gmra.mrb[0].mxu0 %v414
        %v456 = vpop.f32.mrb[0].mxu0
        %v457 = vadd.f32 %v378, %v456
        %v458 = vpop.f32.mrb[0].mxu0
        %v459 = vpop.f32.mrb[0].mxu0
        %v460 = vadd.f32 %v381, %v459
        %v461 = vpop.f32.mrb[0].mxu0
        %462 = vmatprep.mubr.bf16.mxu0 0
        %463 = vmatmul.mubr.bf16.gmra.mrb[0].mxu0 %v417
        %v464 = vpop.f32.mrb[0].mxu0
        %v465 = vadd.f32 %v386, %v464
        %v466 = vpop.f32.mrb[0].mxu0
        %v467 = vpop.f32.mrb[0].mxu0
        %v468 = vadd.f32 %v389, %v467
        %v469 = vpop.f32.mrb[0].mxu0
        %470 = vdwg.mxu0
        %v471 = vld [vmem:[%s237] sm:$0xe]
        %v472 = vld [vmem:[%s237 + $0x8] sm:$0xe]
        %v473 = vld [vmem:[%s237 + $0x10] sm:$0xe]
        %v474 = vld [vmem:[%s237 + $0x18] sm:$0xe]
        %vm483 = vcmask 1042432
        %vm484 = vcmask 1046532
        %vm485 = vmor %vm483, %vm484
        %v486 = vrot.slane %v471, 5
        %v487 = vrot.slane %v486, 4
        %v488 = vrot.slane %v247, 5
        %v489 = vsel %vm485, %v487, %v488
        %v490 = vrot.slane %v472, 5
        %v491 = vrot.slane %v490, 4
        %v492 = vrot.slane %v248, 5
        %v493 = vsel %vm485, %v491, %v492
        %v494 = vrot.slane %v473, 5
        %v495 = vrot.slane %v494, 4
        %v496 = vrot.slane %v249, 5
        %v497 = vsel %vm485, %v495, %v496
        %v498 = vrot.slane %v474, 5
        %v499 = vrot.slane %v498, 4
        %v500 = vrot.slane %v250, 5
        %v501 = vsel %vm485, %v499, %v500
        %s502 = scalar_lea.vmem %s1, 32
        %v503 = vld [vmem:[%s502] sm:$0xf]
        %v504 = vld [vmem:[%s502 + $0x4] sm:$0xf]
        %v505 = vld [vmem:[%s502 + $0x8] sm:$0xf]
        %v506 = vld [vmem:[%s502 + $0xc] sm:$0x7]
        %v507 = vunpack.c.l.b16 %v489
        %v508 = vunpack.c.l.b16 %v493
        %v509 = vunpack.c.l.b16 %v497
        %v510 = vunpack.c.l.b16 %v501
        %v511 = vpack.c.b16 %v508, %v507
        %v512 = vpack.c.b16 %v510, %v509
        %v517 = vunpack.c.l.b16 %v503
        %v518 = vunpack.c.l.b16 %v504
        %v519 = vunpack.c.l.b16 %v505
        %v520 = vunpack.c.l.b16 %v506
        %v521 = vpack.c.b16 %v518, %v517
        %v522 = vpack.c.b16 %v520, %v519
        %v525 = vsel %vm332, %v511, 0
        %v528 = vsel %vm332, %v512, 0
        %v531 = vsel %vm339, %v522, 0
        %533 = vmatprep.subr.bf16.mxu0 0
        %534 = vmatpush1.bf16.msra.mxu0 %v521
        %535 = vmatprep.subr.bf16.mxu0 0
        %536 = vmatpush1.bf16.msra.mxu0 %v531
        %537 = vmatprep.subr.bf16.mxu0 0
        %538 = vmatpush1.bf16.msra.mxu0 0
        %539 = vmatprep.subr.bf16.mxu0 0
        %540 = vmatpush1.bf16.msra.mxu0 0
        %541 = vmatprep.subr.bf16.mxu0 0
        %542 = vmatpush1.bf16.msra.mxu0 0
        %543 = vmatprep.subr.bf16.mxu0 0
        %544 = vmatpush1.bf16.msra.mxu0 0
        %545 = vmatprep.subr.bf16.mxu0 0
        %546 = vmatpush1.bf16.msra.mxu0 0
        %547 = vmatprep.subr.bf16.mxu0 0
        %548 = vmatpush1.bf16.msra.mxu0 0
        %549 = vmatprep.subr.bf16.mxu0 0
        %550 = vmatpush1.bf16.msra.mxu0 0
        %551 = vmatprep.subr.bf16.mxu0 0
        %552 = vmatpush1.bf16.msra.mxu0 0
        %553 = vmatprep.subr.bf16.mxu0 0
        %554 = vmatpush1.bf16.msra.mxu0 0
        %555 = vmatprep.subr.bf16.mxu0 0
        %556 = vmatpush1.bf16.msra.mxu0 0
        %557 = vmatprep.subr.bf16.mxu0 0
        %558 = vmatpush1.bf16.msra.mxu0 0
        %559 = vmatprep.subr.bf16.mxu0 0
        %560 = vmatpush1.bf16.msra.mxu0 0
        %561 = vmatprep.subr.bf16.mxu0 0
        %562 = vmatpush1.bf16.msra.mxu0 0
        %563 = vmatprep.subr.bf16.mxu0 0
        %564 = vmatpush1.bf16.msra.mxu0 0
        %565 = vmatprep.mubr.bf16.mxu0 0
        %566 = vmatmul.mubr.bf16.gmra.mrb[0].mxu0 %v525
        %v567 = vpop.f32.mrb[0].mxu0
        %v568 = vadd.f32 0.0, %v567
        %v569 = vpop.f32.mrb[0].mxu0
        %v570 = vpop.f32.mrb[0].mxu0
        %v571 = vadd.f32 0.0, %v570
        %v572 = vpop.f32.mrb[0].mxu0
        %573 = vmatprep.mubr.bf16.mxu0 0
        %574 = vmatmul.mubr.bf16.gmra.mrb[0].mxu0 %v528
        %v575 = vpop.f32.mrb[0].mxu0
        %v576 = vadd.f32 0.0, %v575
        %v577 = vpop.f32.mrb[0].mxu0
        %v578 = vpop.f32.mrb[0].mxu0
        %v579 = vadd.f32 0.0, %v578
        %v580 = vpop.f32.mrb[0].mxu0
        %581 = vdwg.mxu0
        %v582 = vadd.f32 %v457, %v568
        %v583 = vadd.f32 %v460, %v571
        %v584 = vadd.f32 %v465, %v576
        %v585 = vadd.f32 %v468, %v579
        %s586 = scalar_lea.vmem %s237, 8
        %v587 = vld [vmem:[%s586] sm:$0xf]
        %v588 = vld [vmem:[%s586 + $0x8] sm:$0xf]
        %v589 = vld [vmem:[%s586 + $0x10] sm:$0xf]
        %v590 = vld [vmem:[%s586 + $0x18] sm:$0xf]
        %s591 = scalar_lea.vmem %s1, 48
        %v592 = vld [vmem:[%s591] sm:$0xf]
        %v593 = vld [vmem:[%s591 + $0x4] sm:$0xf]
        %v594 = vld [vmem:[%s591 + $0x8] sm:$0xf]
        %v595 = vld [vmem:[%s591 + $0xc] sm:$0x7]
        %v600 = vunpack.c.l.b16 %v587
        %v601 = vunpack.c.l.b16 %v588
        %v602 = vunpack.c.l.b16 %v589
        %v603 = vunpack.c.l.b16 %v590
        %v604 = vpack.c.b16 %v601, %v600
        %v605 = vpack.c.b16 %v603, %v602
        %v610 = vunpack.c.l.b16 %v592
        %v611 = vunpack.c.l.b16 %v593
        %v612 = vunpack.c.l.b16 %v594
        %v613 = vunpack.c.l.b16 %v595
        %v614 = vpack.c.b16 %v611, %v610
        %v615 = vpack.c.b16 %v613, %v612
        %v618 = vsel %vm332, %v604, 0
        %v621 = vsel %vm332, %v605, 0
        %v624 = vsel %vm339, %v615, 0
        %626 = vmatprep.subr.bf16.mxu0 0
        %627 = vmatpush1.bf16.msra.mxu0 %v614
        %628 = vmatprep.subr.bf16.mxu0 0
        %629 = vmatpush1.bf16.msra.mxu0 %v624
        %630 = vmatprep.subr.bf16.mxu0 0
        %631 = vmatpush1.bf16.msra.mxu0 0
        %632 = vmatprep.subr.bf16.mxu0 0
        %633 = vmatpush1.bf16.msra.mxu0 0
        %634 = vmatprep.subr.bf16.mxu0 0
        %635 = vmatpush1.bf16.msra.mxu0 0
        %636 = vmatprep.subr.bf16.mxu0 0
        %637 = vmatpush1.bf16.msra.mxu0 0
        %638 = vmatprep.subr.bf16.mxu0 0
        %639 = vmatpush1.bf16.msra.mxu0 0
        %640 = vmatprep.subr.bf16.mxu0 0
        %641 = vmatpush1.bf16.msra.mxu0 0
        %642 = vmatprep.subr.bf16.mxu0 0
        %643 = vmatpush1.bf16.msra.mxu0 0
        %644 = vmatprep.subr.bf16.mxu0 0
        %645 = vmatpush1.bf16.msra.mxu0 0
        %646 = vmatprep.subr.bf16.mxu0 0
        %647 = vmatpush1.bf16.msra.mxu0 0
        %648 = vmatprep.subr.bf16.mxu0 0
        %649 = vmatpush1.bf16.msra.mxu0 0
        %650 = vmatprep.subr.bf16.mxu0 0
        %651 = vmatpush1.bf16.msra.mxu0 0
        %652 = vmatprep.subr.bf16.mxu0 0
        %653 = vmatpush1.bf16.msra.mxu0 0
        %654 = vmatprep.subr.bf16.mxu0 0
        %655 = vmatpush1.bf16.msra.mxu0 0
        %656 = vmatprep.subr.bf16.mxu0 0
        %657 = vmatpush1.bf16.msra.mxu0 0
        %658 = vmatprep.mubr.bf16.mxu0 0
        %659 = vmatmul.mubr.bf16.gmra.mrb[0].mxu0 %v618
        %v660 = vpop.f32.mrb[0].mxu0
        %v661 = vadd.f32 0.0, %v660
        %v662 = vpop.f32.mrb[0].mxu0
        %v663 = vpop.f32.mrb[0].mxu0
        %v664 = vadd.f32 0.0, %v663
        %v665 = vpop.f32.mrb[0].mxu0
        %666 = vmatprep.mubr.bf16.mxu0 0
        %667 = vmatmul.mubr.bf16.gmra.mrb[0].mxu0 %v621
        %v668 = vpop.f32.mrb[0].mxu0
        %v669 = vadd.f32 0.0, %v668
        %v670 = vpop.f32.mrb[0].mxu0
        %v671 = vpop.f32.mrb[0].mxu0
        %v672 = vadd.f32 0.0, %v671
        %v673 = vpop.f32.mrb[0].mxu0
        %674 = vdwg.mxu0
        %v675 = vadd.f32 %v582, %v661
        %v676 = vadd.f32 %v583, %v664
        %v677 = vadd.f32 %v584, %v669
        %v678 = vadd.f32 %v585, %v672
        %v679 = vld [vmem:[%s586] sm:$0xf]
        %v680 = vld [vmem:[%s586 + $0x4] sm:$0x1]
        %v681 = vld [vmem:[%s586 + $0x8] sm:$0xf]
        %v682 = vld [vmem:[%s586 + $0xc] sm:$0x1]
        %v683 = vld [vmem:[%s586 + $0x10] sm:$0xf]
        %v684 = vld [vmem:[%s586 + $0x14] sm:$0x1]
        %v685 = vld [vmem:[%s586 + $0x18] sm:$0xf]
        %v686 = vld [vmem:[%s586 + $0x1c] sm:$0x1]
        %v688 = vshrl.u32 %v679, 16
        %v690 = vrot.slane %v688, 4
        %v691 = vshll.u32 %v679, 16
        %v693 = vrot.slane %v691, 5
        %v694 = vor.u32 %v690, %v693
        %v695 = vrot.slane %v694, 4
        %v697 = vshll.u32 %v680, 16
        %v699 = vrot.slane %v697, 5
        %v700 = vsel %vm253, %v695, %v699
        %v702 = vshrl.u32 %v681, 16
        %v704 = vrot.slane %v702, 4
        %v705 = vshll.u32 %v681, 16
        %v707 = vrot.slane %v705, 5
        %v708 = vor.u32 %v704, %v707
        %v709 = vrot.slane %v708, 4
        %v711 = vshll.u32 %v682, 16
        %v713 = vrot.slane %v711, 5
        %v714 = vsel %vm253, %v709, %v713
        %v716 = vshrl.u32 %v683, 16
        %v718 = vrot.slane %v716, 4
        %v719 = vshll.u32 %v683, 16
        %v721 = vrot.slane %v719, 5
        %v722 = vor.u32 %v718, %v721
        %v723 = vrot.slane %v722, 4
        %v725 = vshll.u32 %v684, 16
        %v727 = vrot.slane %v725, 5
        %v728 = vsel %vm253, %v723, %v727
        %v730 = vshrl.u32 %v685, 16
        %v732 = vrot.slane %v730, 4
        %v733 = vshll.u32 %v685, 16
        %v735 = vrot.slane %v733, 5
        %v736 = vor.u32 %v732, %v735
        %v737 = vrot.slane %v736, 4
        %v739 = vshll.u32 %v686, 16
        %v741 = vrot.slane %v739, 5
        %v742 = vsel %vm253, %v737, %v741
        %s743 = scalar_lea.vmem %s1, 64
        %v744 = vld [vmem:[%s743] sm:$0xf]
        %v745 = vld [vmem:[%s743 + $0x4] sm:$0xf]
        %v746 = vld [vmem:[%s743 + $0x8] sm:$0xf]
        %v747 = vld [vmem:[%s743 + $0xc] sm:$0x7]
        %v748 = vunpack.c.l.b16 %v700
        %v749 = vunpack.c.l.b16 %v714
        %v750 = vunpack.c.l.b16 %v728
        %v751 = vunpack.c.l.b16 %v742
        %v752 = vpack.c.b16 %v749, %v748
        %v753 = vpack.c.b16 %v751, %v750
        %v758 = vunpack.c.l.b16 %v744
        %v759 = vunpack.c.l.b16 %v745
        %v760 = vunpack.c.l.b16 %v746
        %v761 = vunpack.c.l.b16 %v747
        %v762 = vpack.c.b16 %v759, %v758
        %v763 = vpack.c.b16 %v761, %v760
        %v766 = vsel %vm332, %v752, 0
        %v769 = vsel %vm332, %v753, 0
        %v772 = vsel %vm339, %v763, 0
        %774 = vmatprep.subr.bf16.mxu0 0
        %775 = vmatpush1.bf16.msra.mxu0 %v762
        %776 = vmatprep.subr.bf16.mxu0 0
        %777 = vmatpush1.bf16.msra.mxu0 %v772
        %778 = vmatprep.subr.bf16.mxu0 0
        %779 = vmatpush1.bf16.msra.mxu0 0
        %780 = vmatprep.subr.bf16.mxu0 0
        %781 = vmatpush1.bf16.msra.mxu0 0
        %782 = vmatprep.subr.bf16.mxu0 0
        %783 = vmatpush1.bf16.msra.mxu0 0
        %784 = vmatprep.subr.bf16.mxu0 0
        %785 = vmatpush1.bf16.msra.mxu0 0
        %786 = vmatprep.subr.bf16.mxu0 0
        %787 = vmatpush1.bf16.msra.mxu0 0
        %788 = vmatprep.subr.bf16.mxu0 0
        %789 = vmatpush1.bf16.msra.mxu0 0
        %790 = vmatprep.subr.bf16.mxu0 0
        %791 = vmatpush1.bf16.msra.mxu0 0
        %792 = vmatprep.subr.bf16.mxu0 0
        %793 = vmatpush1.bf16.msra.mxu0 0
        %794 = vmatprep.subr.bf16.mxu0 0
        %795 = vmatpush1.bf16.msra.mxu0 0
        %796 = vmatprep.subr.bf16.mxu0 0
        %797 = vmatpush1.bf16.msra.mxu0 0
        %798 = vmatprep.subr.bf16.mxu0 0
        %799 = vmatpush1.bf16.msra.mxu0 0
        %800 = vmatprep.subr.bf16.mxu0 0
        %801 = vmatpush1.bf16.msra.mxu0 0
        %802 = vmatprep.subr.bf16.mxu0 0
        %803 = vmatpush1.bf16.msra.mxu0 0
        %804 = vmatprep.subr.bf16.mxu0 0
        %805 = vmatpush1.bf16.msra.mxu0 0
        %806 = vmatprep.mubr.bf16.mxu0 0
        %807 = vmatmul.mubr.bf16.gmra.mrb[0].mxu0 %v766
        %v808 = vpop.f32.mrb[0].mxu0
        %v809 = vadd.f32 0.0, %v808
        %v810 = vpop.f32.mrb[0].mxu0
        %v811 = vpop.f32.mrb[0].mxu0
        %v812 = vadd.f32 0.0, %v811
        %v813 = vpop.f32.mrb[0].mxu0
        %814 = vmatprep.mubr.bf16.mxu0 0
        %815 = vmatmul.mubr.bf16.gmra.mrb[0].mxu0 %v769
        %v816 = vpop.f32.mrb[0].mxu0
        %v817 = vadd.f32 0.0, %v816
        %v818 = vpop.f32.mrb[0].mxu0
        %v819 = vpop.f32.mrb[0].mxu0
        %v820 = vadd.f32 0.0, %v819
        %v821 = vpop.f32.mrb[0].mxu0
        %822 = vdwg.mxu0
        %v823 = vadd.f32 %v675, %v809
        %v824 = vadd.f32 %v676, %v812
        %v825 = vadd.f32 %v677, %v817
        %v826 = vadd.f32 %v678, %v820
        %v827 = vld [vmem:[%s586] sm:$0xe]
        %v828 = vld [vmem:[%s586 + $0x8] sm:$0xe]
        %v829 = vld [vmem:[%s586 + $0x10] sm:$0xe]
        %v830 = vld [vmem:[%s586 + $0x18] sm:$0xe]
        %v839 = vrot.slane %v827, 5
        %v840 = vrot.slane %v839, 4
        %v841 = vrot.slane %v680, 5
        %v842 = vsel %vm485, %v840, %v841
        %v843 = vrot.slane %v828, 5
        %v844 = vrot.slane %v843, 4
        %v845 = vrot.slane %v682, 5
        %v846 = vsel %vm485, %v844, %v845
        %v847 = vrot.slane %v829, 5
        %v848 = vrot.slane %v847, 4
        %v849 = vrot.slane %v684, 5
        %v850 = vsel %vm485, %v848, %v849
        %v851 = vrot.slane %v830, 5
        %v852 = vrot.slane %v851, 4
        %v853 = vrot.slane %v686, 5
        %v854 = vsel %vm485, %v852, %v853
        %s855 = scalar_lea.vmem %s1, 80
        %v856 = vld [vmem:[%s855] sm:$0xf]
        %v857 = vld [vmem:[%s855 + $0x4] sm:$0xf]
        %v858 = vld [vmem:[%s855 + $0x8] sm:$0xf]
        %v859 = vld [vmem:[%s855 + $0xc] sm:$0x7]
        %v860 = vunpack.c.l.b16 %v842
        %v861 = vunpack.c.l.b16 %v846
        %v862 = vunpack.c.l.b16 %v850
        %v863 = vunpack.c.l.b16 %v854
        %v864 = vpack.c.b16 %v861, %v860
        %v865 = vpack.c.b16 %v863, %v862
        %v870 = vunpack.c.l.b16 %v856
        %v871 = vunpack.c.l.b16 %v857
        %v872 = vunpack.c.l.b16 %v858
        %v873 = vunpack.c.l.b16 %v859
        %v874 = vpack.c.b16 %v871, %v870
        %v875 = vpack.c.b16 %v873, %v872
        %v878 = vsel %vm332, %v864, 0
        %v881 = vsel %vm332, %v865, 0
        %v884 = vsel %vm339, %v875, 0
        %886 = vmatprep.subr.bf16.mxu0 0
        %887 = vmatpush1.bf16.msra.mxu0 %v874
        %888 = vmatprep.subr.bf16.mxu0 0
        %889 = vmatpush1.bf16.msra.mxu0 %v884
        %890 = vmatprep.subr.bf16.mxu0 0
        %891 = vmatpush1.bf16.msra.mxu0 0
        %892 = vmatprep.subr.bf16.mxu0 0
        %893 = vmatpush1.bf16.msra.mxu0 0
        %894 = vmatprep.subr.bf16.mxu0 0
        %895 = vmatpush1.bf16.msra.mxu0 0
        %896 = vmatprep.subr.bf16.mxu0 0
        %897 = vmatpush1.bf16.msra.mxu0 0
        %898 = vmatprep.subr.bf16.mxu0 0
        %899 = vmatpush1.bf16.msra.mxu0 0
        %900 = vmatprep.subr.bf16.mxu0 0
        %901 = vmatpush1.bf16.msra.mxu0 0
        %902 = vmatprep.subr.bf16.mxu0 0
        %903 = vmatpush1.bf16.msra.mxu0 0
        %904 = vmatprep.subr.bf16.mxu0 0
        %905 = vmatpush1.bf16.msra.mxu0 0
        %906 = vmatprep.subr.bf16.mxu0 0
        %907 = vmatpush1.bf16.msra.mxu0 0
        %908 = vmatprep.subr.bf16.mxu0 0
        %909 = vmatpush1.bf16.msra.mxu0 0
        %910 = vmatprep.subr.bf16.mxu0 0
        %911 = vmatpush1.bf16.msra.mxu0 0
        %912 = vmatprep.subr.bf16.mxu0 0
        %913 = vmatpush1.bf16.msra.mxu0 0
        %914 = vmatprep.subr.bf16.mxu0 0
        %915 = vmatpush1.bf16.msra.mxu0 0
        %916 = vmatprep.subr.bf16.mxu0 0
        %917 = vmatpush1.bf16.msra.mxu0 0
        %918 = vmatprep.mubr.bf16.mxu0 0
        %919 = vmatmul.mubr.bf16.gmra.mrb[0].mxu0 %v878
        %v920 = vpop.f32.mrb[0].mxu0
        %v921 = vadd.f32 0.0, %v920
        %v922 = vpop.f32.mrb[0].mxu0
        %v923 = vpop.f32.mrb[0].mxu0
        %v924 = vadd.f32 0.0, %v923
        %v925 = vpop.f32.mrb[0].mxu0
        %926 = vmatprep.mubr.bf16.mxu0 0
        %927 = vmatmul.mubr.bf16.gmra.mrb[0].mxu0 %v881
        %v928 = vpop.f32.mrb[0].mxu0
        %v929 = vadd.f32 0.0, %v928
        %v930 = vpop.f32.mrb[0].mxu0
        %v931 = vpop.f32.mrb[0].mxu0
        %v932 = vadd.f32 0.0, %v931
        %v933 = vpop.f32.mrb[0].mxu0
        %934 = vdwg.mxu0
        %v935 = vadd.f32 %v823, %v921
        %v936 = vadd.f32 %v824, %v924
        %v937 = vadd.f32 %v825, %v929
        %v938 = vadd.f32 %v826, %v932
        %s939 = scalar_lea.vmem %s237, 16
        %v940 = vld [vmem:[%s939] sm:$0xf]
        %v941 = vld [vmem:[%s939 + $0x8] sm:$0xf]
        %v942 = vld [vmem:[%s939 + $0x10] sm:$0xf]
        %v943 = vld [vmem:[%s939 + $0x18] sm:$0xf]
        %s944 = scalar_lea.vmem %s1, 96
        %v945 = vld [vmem:[%s944] sm:$0xf]
        %v946 = vld [vmem:[%s944 + $0x4] sm:$0xf]
        %v947 = vld [vmem:[%s944 + $0x8] sm:$0xf]
        %v948 = vld [vmem:[%s944 + $0xc] sm:$0x7]
        %v953 = vunpack.c.l.b16 %v940
        %v954 = vunpack.c.l.b16 %v941
        %v955 = vunpack.c.l.b16 %v942
        %v956 = vunpack.c.l.b16 %v943
        %v957 = vpack.c.b16 %v954, %v953
        %v958 = vpack.c.b16 %v956, %v955
        %v963 = vunpack.c.l.b16 %v945
        %v964 = vunpack.c.l.b16 %v946
        %v965 = vunpack.c.l.b16 %v947
        %v966 = vunpack.c.l.b16 %v948
        %v967 = vpack.c.b16 %v964, %v963
        %v968 = vpack.c.b16 %v966, %v965
        %v971 = vsel %vm332, %v957, 0
        %v974 = vsel %vm332, %v958, 0
        %v977 = vsel %vm339, %v968, 0
        %979 = vmatprep.subr.bf16.mxu0 0
        %980 = vmatpush1.bf16.msra.mxu0 %v967
        %981 = vmatprep.subr.bf16.mxu0 0
        %982 = vmatpush1.bf16.msra.mxu0 %v977
        %983 = vmatprep.subr.bf16.mxu0 0
        %984 = vmatpush1.bf16.msra.mxu0 0
        %985 = vmatprep.subr.bf16.mxu0 0
        %986 = vmatpush1.bf16.msra.mxu0 0
        %987 = vmatprep.subr.bf16.mxu0 0
        %988 = vmatpush1.bf16.msra.mxu0 0
        %989 = vmatprep.subr.bf16.mxu0 0
        %990 = vmatpush1.bf16.msra.mxu0 0
        %991 = vmatprep.subr.bf16.mxu0 0
        %992 = vmatpush1.bf16.msra.mxu0 0
        %993 = vmatprep.subr.bf16.mxu0 0
        %994 = vmatpush1.bf16.msra.mxu0 0
        %995 = vmatprep.subr.bf16.mxu0 0
        %996 = vmatpush1.bf16.msra.mxu0 0
        %997 = vmatprep.subr.bf16.mxu0 0
        %998 = vmatpush1.bf16.msra.mxu0 0
        %999 = vmatprep.subr.bf16.mxu0 0
        %1000 = vmatpush1.bf16.msra.mxu0 0
        %1001 = vmatprep.subr.bf16.mxu0 0
        %1002 = vmatpush1.bf16.msra.mxu0 0
        %1003 = vmatprep.subr.bf16.mxu0 0
        %1004 = vmatpush1.bf16.msra.mxu0 0
        %1005 = vmatprep.subr.bf16.mxu0 0
        %1006 = vmatpush1.bf16.msra.mxu0 0
        %1007 = vmatprep.subr.bf16.mxu0 0
        %1008 = vmatpush1.bf16.msra.mxu0 0
        %1009 = vmatprep.subr.bf16.mxu0 0
        %1010 = vmatpush1.bf16.msra.mxu0 0
        %1011 = vmatprep.mubr.bf16.mxu0 0
        %1012 = vmatmul.mubr.bf16.gmra.mrb[0].mxu0 %v971
        %v1013 = vpop.f32.mrb[0].mxu0
        %v1014 = vadd.f32 0.0, %v1013
        %v1015 = vpop.f32.mrb[0].mxu0
        %v1016 = vpop.f32.mrb[0].mxu0
        %v1017 = vadd.f32 0.0, %v1016
        %v1018 = vpop.f32.mrb[0].mxu0
        %1019 = vmatprep.mubr.bf16.mxu0 0
        %1020 = vmatmul.mubr.bf16.gmra.mrb[0].mxu0 %v974
        %v1021 = vpop.f32.mrb[0].mxu0
        %v1022 = vadd.f32 0.0, %v1021
        %v1023 = vpop.f32.mrb[0].mxu0
        %v1024 = vpop.f32.mrb[0].mxu0
        %v1025 = vadd.f32 0.0, %v1024
        %v1026 = vpop.f32.mrb[0].mxu0
        %1027 = vdwg.mxu0
        %v1028 = vadd.f32 %v935, %v1014
        %v1029 = vadd.f32 %v936, %v1017
        %v1030 = vadd.f32 %v937, %v1022
        %v1031 = vadd.f32 %v938, %v1025
        %v1032 = vld [vmem:[%s939] sm:$0xf]
        %v1033 = vld [vmem:[%s939 + $0x4] sm:$0x1]
        %v1034 = vld [vmem:[%s939 + $0x8] sm:$0xf]
        %v1035 = vld [vmem:[%s939 + $0xc] sm:$0x1]
        %v1036 = vld [vmem:[%s939 + $0x10] sm:$0xf]
        %v1037 = vld [vmem:[%s939 + $0x14] sm:$0x1]
        %v1038 = vld [vmem:[%s939 + $0x18] sm:$0xf]
        %v1039 = vld [vmem:[%s939 + $0x1c] sm:$0x1]
        %v1041 = vshrl.u32 %v1032, 16
        %v1043 = vrot.slane %v1041, 4
        %v1044 = vshll.u32 %v1032, 16
        %v1046 = vrot.slane %v1044, 5
        %v1047 = vor.u32 %v1043, %v1046
        %v1048 = vrot.slane %v1047, 4
        %v1050 = vshll.u32 %v1033, 16
        %v1052 = vrot.slane %v1050, 5
        %v1053 = vsel %vm253, %v1048, %v1052
        %v1055 = vshrl.u32 %v1034, 16
        %v1057 = vrot.slane %v1055, 4
        %v1058 = vshll.u32 %v1034, 16
        %v1060 = vrot.slane %v1058, 5
        %v1061 = vor.u32 %v1057, %v1060
        %v1062 = vrot.slane %v1061, 4
        %v1064 = vshll.u32 %v1035, 16
        %v1066 = vrot.slane %v1064, 5
        %v1067 = vsel %vm253, %v1062, %v1066
        %v1069 = vshrl.u32 %v1036, 16
        %v1071 = vrot.slane %v1069, 4
        %v1072 = vshll.u32 %v1036, 16
        %v1074 = vrot.slane %v1072, 5
        %v1075 = vor.u32 %v1071, %v1074
        %v1076 = vrot.slane %v1075, 4
        %v1078 = vshll.u32 %v1037, 16
        %v1080 = vrot.slane %v1078, 5
        %v1081 = vsel %vm253, %v1076, %v1080
        %v1083 = vshrl.u32 %v1038, 16
        %v1085 = vrot.slane %v1083, 4
        %v1086 = vshll.u32 %v1038, 16
        %v1088 = vrot.slane %v1086, 5
        %v1089 = vor.u32 %v1085, %v1088
        %v1090 = vrot.slane %v1089, 4
        %v1092 = vshll.u32 %v1039, 16
        %v1094 = vrot.slane %v1092, 5
        %v1095 = vsel %vm253, %v1090, %v1094
        %s1096 = scalar_lea.vmem %s1, 112
        %v1097 = vld [vmem:[%s1096] sm:$0xf]
        %v1098 = vld [vmem:[%s1096 + $0x4] sm:$0xf]
        %v1099 = vld [vmem:[%s1096 + $0x8] sm:$0xf]
        %v1100 = vld [vmem:[%s1096 + $0xc] sm:$0x7]
        %v1101 = vunpack.c.l.b16 %v1053
        %v1102 = vunpack.c.l.b16 %v1067
        %v1103 = vunpack.c.l.b16 %v1081
        %v1104 = vunpack.c.l.b16 %v1095
        %v1105 = vpack.c.b16 %v1102, %v1101
        %v1106 = vpack.c.b16 %v1104, %v1103
        %v1111 = vunpack.c.l.b16 %v1097
        %v1112 = vunpack.c.l.b16 %v1098
        %v1113 = vunpack.c.l.b16 %v1099
        %v1114 = vunpack.c.l.b16 %v1100
        %v1115 = vpack.c.b16 %v1112, %v1111
        %v1116 = vpack.c.b16 %v1114, %v1113
        %v1119 = vsel %vm332, %v1105, 0
        %v1122 = vsel %vm332, %v1106, 0
        %v1125 = vsel %vm339, %v1116, 0
        %1127 = vmatprep.subr.bf16.mxu0 0
        %1128 = vmatpush1.bf16.msra.mxu0 %v1115
        %1129 = vmatprep.subr.bf16.mxu0 0
        %1130 = vmatpush1.bf16.msra.mxu0 %v1125
        %1131 = vmatprep.subr.bf16.mxu0 0
        %1132 = vmatpush1.bf16.msra.mxu0 0
        %1133 = vmatprep.subr.bf16.mxu0 0
        %1134 = vmatpush1.bf16.msra.mxu0 0
        %1135 = vmatprep.subr.bf16.mxu0 0
        %1136 = vmatpush1.bf16.msra.mxu0 0
        %1137 = vmatprep.subr.bf16.mxu0 0
        %1138 = vmatpush1.bf16.msra.mxu0 0
        %1139 = vmatprep.subr.bf16.mxu0 0
        %1140 = vmatpush1.bf16.msra.mxu0 0
        %1141 = vmatprep.subr.bf16.mxu0 0
        %1142 = vmatpush1.bf16.msra.mxu0 0
        %1143 = vmatprep.subr.bf16.mxu0 0
        %1144 = vmatpush1.bf16.msra.mxu0 0
        %1145 = vmatprep.subr.bf16.mxu0 0
        %1146 = vmatpush1.bf16.msra.mxu0 0
        %1147 = vmatprep.subr.bf16.mxu0 0
        %1148 = vmatpush1.bf16.msra.mxu0 0
        %1149 = vmatprep.subr.bf16.mxu0 0
        %1150 = vmatpush1.bf16.msra.mxu0 0
        %1151 = vmatprep.subr.bf16.mxu0 0
        %1152 = vmatpush1.bf16.msra.mxu0 0
        %1153 = vmatprep.subr.bf16.mxu0 0
        %1154 = vmatpush1.bf16.msra.mxu0 0
        %1155 = vmatprep.subr.bf16.mxu0 0
        %1156 = vmatpush1.bf16.msra.mxu0 0
        %1157 = vmatprep.subr.bf16.mxu0 0
        %1158 = vmatpush1.bf16.msra.mxu0 0
        %1159 = vmatprep.mubr.bf16.mxu0 0
        %1160 = vmatmul.mubr.bf16.gmra.mrb[0].mxu0 %v1119
        %v1161 = vpop.f32.mrb[0].mxu0
        %v1162 = vadd.f32 0.0, %v1161
        %v1163 = vpop.f32.mrb[0].mxu0
        %v1164 = vpop.f32.mrb[0].mxu0
        %v1165 = vadd.f32 0.0, %v1164
        %v1166 = vpop.f32.mrb[0].mxu0
        %1167 = vmatprep.mubr.bf16.mxu0 0
        %1168 = vmatmul.mubr.bf16.gmra.mrb[0].mxu0 %v1122
        %v1169 = vpop.f32.mrb[0].mxu0
        %v1170 = vadd.f32 0.0, %v1169
        %v1171 = vpop.f32.mrb[0].mxu0
        %v1172 = vpop.f32.mrb[0].mxu0
        %v1173 = vadd.f32 0.0, %v1172
        %v1174 = vpop.f32.mrb[0].mxu0
        %1175 = vdwg.mxu0
        %v1176 = vadd.f32 %v1028, %v1162
        %v1177 = vadd.f32 %v1029, %v1165
        %v1178 = vadd.f32 %v1030, %v1170
        %v1179 = vadd.f32 %v1031, %v1173
        %v1180 = vld [vmem:[%s939] sm:$0xe]
        %v1181 = vld [vmem:[%s939 + $0x8] sm:$0xe]
        %v1182 = vld [vmem:[%s939 + $0x10] sm:$0xe]
        %v1183 = vld [vmem:[%s939 + $0x18] sm:$0xe]
        %v1192 = vrot.slane %v1180, 5
        %v1193 = vrot.slane %v1192, 4
        %v1194 = vrot.slane %v1033, 5
        %v1195 = vsel %vm485, %v1193, %v1194
        %v1196 = vrot.slane %v1181, 5
        %v1197 = vrot.slane %v1196, 4
        %v1198 = vrot.slane %v1035, 5
        %v1199 = vsel %vm485, %v1197, %v1198
        %v1200 = vrot.slane %v1182, 5
        %v1201 = vrot.slane %v1200, 4
        %v1202 = vrot.slane %v1037, 5
        %v1203 = vsel %vm485, %v1201, %v1202
        %v1204 = vrot.slane %v1183, 5
        %v1205 = vrot.slane %v1204, 4
        %v1206 = vrot.slane %v1039, 5
        %v1207 = vsel %vm485, %v1205, %v1206
        %s1208 = scalar_lea.vmem %s1, 128
        %v1209 = vld [vmem:[%s1208] sm:$0xf]
        %v1210 = vld [vmem:[%s1208 + $0x4] sm:$0xf]
        %v1211 = vld [vmem:[%s1208 + $0x8] sm:$0xf]
        %v1212 = vld [vmem:[%s1208 + $0xc] sm:$0x7]
        %v1213 = vunpack.c.l.b16 %v1195
        %v1214 = vunpack.c.l.b16 %v1199
        %v1215 = vunpack.c.l.b16 %v1203
        %v1216 = vunpack.c.l.b16 %v1207
        %v1217 = vpack.c.b16 %v1214, %v1213
        %v1218 = vpack.c.b16 %v1216, %v1215
        %v1223 = vunpack.c.l.b16 %v1209
        %v1224 = vunpack.c.l.b16 %v1210
        %v1225 = vunpack.c.l.b16 %v1211
        %v1226 = vunpack.c.l.b16 %v1212
        %v1227 = vpack.c.b16 %v1224, %v1223
        %v1228 = vpack.c.b16 %v1226, %v1225
        %v1231 = vsel %vm332, %v1217, 0
        %v1234 = vsel %vm332, %v1218, 0
        %v1237 = vsel %vm339, %v1228, 0
        %1239 = vmatprep.subr.bf16.mxu0 0
        %1240 = vmatpush1.bf16.msra.mxu0 %v1227
        %1241 = vmatprep.subr.bf16.mxu0 0
        %1242 = vmatpush1.bf16.msra.mxu0 %v1237
        %1243 = vmatprep.subr.bf16.mxu0 0
        %1244 = vmatpush1.bf16.msra.mxu0 0
        %1245 = vmatprep.subr.bf16.mxu0 0
        %1246 = vmatpush1.bf16.msra.mxu0 0
        %1247 = vmatprep.subr.bf16.mxu0 0
        %1248 = vmatpush1.bf16.msra.mxu0 0
        %1249 = vmatprep.subr.bf16.mxu0 0
        %1250 = vmatpush1.bf16.msra.mxu0 0
        %1251 = vmatprep.subr.bf16.mxu0 0
        %1252 = vmatpush1.bf16.msra.mxu0 0
        %1253 = vmatprep.subr.bf16.mxu0 0
        %1254 = vmatpush1.bf16.msra.mxu0 0
        %1255 = vmatprep.subr.bf16.mxu0 0
        %1256 = vmatpush1.bf16.msra.mxu0 0
        %1257 = vmatprep.subr.bf16.mxu0 0
        %1258 = vmatpush1.bf16.msra.mxu0 0
        %1259 = vmatprep.subr.bf16.mxu0 0
        %1260 = vmatpush1.bf16.msra.mxu0 0
        %1261 = vmatprep.subr.bf16.mxu0 0
        %1262 = vmatpush1.bf16.msra.mxu0 0
        %1263 = vmatprep.subr.bf16.mxu0 0
        %1264 = vmatpush1.bf16.msra.mxu0 0
        %1265 = vmatprep.subr.bf16.mxu0 0
        %1266 = vmatpush1.bf16.msra.mxu0 0
        %1267 = vmatprep.subr.bf16.mxu0 0
        %1268 = vmatpush1.bf16.msra.mxu0 0
        %1269 = vmatprep.subr.bf16.mxu0 0
        %1270 = vmatpush1.bf16.msra.mxu0 0
        %1271 = vmatprep.mubr.bf16.mxu0 0
        %1272 = vmatmul.mubr.bf16.gmra.mrb[0].mxu0 %v1231
        %v1273 = vpop.f32.mrb[0].mxu0
        %v1274 = vadd.f32 0.0, %v1273
        %v1275 = vpop.f32.mrb[0].mxu0
        %v1276 = vpop.f32.mrb[0].mxu0
        %v1277 = vadd.f32 0.0, %v1276
        %v1278 = vpop.f32.mrb[0].mxu0
        %1279 = vmatprep.mubr.bf16.mxu0 0
        %1280 = vmatmul.mubr.bf16.gmra.mrb[0].mxu0 %v1234
        %v1281 = vpop.f32.mrb[0].mxu0
        %v1282 = vadd.f32 0.0, %v1281
        %v1283 = vpop.f32.mrb[0].mxu0
        %v1284 = vpop.f32.mrb[0].mxu0
        %v1285 = vadd.f32 0.0, %v1284
        %v1286 = vpop.f32.mrb[0].mxu0
        %1287 = vdwg.mxu0
        %v1288 = vadd.f32 %v1176, %v1274
        %v1289 = vadd.f32 %v1177, %v1277
        %v1290 = vadd.f32 %v1178, %v1282
        %v1291 = vadd.f32 %v1179, %v1285
        %v1292 = vld [vmem:[%s2] sm:$0x1]
        %v1294 = vlaneseq
        %v1295 = vshrl.u32 %v1294, 7
        %v1296 = vsub.s32 0, %v1295
        %v1297 = vrot.slane %v1292, %v1296
        %v1299 = vadd.f32 %v1288, %v1297
        %v1300 = vadd.f32 %v1289, %v1297
        %v1301 = vadd.f32 %v1290, %v1297
        %v1302 = vadd.f32 %v1291, %v1297
        %vm1303 = vcmp.ge.f32.partialorder %v1299, 0.0
        %vm1304 = vcmp.ge.f32.partialorder %v1300, 0.0
        %vm1305 = vcmp.ge.f32.partialorder %v1301, 0.0
        %vm1306 = vcmp.ge.f32.partialorder %v1302, 0.0
        %v1307 = vmul.f32 %v1299, 0.01
        %v1308 = vmul.f32 %v1300, 0.01
        %v1309 = vmul.f32 %v1301, 0.01
        %v1310 = vmul.f32 %v1302, 0.01
        %v1311 = vsel %vm1303, %v1299, %v1307
        %v1312 = vsel %vm1304, %v1300, %v1308
        %v1313 = vsel %vm1305, %v1301, %v1309
        %v1314 = vsel %vm1306, %v1302, %v1310
        %v1315 = vpack.c.bf16 %v1312, %v1311
        %v1316 = vpack.c.bf16 %v1314, %v1313
        %v1319 = vunpack.c.l.b16 %v1315
        %v1320 = vunpack.c.h.b16 %v1315
        %v1321 = vunpack.c.l.b16 %v1316
        %v1322 = vunpack.c.h.b16 %v1316
        %v1323 = vpack.c.b16 %v1319, %v1319
        %v1324 = vpack.c.b16 %v1320, %v1320
        %v1325 = vpack.c.b16 %v1321, %v1321
        %v1326 = vpack.c.b16 %v1322, %v1322
        %1327 = vrot.lane.b32.xlu0 %v1323, 16
        %v1328 = vpop.permute.xlu0 %1327
        %1329 = vrot.lane.b32.xlu0 %v1324, 16
        %v1330 = vpop.permute.xlu0 %1329
        %1331 = vrot.lane.b32.xlu0 %v1325, 16
        %v1332 = vpop.permute.xlu0 %1331
        %1333 = vrot.lane.b32.xlu0 %v1326, 16
        %v1334 = vpop.permute.xlu0 %1333
        %1335 = vrot.lane.b32.xlu0 %v1323, 32
        %v1336 = vpop.permute.xlu0 %1335
        %1337 = vrot.lane.b32.xlu0 %v1324, 32
        %v1338 = vpop.permute.xlu0 %1337
        %1339 = vrot.lane.b32.xlu0 %v1325, 32
        %v1340 = vpop.permute.xlu0 %1339
        %1341 = vrot.lane.b32.xlu0 %v1326, 32
        %v1342 = vpop.permute.xlu0 %1341
        %vm1343 = vcmask 130048
        %v1346 = vsel %vm1343, %v1323, %v1328
        %v1350 = vsel %vm1343, %v1324, %v1330
        %v1354 = vsel %vm1343, %v1325, %v1332
        %v1358 = vsel %vm1343, %v1326, %v1334
        %v1361 = vsel %vm1343, %v1328, %v1336
        %v1364 = vsel %vm1343, %v1330, %v1338
        %v1367 = vsel %vm1343, %v1332, %v1340
        %v1370 = vsel %vm1343, %v1334, %v1342
        %v1372 = vshrl.u32 %v1346, 16
        %v1374 = vrot.slane %v1372, 7
        %v1375 = vshll.u32 %v1346, 16
        %v1377 = vor.u32 %v1374, %v1375
        %v1378 = vshrl.u32 %v1361, 16
        %v1380 = vrot.slane %v1378, 7
        %v1381 = vshll.u32 %v1361, 16
        %v1383 = vor.u32 %v1380, %v1381
        %v1384 = vshrl.u32 %v1350, 16
        %v1386 = vrot.slane %v1384, 7
        %v1387 = vshll.u32 %v1350, 16
        %v1389 = vor.u32 %v1386, %v1387
        %v1390 = vshrl.u32 %v1364, 16
        %v1392 = vrot.slane %v1390, 7
        %v1393 = vshll.u32 %v1364, 16
        %v1395 = vor.u32 %v1392, %v1393
        %v1396 = vshrl.u32 %v1354, 16
        %v1398 = vrot.slane %v1396, 7
        %v1399 = vshll.u32 %v1354, 16
        %v1401 = vor.u32 %v1398, %v1399
        %v1402 = vshrl.u32 %v1367, 16
        %v1404 = vrot.slane %v1402, 7
        %v1405 = vshll.u32 %v1367, 16
        %v1407 = vor.u32 %v1404, %v1405
        %v1408 = vshrl.u32 %v1358, 16
        %v1410 = vrot.slane %v1408, 7
        %v1411 = vshll.u32 %v1358, 16
        %v1413 = vor.u32 %v1410, %v1411
        %v1414 = vshrl.u32 %v1370, 16
        %v1416 = vrot.slane %v1414, 7
        %v1417 = vshll.u32 %v1370, 16
        %v1419 = vor.u32 %v1416, %v1417
        %v1436 = vrot.slane %v1346, 7
        %v1437 = vrot.slane %v1361, 7
        %v1438 = vrot.slane %v1350, 7
        %v1439 = vrot.slane %v1364, 7
        %v1440 = vrot.slane %v1354, 7
        %v1441 = vrot.slane %v1367, 7
        %v1442 = vrot.slane %v1358, 7
        %v1443 = vrot.slane %v1370, 7
        %vm1452 = vcmask 1040384
        %vm1453 = vsmask.f32 256
        %vm1454 = vmand %vm1452, %vm1453
        %v1455 = vsel %vm1454, %v1346, %v1377
        %v1456 = vsel %vm1454, %v1361, %v1383
        %v1457 = vsel %vm1454, %v1350, %v1389
        %v1458 = vsel %vm1454, %v1364, %v1395
        %v1459 = vsel %vm1454, %v1354, %v1401
        %v1460 = vsel %vm1454, %v1367, %v1407
        %v1461 = vsel %vm1454, %v1358, %v1413
        %v1462 = vsel %vm1454, %v1370, %v1419
        %vm1463 = vcmask 1044480
        %vm1464 = vsmask.f32 4352
        %vm1465 = vmand %vm1463, %vm1464
        %v1466 = vsel %vm1465, %v1455, %v1436
        %v1467 = vsel %vm1465, %v1456, %v1437
        %v1468 = vsel %vm1465, %v1457, %v1438
        %v1469 = vsel %vm1465, %v1458, %v1439
        %v1470 = vsel %vm1465, %v1459, %v1440
        %v1471 = vsel %vm1465, %v1460, %v1441
        %v1472 = vsel %vm1465, %v1461, %v1442
        %v1473 = vsel %vm1465, %v1462, %v1443
        %v1482 = vunpack.c.l.b16 %v1466
        %v1483 = vunpack.c.l.b16 %v1467
        %v1484 = vunpack.c.h.b16 %v1466
        %v1485 = vunpack.c.h.b16 %v1467
        %v1486 = vunpack.c.l.b16 %v1468
        %v1487 = vunpack.c.l.b16 %v1469
        %v1488 = vunpack.c.h.b16 %v1468
        %v1489 = vunpack.c.h.b16 %v1469
        %v1490 = vunpack.c.l.b16 %v1470
        %v1491 = vunpack.c.l.b16 %v1471
        %v1492 = vunpack.c.h.b16 %v1470
        %v1493 = vunpack.c.h.b16 %v1471
        %v1494 = vunpack.c.l.b16 %v1472
        %v1495 = vunpack.c.l.b16 %v1473
        %v1496 = vunpack.c.h.b16 %v1472
        %v1497 = vunpack.c.h.b16 %v1473
        %v1498 = vpack.c.b16 %v1483, %v1482
        %v1499 = vpack.c.b16 %v1485, %v1484
        %v1500 = vpack.c.b16 %v1487, %v1486
        %v1501 = vpack.c.b16 %v1489, %v1488
        %v1502 = vpack.c.b16 %v1491, %v1490
        %v1503 = vpack.c.b16 %v1493, %v1492
        %v1504 = vpack.c.b16 %v1495, %v1494
        %v1505 = vpack.c.b16 %v1497, %v1496
        %vm1514 = vcmask 1043456
        %vm1515 = vcmask 261124
        %vm1516 = vmor %vm1515, %vm1514
        %1517 = vst.msk [vmem:[#allocation2] sm:$0xff] %vm1516, %v1498
        %vm1518 = vcmask 1040384
        %vm1519 = vcmask 258052
        %vm1520 = vmor %vm1519, %vm1518
        %1521 = vst.msk [vmem:[#allocation2 + $0x8] sm:$0x11] %vm1520, %v1499
        %1522 = vst.msk [vmem:[#allocation2 + $0x10] sm:$0xff] %vm1516, %v1498
        %1523 = vst.msk [vmem:[#allocation2 + $0x18] sm:$0x11] %vm1520, %v1499
        %1524 = vst.msk [vmem:[#allocation2 + $0x20] sm:$0xff] %vm1516, %v1500
        %1525 = vst.msk [vmem:[#allocation2 + $0x28] sm:$0x11] %vm1520, %v1501
        %1526 = vst.msk [vmem:[#allocation2 + $0x30] sm:$0xff] %vm1516, %v1502
        %1527 = vst.msk [vmem:[#allocation2 + $0x38] sm:$0x11] %vm1520, %v1503
        %1528 = vst.msk [vmem:[#allocation2 + $0x40] sm:$0xff] %vm1516, %v1504
        %1529 = vst.msk [vmem:[#allocation2 + $0x48] sm:$0x11] %vm1520, %v1505
        %1530 = vst.msk [vmem:[#allocation2 + $0x50] sm:$0xff] %vm1516, %v1504
        %1531 = vst.msk [vmem:[#allocation2 + $0x58] sm:$0x11] %vm1520, %v1505
        %v1532 = vld [vmem:[#allocation2] sm:$0xff]
        %v1533 = vld [vmem:[#allocation2 + $0x10] sm:$0xff]
        %v1534 = vld [vmem:[#allocation2 + $0x20] sm:$0xff]
        %v1535 = vld [vmem:[#allocation2 + $0x30] sm:$0xff]
        %v1536 = vld [vmem:[#allocation3] sm:$0xf]
        %v1537 = vld [vmem:[#allocation3 + $0x4] sm:$0xf]
        %v1538 = vld [vmem:[#allocation3 + $0x8] sm:$0xf]
        %v1539 = vld [vmem:[#allocation3 + $0xc] sm:$0xf]
        %v1540 = vld [vmem:[#allocation3 + $0x10] sm:$0xf]
        %v1541 = vld [vmem:[#allocation3 + $0x14] sm:$0xf]
        %v1542 = vld [vmem:[#allocation3 + $0x18] sm:$0xf]
        %v1543 = vld [vmem:[#allocation3 + $0x1c] sm:$0xf]
        %v1544 = vld [vmem:[#allocation3 + $0x20] sm:$0xf]
        %v1545 = vld [vmem:[#allocation3 + $0x24] sm:$0xf]
        %v1546 = vld [vmem:[#allocation3 + $0x28] sm:$0xf]
        %v1547 = vld [vmem:[#allocation3 + $0x2c] sm:$0xf]
        %v1548 = vld [vmem:[#allocation3 + $0x30] sm:$0xf]
        %v1549 = vld [vmem:[#allocation3 + $0x34] sm:$0xf]
        %v1550 = vld [vmem:[#allocation3 + $0x38] sm:$0xf]
        %v1551 = vld [vmem:[#allocation3 + $0x3c] sm:$0xf]
        %v1552 = vld [vmem:[#allocation3 + $0x40] sm:$0xf]
        %v1553 = vld [vmem:[#allocation3 + $0x44] sm:$0xf]
        %v1554 = vld [vmem:[#allocation3 + $0x48] sm:$0xf]
        %v1555 = vld [vmem:[#allocation3 + $0x4c] sm:$0xf]
        %v1556 = vld [vmem:[#allocation2 + $0x8] sm:$0x11]
        %v1557 = vld [vmem:[#allocation2 + $0x18] sm:$0x11]
        %v1558 = vld [vmem:[#allocation2 + $0x28] sm:$0x11]
        %v1559 = vld [vmem:[#allocation2 + $0x38] sm:$0x11]
        %v1561 = vshrl.u32 %v1532, 16
        %v1563 = vrot.slane %v1561, 4
        %v1564 = vshll.u32 %v1532, 16
        %v1566 = vrot.slane %v1564, 5
        %v1567 = vor.u32 %v1563, %v1566
        %v1568 = vrot.slane %v1567, 4
        %v1570 = vshll.u32 %v1556, 16
        %v1572 = vrot.slane %v1570, 5
        %v1573 = vsel %vm253, %v1568, %v1572
        %v1575 = vshrl.u32 %v1533, 16
        %v1577 = vrot.slane %v1575, 4
        %v1578 = vshll.u32 %v1533, 16
        %v1580 = vrot.slane %v1578, 5
        %v1581 = vor.u32 %v1577, %v1580
        %v1582 = vrot.slane %v1581, 4
        %v1584 = vshll.u32 %v1557, 16
        %v1586 = vrot.slane %v1584, 5
        %v1587 = vsel %vm253, %v1582, %v1586
        %v1589 = vshrl.u32 %v1534, 16
        %v1591 = vrot.slane %v1589, 4
        %v1592 = vshll.u32 %v1534, 16
        %v1594 = vrot.slane %v1592, 5
        %v1595 = vor.u32 %v1591, %v1594
        %v1596 = vrot.slane %v1595, 4
        %v1598 = vshll.u32 %v1558, 16
        %v1600 = vrot.slane %v1598, 5
        %v1601 = vsel %vm253, %v1596, %v1600
        %v1603 = vshrl.u32 %v1535, 16
        %v1605 = vrot.slane %v1603, 4
        %v1606 = vshll.u32 %v1535, 16
        %v1608 = vrot.slane %v1606, 5
        %v1609 = vor.u32 %v1605, %v1608
        %v1610 = vrot.slane %v1609, 4
        %v1612 = vshll.u32 %v1559, 16
        %v1614 = vrot.slane %v1612, 5
        %v1615 = vsel %vm253, %v1610, %v1614
        %s1616 = scalar_lea.vmem [#allocation3], 80
        %v1617 = vld [vmem:[%s1616] sm:$0xf]
        %v1618 = vld [vmem:[%s1616 + $0x4] sm:$0xf]
        %v1619 = vld [vmem:[%s1616 + $0x8] sm:$0xf]
        %v1620 = vld [vmem:[%s1616 + $0xc] sm:$0xf]
        %v1621 = vld [vmem:[%s1616 + $0x10] sm:$0xf]
        %v1622 = vld [vmem:[%s1616 + $0x14] sm:$0xf]
        %v1623 = vld [vmem:[%s1616 + $0x18] sm:$0xf]
        %v1624 = vld [vmem:[%s1616 + $0x1c] sm:$0xf]
        %v1625 = vld [vmem:[%s1616 + $0x20] sm:$0xf]
        %v1626 = vld [vmem:[%s1616 + $0x24] sm:$0xf]
        %v1627 = vld [vmem:[%s1616 + $0x28] sm:$0xf]
        %v1628 = vld [vmem:[%s1616 + $0x2c] sm:$0xf]
        %v1629 = vld [vmem:[%s1616 + $0x30] sm:$0xf]
        %v1630 = vld [vmem:[%s1616 + $0x34] sm:$0xf]
        %v1631 = vld [vmem:[%s1616 + $0x38] sm:$0xf]
        %v1632 = vld [vmem:[%s1616 + $0x3c] sm:$0xf]
        %v1633 = vld [vmem:[%s1616 + $0x40] sm:$0xf]
        %v1634 = vld [vmem:[%s1616 + $0x44] sm:$0xf]
        %v1635 = vld [vmem:[%s1616 + $0x48] sm:$0xf]
        %v1636 = vld [vmem:[%s1616 + $0x4c] sm:$0xf]
        %v1637 = vunpack.c.l.b16 %v1573
        %v1638 = vunpack.c.h.b16 %v1573
        %v1639 = vunpack.c.l.b16 %v1587
        %v1640 = vunpack.c.h.b16 %v1587
        %v1641 = vunpack.c.l.b16 %v1601
        %v1642 = vunpack.c.h.b16 %v1601
        %v1643 = vunpack.c.l.b16 %v1615
        %v1644 = vunpack.c.h.b16 %v1615
        %v1645 = vpack.c.b16 %v1639, %v1637
        %v1646 = vpack.c.b16 %v1640, %v1638
        %v1647 = vpack.c.b16 %v1643, %v1641
        %v1648 = vpack.c.b16 %v1644, %v1642
        %v1671 = vunpack.c.l.b16 %v1617
        %v1672 = vunpack.c.l.b16 %v1618
        %v1673 = vunpack.c.l.b16 %v1619
        %v1674 = vunpack.c.l.b16 %v1620
        %v1675 = vunpack.c.l.b16 %v1621
        %v1676 = vunpack.c.l.b16 %v1622
        %v1677 = vunpack.c.l.b16 %v1623
        %v1678 = vunpack.c.l.b16 %v1624
        %v1679 = vunpack.c.l.b16 %v1625
        %v1680 = vunpack.c.l.b16 %v1626
        %v1681 = vunpack.c.l.b16 %v1627
        %v1682 = vunpack.c.l.b16 %v1628
        %v1683 = vunpack.c.l.b16 %v1629
        %v1684 = vunpack.c.l.b16 %v1630
        %v1685 = vunpack.c.l.b16 %v1631
        %v1686 = vunpack.c.l.b16 %v1632
        %v1687 = vunpack.c.l.b16 %v1633
        %v1688 = vunpack.c.l.b16 %v1634
        %v1689 = vunpack.c.l.b16 %v1635
        %v1690 = vunpack.c.l.b16 %v1636
        %v1691 = vpack.c.b16 %v1672, %v1671
        %v1692 = vpack.c.b16 %v1674, %v1673
        %v1693 = vpack.c.b16 %v1676, %v1675
        %v1694 = vpack.c.b16 %v1678, %v1677
        %v1695 = vpack.c.b16 %v1680, %v1679
        %v1696 = vpack.c.b16 %v1682, %v1681
        %v1697 = vpack.c.b16 %v1684, %v1683
        %v1698 = vpack.c.b16 %v1686, %v1685
        %v1699 = vpack.c.b16 %v1688, %v1687
        %v1700 = vpack.c.b16 %v1690, %v1689
        %vm1711 = vcmask 261120
        %v1713 = vsel %vm1711, %v1646, 0
        %v1716 = vsel %vm1711, %v1648, 0
        %1718 = vmatprep.subr.bf16.mxu0 0
        %1719 = vmatpush1.bf16.msra.mxu0 %v1691
        %1720 = vmatprep.subr.bf16.mxu0 0
        %1721 = vmatpush1.bf16.msra.mxu0 %v1692
        %1722 = vmatprep.subr.bf16.mxu0 0
        %1723 = vmatpush1.bf16.msra.mxu0 %v1693
        %1724 = vmatprep.subr.bf16.mxu0 0
        %1725 = vmatpush1.bf16.msra.mxu0 %v1694
        %1726 = vmatprep.subr.bf16.mxu0 0
        %1727 = vmatpush1.bf16.msra.mxu0 %v1695
        %1728 = vmatprep.subr.bf16.mxu0 0
        %1729 = vmatpush1.bf16.msra.mxu0 %v1696
        %1730 = vmatprep.subr.bf16.mxu0 0
        %1731 = vmatpush1.bf16.msra.mxu0 %v1697
        %1732 = vmatprep.subr.bf16.mxu0 0
        %1733 = vmatpush1.bf16.msra.mxu0 %v1698
        %1734 = vmatprep.subr.bf16.mxu0 0
        %1735 = vmatpush1.bf16.msra.mxu0 %v1699
        %1736 = vmatprep.subr.bf16.mxu0 0
        %1737 = vmatpush1.bf16.msra.mxu0 %v1700
        %1738 = vmatprep.subr.bf16.mxu0 0
        %1739 = vmatpush1.bf16.msra.mxu0 0
        %1740 = vmatprep.subr.bf16.mxu0 0
        %1741 = vmatpush1.bf16.msra.mxu0 0
        %1742 = vmatprep.subr.bf16.mxu0 0
        %1743 = vmatpush1.bf16.msra.mxu0 0
        %1744 = vmatprep.subr.bf16.mxu0 0
        %1745 = vmatpush1.bf16.msra.mxu0 0
        %1746 = vmatprep.subr.bf16.mxu0 0
        %1747 = vmatpush1.bf16.msra.mxu0 0
        %1748 = vmatprep.subr.bf16.mxu0 0
        %1749 = vmatpush1.bf16.msra.mxu0 0
        %1750 = vmatprep.mubr.bf16.mxu0 %v1713
        %1751 = vmatmul.mubr.bf16.gmra.mrb[0].mxu0 %v1645
        %v1752 = vpop.f32.mrb[0].mxu0
        %v1753 = vadd.f32 0.0, %v1752
        %v1754 = vpop.f32.mrb[0].mxu0
        %v1755 = vpop.f32.mrb[0].mxu0
        %v1756 = vadd.f32 0.0, %v1755
        %v1757 = vpop.f32.mrb[0].mxu0
        %1758 = vmatprep.mubr.bf16.mxu0 %v1716
        %1759 = vmatmul.mubr.bf16.gmra.mrb[0].mxu0 %v1647
        %v1760 = vpop.f32.mrb[0].mxu0
        %v1761 = vadd.f32 0.0, %v1760
        %v1762 = vpop.f32.mrb[0].mxu0
        %v1763 = vpop.f32.mrb[0].mxu0
        %v1764 = vadd.f32 0.0, %v1763
        %v1765 = vpop.f32.mrb[0].mxu0
        %1766 = vdwg.mxu0
        %v1771 = vunpack.c.l.b16 %v1532
        %v1772 = vunpack.c.h.b16 %v1532
        %v1773 = vunpack.c.l.b16 %v1533
        %v1774 = vunpack.c.h.b16 %v1533
        %v1775 = vunpack.c.l.b16 %v1534
        %v1776 = vunpack.c.h.b16 %v1534
        %v1777 = vunpack.c.l.b16 %v1535
        %v1778 = vunpack.c.h.b16 %v1535
        %v1779 = vpack.c.b16 %v1773, %v1771
        %v1780 = vpack.c.b16 %v1774, %v1772
        %v1781 = vpack.c.b16 %v1777, %v1775
        %v1782 = vpack.c.b16 %v1778, %v1776
        %v1805 = vunpack.c.l.b16 %v1536
        %v1806 = vunpack.c.l.b16 %v1537
        %v1807 = vunpack.c.l.b16 %v1538
        %v1808 = vunpack.c.l.b16 %v1539
        %v1809 = vunpack.c.l.b16 %v1540
        %v1810 = vunpack.c.l.b16 %v1541
        %v1811 = vunpack.c.l.b16 %v1542
        %v1812 = vunpack.c.l.b16 %v1543
        %v1813 = vunpack.c.l.b16 %v1544
        %v1814 = vunpack.c.l.b16 %v1545
        %v1815 = vunpack.c.l.b16 %v1546
        %v1816 = vunpack.c.l.b16 %v1547
        %v1817 = vunpack.c.l.b16 %v1548
        %v1818 = vunpack.c.l.b16 %v1549
        %v1819 = vunpack.c.l.b16 %v1550
        %v1820 = vunpack.c.l.b16 %v1551
        %v1821 = vunpack.c.l.b16 %v1552
        %v1822 = vunpack.c.l.b16 %v1553
        %v1823 = vunpack.c.l.b16 %v1554
        %v1824 = vunpack.c.l.b16 %v1555
        %v1825 = vpack.c.b16 %v1806, %v1805
        %v1826 = vpack.c.b16 %v1808, %v1807
        %v1827 = vpack.c.b16 %v1810, %v1809
        %v1828 = vpack.c.b16 %v1812, %v1811
        %v1829 = vpack.c.b16 %v1814, %v1813
        %v1830 = vpack.c.b16 %v1816, %v1815
        %v1831 = vpack.c.b16 %v1818, %v1817
        %v1832 = vpack.c.b16 %v1820, %v1819
        %v1833 = vpack.c.b16 %v1822, %v1821
        %v1834 = vpack.c.b16 %v1824, %v1823
        %v1846 = vsel %vm1711, %v1780, 0
        %v1849 = vsel %vm1711, %v1782, 0
        %1851 = vmatprep.subr.bf16.mxu0 0
        %1852 = vmatpush1.bf16.msra.mxu0 %v1825
        %1853 = vmatprep.subr.bf16.mxu0 0
        %1854 = vmatpush1.bf16.msra.mxu0 %v1826
        %1855 = vmatprep.subr.bf16.mxu0 0
        %1856 = vmatpush1.bf16.msra.mxu0 %v1827
        %1857 = vmatprep.subr.bf16.mxu0 0
        %1858 = vmatpush1.bf16.msra.mxu0 %v1828
        %1859 = vmatprep.subr.bf16.mxu0 0
        %1860 = vmatpush1.bf16.msra.mxu0 %v1829
        %1861 = vmatprep.subr.bf16.mxu0 0
        %1862 = vmatpush1.bf16.msra.mxu0 %v1830
        %1863 = vmatprep.subr.bf16.mxu0 0
        %1864 = vmatpush1.bf16.msra.mxu0 %v1831
        %1865 = vmatprep.subr.bf16.mxu0 0
        %1866 = vmatpush1.bf16.msra.mxu0 %v1832
        %1867 = vmatprep.subr.bf16.mxu0 0
        %1868 = vmatpush1.bf16.msra.mxu0 %v1833
        %1869 = vmatprep.subr.bf16.mxu0 0
        %1870 = vmatpush1.bf16.msra.mxu0 %v1834
        %1871 = vmatprep.subr.bf16.mxu0 0
        %1872 = vmatpush1.bf16.msra.mxu0 0
        %1873 = vmatprep.subr.bf16.mxu0 0
        %1874 = vmatpush1.bf16.msra.mxu0 0
        %1875 = vmatprep.subr.bf16.mxu0 0
        %1876 = vmatpush1.bf16.msra.mxu0 0
        %1877 = vmatprep.subr.bf16.mxu0 0
        %1878 = vmatpush1.bf16.msra.mxu0 0
        %1879 = vmatprep.subr.bf16.mxu0 0
        %1880 = vmatpush1.bf16.msra.mxu0 0
        %1881 = vmatprep.subr.bf16.mxu0 0
        %1882 = vmatpush1.bf16.msra.mxu0 0
        %1883 = vmatprep.mubr.bf16.mxu0 %v1846
        %1884 = vmatmul.mubr.bf16.gmra.mrb[0].mxu0 %v1779
        %v1885 = vpop.f32.mrb[0].mxu0
        %v1886 = vadd.f32 %v1753, %v1885
        %v1887 = vpop.f32.mrb[0].mxu0
        %v1888 = vpop.f32.mrb[0].mxu0
        %v1889 = vadd.f32 %v1756, %v1888
        %v1890 = vpop.f32.mrb[0].mxu0
        %1891 = vmatprep.mubr.bf16.mxu0 %v1849
        %1892 = vmatmul.mubr.bf16.gmra.mrb[0].mxu0 %v1781
        %v1893 = vpop.f32.mrb[0].mxu0
        %v1894 = vadd.f32 %v1761, %v1893
        %v1895 = vpop.f32.mrb[0].mxu0
        %v1896 = vpop.f32.mrb[0].mxu0
        %v1897 = vadd.f32 %v1764, %v1896
        %v1898 = vpop.f32.mrb[0].mxu0
        %1899 = vdwg.mxu0
        %v1900 = vld [vmem:[#allocation2] sm:$0xee]
        %v1901 = vld [vmem:[#allocation2 + $0x10] sm:$0xee]
        %v1902 = vld [vmem:[#allocation2 + $0x20] sm:$0xee]
        %v1903 = vld [vmem:[#allocation2 + $0x30] sm:$0xee]
        %v1912 = vrot.slane %v1900, 5
        %v1913 = vrot.slane %v1912, 4
        %v1914 = vrot.slane %v1556, 5
        %v1915 = vsel %vm485, %v1913, %v1914
        %v1916 = vrot.slane %v1901, 5
        %v1917 = vrot.slane %v1916, 4
        %v1918 = vrot.slane %v1557, 5
        %v1919 = vsel %vm485, %v1917, %v1918
        %v1920 = vrot.slane %v1902, 5
        %v1921 = vrot.slane %v1920, 4
        %v1922 = vrot.slane %v1558, 5
        %v1923 = vsel %vm485, %v1921, %v1922
        %v1924 = vrot.slane %v1903, 5
        %v1925 = vrot.slane %v1924, 4
        %v1926 = vrot.slane %v1559, 5
        %v1927 = vsel %vm485, %v1925, %v1926
        %s1928 = scalar_lea.vmem [#allocation3], 160
        %v1929 = vld [vmem:[%s1928] sm:$0xf]
        %v1930 = vld [vmem:[%s1928 + $0x4] sm:$0xf]
        %v1931 = vld [vmem:[%s1928 + $0x8] sm:$0xf]
        %v1932 = vld [vmem:[%s1928 + $0xc] sm:$0xf]
        %v1933 = vld [vmem:[%s1928 + $0x10] sm:$0xf]
        %v1934 = vld [vmem:[%s1928 + $0x14] sm:$0xf]
        %v1935 = vld [vmem:[%s1928 + $0x18] sm:$0xf]
        %v1936 = vld [vmem:[%s1928 + $0x1c] sm:$0xf]
        %v1937 = vld [vmem:[%s1928 + $0x20] sm:$0xf]
        %v1938 = vld [vmem:[%s1928 + $0x24] sm:$0xf]
        %v1939 = vld [vmem:[%s1928 + $0x28] sm:$0xf]
        %v1940 = vld [vmem:[%s1928 + $0x2c] sm:$0xf]
        %v1941 = vld [vmem:[%s1928 + $0x30] sm:$0xf]
        %v1942 = vld [vmem:[%s1928 + $0x34] sm:$0xf]
        %v1943 = vld [vmem:[%s1928 + $0x38] sm:$0xf]
        %v1944 = vld [vmem:[%s1928 + $0x3c] sm:$0xf]
        %v1945 = vld [vmem:[%s1928 + $0x40] sm:$0xf]
        %v1946 = vld [vmem:[%s1928 + $0x44] sm:$0xf]
        %v1947 = vld [vmem:[%s1928 + $0x48] sm:$0xf]
        %v1948 = vld [vmem:[%s1928 + $0x4c] sm:$0xf]
        %v1949 = vunpack.c.l.b16 %v1915
        %v1950 = vunpack.c.h.b16 %v1915
        %v1951 = vunpack.c.l.b16 %v1919
        %v1952 = vunpack.c.h.b16 %v1919
        %v1953 = vunpack.c.l.b16 %v1923
        %v1954 = vunpack.c.h.b16 %v1923
        %v1955 = vunpack.c.l.b16 %v1927
        %v1956 = vunpack.c.h.b16 %v1927
        %v1957 = vpack.c.b16 %v1951, %v1949
        %v1958 = vpack.c.b16 %v1952, %v1950
        %v1959 = vpack.c.b16 %v1955, %v1953
        %v1960 = vpack.c.b16 %v1956, %v1954
        %v1983 = vunpack.c.l.b16 %v1929
        %v1984 = vunpack.c.l.b16 %v1930
        %v1985 = vunpack.c.l.b16 %v1931
        %v1986 = vunpack.c.l.b16 %v1932
        %v1987 = vunpack.c.l.b16 %v1933
        %v1988 = vunpack.c.l.b16 %v1934
        %v1989 = vunpack.c.l.b16 %v1935
        %v1990 = vunpack.c.l.b16 %v1936
        %v1991 = vunpack.c.l.b16 %v1937
        %v1992 = vunpack.c.l.b16 %v1938
        %v1993 = vunpack.c.l.b16 %v1939
        %v1994 = vunpack.c.l.b16 %v1940
        %v1995 = vunpack.c.l.b16 %v1941
        %v1996 = vunpack.c.l.b16 %v1942
        %v1997 = vunpack.c.l.b16 %v1943
        %v1998 = vunpack.c.l.b16 %v1944
        %v1999 = vunpack.c.l.b16 %v1945
        %v2000 = vunpack.c.l.b16 %v1946
        %v2001 = vunpack.c.l.b16 %v1947
        %v2002 = vunpack.c.l.b16 %v1948
        %v2003 = vpack.c.b16 %v1984, %v1983
        %v2004 = vpack.c.b16 %v1986, %v1985
        %v2005 = vpack.c.b16 %v1988, %v1987
        %v2006 = vpack.c.b16 %v1990, %v1989
        %v2007 = vpack.c.b16 %v1992, %v1991
        %v2008 = vpack.c.b16 %v1994, %v1993
        %v2009 = vpack.c.b16 %v1996, %v1995
        %v2010 = vpack.c.b16 %v1998, %v1997
        %v2011 = vpack.c.b16 %v2000, %v1999
        %v2012 = vpack.c.b16 %v2002, %v2001
        %v2024 = vsel %vm1711, %v1958, 0
        %v2027 = vsel %vm1711, %v1960, 0
        %2029 = vmatprep.subr.bf16.mxu0 0
        %2030 = vmatpush1.bf16.msra.mxu0 %v2003
        %2031 = vmatprep.subr.bf16.mxu0 0
        %2032 = vmatpush1.bf16.msra.mxu0 %v2004
        %2033 = vmatprep.subr.bf16.mxu0 0
        %2034 = vmatpush1.bf16.msra.mxu0 %v2005
        %2035 = vmatprep.subr.bf16.mxu0 0
        %2036 = vmatpush1.bf16.msra.mxu0 %v2006
        %2037 = vmatprep.subr.bf16.mxu0 0
        %2038 = vmatpush1.bf16.msra.mxu0 %v2007
        %2039 = vmatprep.subr.bf16.mxu0 0
        %2040 = vmatpush1.bf16.msra.mxu0 %v2008
        %2041 = vmatprep.subr.bf16.mxu0 0
        %2042 = vmatpush1.bf16.msra.mxu0 %v2009
        %2043 = vmatprep.subr.bf16.mxu0 0
        %2044 = vmatpush1.bf16.msra.mxu0 %v2010
        %2045 = vmatprep.subr.bf16.mxu0 0
        %2046 = vmatpush1.bf16.msra.mxu0 %v2011
        %2047 = vmatprep.subr.bf16.mxu0 0
        %2048 = vmatpush1.bf16.msra.mxu0 %v2012
        %2049 = vmatprep.subr.bf16.mxu0 0
        %2050 = vmatpush1.bf16.msra.mxu0 0
        %2051 = vmatprep.subr.bf16.mxu0 0
        %2052 = vmatpush1.bf16.msra.mxu0 0
        %2053 = vmatprep.subr.bf16.mxu0 0
        %2054 = vmatpush1.bf16.msra.mxu0 0
        %2055 = vmatprep.subr.bf16.mxu0 0
        %2056 = vmatpush1.bf16.msra.mxu0 0
        %2057 = vmatprep.subr.bf16.mxu0 0
        %2058 = vmatpush1.bf16.msra.mxu0 0
        %2059 = vmatprep.subr.bf16.mxu0 0
        %2060 = vmatpush1.bf16.msra.mxu0 0
        %2061 = vmatprep.mubr.bf16.mxu0 %v2024
        %2062 = vmatmul.mubr.bf16.gmra.mrb[0].mxu0 %v1957
        %v2063 = vpop.f32.mrb[0].mxu0
        %v2064 = vadd.f32 0.0, %v2063
        %v2065 = vpop.f32.mrb[0].mxu0
        %v2066 = vpop.f32.mrb[0].mxu0
        %v2067 = vadd.f32 0.0, %v2066
        %v2068 = vpop.f32.mrb[0].mxu0
        %2069 = vmatprep.mubr.bf16.mxu0 %v2027
        %2070 = vmatmul.mubr.bf16.gmra.mrb[0].mxu0 %v1959
        %v2071 = vpop.f32.mrb[0].mxu0
        %v2072 = vadd.f32 0.0, %v2071
        %v2073 = vpop.f32.mrb[0].mxu0
        %v2074 = vpop.f32.mrb[0].mxu0
        %v2075 = vadd.f32 0.0, %v2074
        %v2076 = vpop.f32.mrb[0].mxu0
        %2077 = vdwg.mxu0
        %v2078 = vadd.f32 %v1886, %v2064
        %v2079 = vadd.f32 %v1889, %v2067
        %v2080 = vadd.f32 %v1894, %v2072
        %v2081 = vadd.f32 %v1897, %v2075
        %s2082 = scalar_lea.vmem [#allocation2], 16
        %v2083 = vld [vmem:[%s2082] sm:$0xff]
        %v2084 = vld [vmem:[%s2082 + $0x10] sm:$0xff]
        %v2085 = vld [vmem:[%s2082 + $0x20] sm:$0xff]
        %v2086 = vld [vmem:[%s2082 + $0x30] sm:$0xff]
        %s2087 = scalar_lea.vmem [#allocation3], 240
        %v2088 = vld [vmem:[%s2087] sm:$0xf]
        %v2089 = vld [vmem:[%s2087 + $0x4] sm:$0xf]
        %v2090 = vld [vmem:[%s2087 + $0x8] sm:$0xf]
        %v2091 = vld [vmem:[%s2087 + $0xc] sm:$0xf]
        %v2092 = vld [vmem:[%s2087 + $0x10] sm:$0xf]
        %v2093 = vld [vmem:[%s2087 + $0x14] sm:$0xf]
        %v2094 = vld [vmem:[%s2087 + $0x18] sm:$0xf]
        %v2095 = vld [vmem:[%s2087 + $0x1c] sm:$0xf]
        %v2096 = vld [vmem:[%s2087 + $0x20] sm:$0xf]
        %v2097 = vld [vmem:[%s2087 + $0x24] sm:$0xf]
        %v2098 = vld [vmem:[%s2087 + $0x28] sm:$0xf]
        %v2099 = vld [vmem:[%s2087 + $0x2c] sm:$0xf]
        %v2100 = vld [vmem:[%s2087 + $0x30] sm:$0xf]
        %v2101 = vld [vmem:[%s2087 + $0x34] sm:$0xf]
        %v2102 = vld [vmem:[%s2087 + $0x38] sm:$0xf]
        %v2103 = vld [vmem:[%s2087 + $0x3c] sm:$0xf]
        %v2104 = vld [vmem:[%s2087 + $0x40] sm:$0xf]
        %v2105 = vld [vmem:[%s2087 + $0x44] sm:$0xf]
        %v2106 = vld [vmem:[%s2087 + $0x48] sm:$0xf]
        %v2107 = vld [vmem:[%s2087 + $0x4c] sm:$0xf]
        %v2112 = vunpack.c.l.b16 %v2083
        %v2113 = vunpack.c.h.b16 %v2083
        %v2114 = vunpack.c.l.b16 %v2084
        %v2115 = vunpack.c.h.b16 %v2084
        %v2116 = vunpack.c.l.b16 %v2085
        %v2117 = vunpack.c.h.b16 %v2085
        %v2118 = vunpack.c.l.b16 %v2086
        %v2119 = vunpack.c.h.b16 %v2086
        %v2120 = vpack.c.b16 %v2114, %v2112
        %v2121 = vpack.c.b16 %v2115, %v2113
        %v2122 = vpack.c.b16 %v2118, %v2116
        %v2123 = vpack.c.b16 %v2119, %v2117
        %v2146 = vunpack.c.l.b16 %v2088
        %v2147 = vunpack.c.l.b16 %v2089
        %v2148 = vunpack.c.l.b16 %v2090
        %v2149 = vunpack.c.l.b16 %v2091
        %v2150 = vunpack.c.l.b16 %v2092
        %v2151 = vunpack.c.l.b16 %v2093
        %v2152 = vunpack.c.l.b16 %v2094
        %v2153 = vunpack.c.l.b16 %v2095
        %v2154 = vunpack.c.l.b16 %v2096
        %v2155 = vunpack.c.l.b16 %v2097
        %v2156 = vunpack.c.l.b16 %v2098
        %v2157 = vunpack.c.l.b16 %v2099
        %v2158 = vunpack.c.l.b16 %v2100
        %v2159 = vunpack.c.l.b16 %v2101
        %v2160 = vunpack.c.l.b16 %v2102
        %v2161 = vunpack.c.l.b16 %v2103
        %v2162 = vunpack.c.l.b16 %v2104
        %v2163 = vunpack.c.l.b16 %v2105
        %v2164 = vunpack.c.l.b16 %v2106
        %v2165 = vunpack.c.l.b16 %v2107
        %v2166 = vpack.c.b16 %v2147, %v2146
        %v2167 = vpack.c.b16 %v2149, %v2148
        %v2168 = vpack.c.b16 %v2151, %v2150
        %v2169 = vpack.c.b16 %v2153, %v2152
        %v2170 = vpack.c.b16 %v2155, %v2154
        %v2171 = vpack.c.b16 %v2157, %v2156
        %v2172 = vpack.c.b16 %v2159, %v2158
        %v2173 = vpack.c.b16 %v2161, %v2160
        %v2174 = vpack.c.b16 %v2163, %v2162
        %v2175 = vpack.c.b16 %v2165, %v2164
        %v2187 = vsel %vm1711, %v2121, 0
        %v2190 = vsel %vm1711, %v2123, 0
        %2192 = vmatprep.subr.bf16.mxu0 0
        %2193 = vmatpush1.bf16.msra.mxu0 %v2166
        %2194 = vmatprep.subr.bf16.mxu0 0
        %2195 = vmatpush1.bf16.msra.mxu0 %v2167
        %2196 = vmatprep.subr.bf16.mxu0 0
        %2197 = vmatpush1.bf16.msra.mxu0 %v2168
        %2198 = vmatprep.subr.bf16.mxu0 0
        %2199 = vmatpush1.bf16.msra.mxu0 %v2169
        %2200 = vmatprep.subr.bf16.mxu0 0
        %2201 = vmatpush1.bf16.msra.mxu0 %v2170
        %2202 = vmatprep.subr.bf16.mxu0 0
        %2203 = vmatpush1.bf16.msra.mxu0 %v2171
        %2204 = vmatprep.subr.bf16.mxu0 0
        %2205 = vmatpush1.bf16.msra.mxu0 %v2172
        %2206 = vmatprep.subr.bf16.mxu0 0
        %2207 = vmatpush1.bf16.msra.mxu0 %v2173
        %2208 = vmatprep.subr.bf16.mxu0 0
        %2209 = vmatpush1.bf16.msra.mxu0 %v2174
        %2210 = vmatprep.subr.bf16.mxu0 0
        %2211 = vmatpush1.bf16.msra.mxu0 %v2175
        %2212 = vmatprep.subr.bf16.mxu0 0
        %2213 = vmatpush1.bf16.msra.mxu0 0
        %2214 = vmatprep.subr.bf16.mxu0 0
        %2215 = vmatpush1.bf16.msra.mxu0 0
        %2216 = vmatprep.subr.bf16.mxu0 0
        %2217 = vmatpush1.bf16.msra.mxu0 0
        %2218 = vmatprep.subr.bf16.mxu0 0
        %2219 = vmatpush1.bf16.msra.mxu0 0
        %2220 = vmatprep.subr.bf16.mxu0 0
        %2221 = vmatpush1.bf16.msra.mxu0 0
        %2222 = vmatprep.subr.bf16.mxu0 0
        %2223 = vmatpush1.bf16.msra.mxu0 0
        %2224 = vmatprep.mubr.bf16.mxu0 %v2187
        %2225 = vmatmul.mubr.bf16.gmra.mrb[0].mxu0 %v2120
        %v2226 = vpop.f32.mrb[0].mxu0
        %v2227 = vadd.f32 0.0, %v2226
        %v2228 = vpop.f32.mrb[0].mxu0
        %v2229 = vpop.f32.mrb[0].mxu0
        %v2230 = vadd.f32 0.0, %v2229
        %v2231 = vpop.f32.mrb[0].mxu0
        %2232 = vmatprep.mubr.bf16.mxu0 %v2190
        %2233 = vmatmul.mubr.bf16.gmra.mrb[0].mxu0 %v2122
        %v2234 = vpop.f32.mrb[0].mxu0
        %v2235 = vadd.f32 0.0, %v2234
        %v2236 = vpop.f32.mrb[0].mxu0
        %v2237 = vpop.f32.mrb[0].mxu0
        %v2238 = vadd.f32 0.0, %v2237
        %v2239 = vpop.f32.mrb[0].mxu0
        %2240 = vdwg.mxu0
        %v2241 = vadd.f32 %v2078, %v2227
        %v2242 = vadd.f32 %v2079, %v2230
        %v2243 = vadd.f32 %v2080, %v2235
        %v2244 = vadd.f32 %v2081, %v2238
        %v2245 = vld [vmem:[%s2082] sm:$0xff]
        %v2246 = vld [vmem:[%s2082 + $0x8] sm:$0x11]
        %v2247 = vld [vmem:[%s2082 + $0x10] sm:$0xff]
        %v2248 = vld [vmem:[%s2082 + $0x18] sm:$0x11]
        %v2249 = vld [vmem:[%s2082 + $0x20] sm:$0xff]
        %v2250 = vld [vmem:[%s2082 + $0x28] sm:$0x11]
        %v2251 = vld [vmem:[%s2082 + $0x30] sm:$0xff]
        %v2252 = vld [vmem:[%s2082 + $0x38] sm:$0x11]
        %v2254 = vshrl.u32 %v2245, 16
        %v2256 = vrot.slane %v2254, 4
        %v2257 = vshll.u32 %v2245, 16
        %v2259 = vrot.slane %v2257, 5
        %v2260 = vor.u32 %v2256, %v2259
        %v2261 = vrot.slane %v2260, 4
        %v2263 = vshll.u32 %v2246, 16
        %v2265 = vrot.slane %v2263, 5
        %v2266 = vsel %vm253, %v2261, %v2265
        %v2268 = vshrl.u32 %v2247, 16
        %v2270 = vrot.slane %v2268, 4
        %v2271 = vshll.u32 %v2247, 16
        %v2273 = vrot.slane %v2271, 5
        %v2274 = vor.u32 %v2270, %v2273
        %v2275 = vrot.slane %v2274, 4
        %v2277 = vshll.u32 %v2248, 16
        %v2279 = vrot.slane %v2277, 5
        %v2280 = vsel %vm253, %v2275, %v2279
        %v2282 = vshrl.u32 %v2249, 16
        %v2284 = vrot.slane %v2282, 4
        %v2285 = vshll.u32 %v2249, 16
        %v2287 = vrot.slane %v2285, 5
        %v2288 = vor.u32 %v2284, %v2287
        %v2289 = vrot.slane %v2288, 4
        %v2291 = vshll.u32 %v2250, 16
        %v2293 = vrot.slane %v2291, 5
        %v2294 = vsel %vm253, %v2289, %v2293
        %v2296 = vshrl.u32 %v2251, 16
        %v2298 = vrot.slane %v2296, 4
        %v2299 = vshll.u32 %v2251, 16
        %v2301 = vrot.slane %v2299, 5
        %v2302 = vor.u32 %v2298, %v2301
        %v2303 = vrot.slane %v2302, 4
        %v2305 = vshll.u32 %v2252, 16
        %v2307 = vrot.slane %v2305, 5
        %v2308 = vsel %vm253, %v2303, %v2307
        %s2309 = scalar_lea.vmem [#allocation3], 320
        %v2310 = vld [vmem:[%s2309] sm:$0xf]
        %v2311 = vld [vmem:[%s2309 + $0x4] sm:$0xf]
        %v2312 = vld [vmem:[%s2309 + $0x8] sm:$0xf]
        %v2313 = vld [vmem:[%s2309 + $0xc] sm:$0xf]
        %v2314 = vld [vmem:[%s2309 + $0x10] sm:$0xf]
        %v2315 = vld [vmem:[%s2309 + $0x14] sm:$0xf]
        %v2316 = vld [vmem:[%s2309 + $0x18] sm:$0xf]
        %v2317 = vld [vmem:[%s2309 + $0x1c] sm:$0xf]
        %v2318 = vld [vmem:[%s2309 + $0x20] sm:$0xf]
        %v2319 = vld [vmem:[%s2309 + $0x24] sm:$0xf]
        %v2320 = vld [vmem:[%s2309 + $0x28] sm:$0xf]
        %v2321 = vld [vmem:[%s2309 + $0x2c] sm:$0xf]
        %v2322 = vld [vmem:[%s2309 + $0x30] sm:$0xf]
        %v2323 = vld [vmem:[%s2309 + $0x34] sm:$0xf]
        %v2324 = vld [vmem:[%s2309 + $0x38] sm:$0xf]
        %v2325 = vld [vmem:[%s2309 + $0x3c] sm:$0xf]
        %v2326 = vld [vmem:[%s2309 + $0x40] sm:$0xf]
        %v2327 = vld [vmem:[%s2309 + $0x44] sm:$0xf]
        %v2328 = vld [vmem:[%s2309 + $0x48] sm:$0xf]
        %v2329 = vld [vmem:[%s2309 + $0x4c] sm:$0xf]
        %v2330 = vunpack.c.l.b16 %v2266
        %v2331 = vunpack.c.h.b16 %v2266
        %v2332 = vunpack.c.l.b16 %v2280
        %v2333 = vunpack.c.h.b16 %v2280
        %v2334 = vunpack.c.l.b16 %v2294
        %v2335 = vunpack.c.h.b16 %v2294
        %v2336 = vunpack.c.l.b16 %v2308
        %v2337 = vunpack.c.h.b16 %v2308
        %v2338 = vpack.c.b16 %v2332, %v2330
        %v2339 = vpack.c.b16 %v2333, %v2331
        %v2340 = vpack.c.b16 %v2336, %v2334
        %v2341 = vpack.c.b16 %v2337, %v2335
        %v2364 = vunpack.c.l.b16 %v2310
        %v2365 = vunpack.c.l.b16 %v2311
        %v2366 = vunpack.c.l.b16 %v2312
        %v2367 = vunpack.c.l.b16 %v2313
        %v2368 = vunpack.c.l.b16 %v2314
        %v2369 = vunpack.c.l.b16 %v2315
        %v2370 = vunpack.c.l.b16 %v2316
        %v2371 = vunpack.c.l.b16 %v2317
        %v2372 = vunpack.c.l.b16 %v2318
        %v2373 = vunpack.c.l.b16 %v2319
        %v2374 = vunpack.c.l.b16 %v2320
        %v2375 = vunpack.c.l.b16 %v2321
        %v2376 = vunpack.c.l.b16 %v2322
        %v2377 = vunpack.c.l.b16 %v2323
        %v2378 = vunpack.c.l.b16 %v2324
        %v2379 = vunpack.c.l.b16 %v2325
        %v2380 = vunpack.c.l.b16 %v2326
        %v2381 = vunpack.c.l.b16 %v2327
        %v2382 = vunpack.c.l.b16 %v2328
        %v2383 = vunpack.c.l.b16 %v2329
        %v2384 = vpack.c.b16 %v2365, %v2364
        %v2385 = vpack.c.b16 %v2367, %v2366
        %v2386 = vpack.c.b16 %v2369, %v2368
        %v2387 = vpack.c.b16 %v2371, %v2370
        %v2388 = vpack.c.b16 %v2373, %v2372
        %v2389 = vpack.c.b16 %v2375, %v2374
        %v2390 = vpack.c.b16 %v2377, %v2376
        %v2391 = vpack.c.b16 %v2379, %v2378
        %v2392 = vpack.c.b16 %v2381, %v2380
        %v2393 = vpack.c.b16 %v2383, %v2382
        %v2405 = vsel %vm1711, %v2339, 0
        %v2408 = vsel %vm1711, %v2341, 0
        %2410 = vmatprep.subr.bf16.mxu0 0
        %2411 = vmatpush1.bf16.msra.mxu0 %v2384
        %2412 = vmatprep.subr.bf16.mxu0 0
        %2413 = vmatpush1.bf16.msra.mxu0 %v2385
        %2414 = vmatprep.subr.bf16.mxu0 0
        %2415 = vmatpush1.bf16.msra.mxu0 %v2386
        %2416 = vmatprep.subr.bf16.mxu0 0
        %2417 = vmatpush1.bf16.msra.mxu0 %v2387
        %2418 = vmatprep.subr.bf16.mxu0 0
        %2419 = vmatpush1.bf16.msra.mxu0 %v2388
        %2420 = vmatprep.subr.bf16.mxu0 0
        %2421 = vmatpush1.bf16.msra.mxu0 %v2389
        %2422 = vmatprep.subr.bf16.mxu0 0
        %2423 = vmatpush1.bf16.msra.mxu0 %v2390
        %2424 = vmatprep.subr.bf16.mxu0 0
        %2425 = vmatpush1.bf16.msra.mxu0 %v2391
        %2426 = vmatprep.subr.bf16.mxu0 0
        %2427 = vmatpush1.bf16.msra.mxu0 %v2392
        %2428 = vmatprep.subr.bf16.mxu0 0
        %2429 = vmatpush1.bf16.msra.mxu0 %v2393
        %2430 = vmatprep.subr.bf16.mxu0 0
        %2431 = vmatpush1.bf16.msra.mxu0 0
        %2432 = vmatprep.subr.bf16.mxu0 0
        %2433 = vmatpush1.bf16.msra.mxu0 0
        %2434 = vmatprep.subr.bf16.mxu0 0
        %2435 = vmatpush1.bf16.msra.mxu0 0
        %2436 = vmatprep.subr.bf16.mxu0 0
        %2437 = vmatpush1.bf16.msra.mxu0 0
        %2438 = vmatprep.subr.bf16.mxu0 0
        %2439 = vmatpush1.bf16.msra.mxu0 0
        %2440 = vmatprep.subr.bf16.mxu0 0
        %2441 = vmatpush1.bf16.msra.mxu0 0
        %2442 = vmatprep.mubr.bf16.mxu0 %v2405
        %2443 = vmatmul.mubr.bf16.gmra.mrb[0].mxu0 %v2338
        %v2444 = vpop.f32.mrb[0].mxu0
        %v2445 = vadd.f32 0.0, %v2444
        %v2446 = vpop.f32.mrb[0].mxu0
        %v2447 = vpop.f32.mrb[0].mxu0
        %v2448 = vadd.f32 0.0, %v2447
        %v2449 = vpop.f32.mrb[0].mxu0
        %2450 = vmatprep.mubr.bf16.mxu0 %v2408
        %2451 = vmatmul.mubr.bf16.gmra.mrb[0].mxu0 %v2340
        %v2452 = vpop.f32.mrb[0].mxu0
        %v2453 = vadd.f32 0.0, %v2452
        %v2454 = vpop.f32.mrb[0].mxu0
        %v2455 = vpop.f32.mrb[0].mxu0
        %v2456 = vadd.f32 0.0, %v2455
        %v2457 = vpop.f32.mrb[0].mxu0
        %2458 = vdwg.mxu0
        %v2459 = vadd.f32 %v2241, %v2445
        %v2460 = vadd.f32 %v2242, %v2448
        %v2461 = vadd.f32 %v2243, %v2453
        %v2462 = vadd.f32 %v2244, %v2456
        %v2463 = vld [vmem:[%s2082] sm:$0xee]
        %v2464 = vld [vmem:[%s2082 + $0x10] sm:$0xee]
        %v2465 = vld [vmem:[%s2082 + $0x20] sm:$0xee]
        %v2466 = vld [vmem:[%s2082 + $0x30] sm:$0xee]
        %v2475 = vrot.slane %v2463, 5
        %v2476 = vrot.slane %v2475, 4
        %v2477 = vrot.slane %v2246, 5
        %v2478 = vsel %vm485, %v2476, %v2477
        %v2479 = vrot.slane %v2464, 5
        %v2480 = vrot.slane %v2479, 4
        %v2481 = vrot.slane %v2248, 5
        %v2482 = vsel %vm485, %v2480, %v2481
        %v2483 = vrot.slane %v2465, 5
        %v2484 = vrot.slane %v2483, 4
        %v2485 = vrot.slane %v2250, 5
        %v2486 = vsel %vm485, %v2484, %v2485
        %v2487 = vrot.slane %v2466, 5
        %v2488 = vrot.slane %v2487, 4
        %v2489 = vrot.slane %v2252, 5
        %v2490 = vsel %vm485, %v2488, %v2489
        %s2491 = scalar_lea.vmem [#allocation3], 400
        %v2492 = vld [vmem:[%s2491] sm:$0xf]
        %v2493 = vld [vmem:[%s2491 + $0x4] sm:$0xf]
        %v2494 = vld [vmem:[%s2491 + $0x8] sm:$0xf]
        %v2495 = vld [vmem:[%s2491 + $0xc] sm:$0xf]
        %v2496 = vld [vmem:[%s2491 + $0x10] sm:$0xf]
        %v2497 = vld [vmem:[%s2491 + $0x14] sm:$0xf]
        %v2498 = vld [vmem:[%s2491 + $0x18] sm:$0xf]
        %v2499 = vld [vmem:[%s2491 + $0x1c] sm:$0xf]
        %v2500 = vld [vmem:[%s2491 + $0x20] sm:$0xf]
        %v2501 = vld [vmem:[%s2491 + $0x24] sm:$0xf]
        %v2502 = vld [vmem:[%s2491 + $0x28] sm:$0xf]
        %v2503 = vld [vmem:[%s2491 + $0x2c] sm:$0xf]
        %v2504 = vld [vmem:[%s2491 + $0x30] sm:$0xf]
        %v2505 = vld [vmem:[%s2491 + $0x34] sm:$0xf]
        %v2506 = vld [vmem:[%s2491 + $0x38] sm:$0xf]
        %v2507 = vld [vmem:[%s2491 + $0x3c] sm:$0xf]
        %v2508 = vld [vmem:[%s2491 + $0x40] sm:$0xf]
        %v2509 = vld [vmem:[%s2491 + $0x44] sm:$0xf]
        %v2510 = vld [vmem:[%s2491 + $0x48] sm:$0xf]
        %v2511 = vld [vmem:[%s2491 + $0x4c] sm:$0xf]
        %v2512 = vunpack.c.l.b16 %v2478
        %v2513 = vunpack.c.h.b16 %v2478
        %v2514 = vunpack.c.l.b16 %v2482
        %v2515 = vunpack.c.h.b16 %v2482
        %v2516 = vunpack.c.l.b16 %v2486
        %v2517 = vunpack.c.h.b16 %v2486
        %v2518 = vunpack.c.l.b16 %v2490
        %v2519 = vunpack.c.h.b16 %v2490
        %v2520 = vpack.c.b16 %v2514, %v2512
        %v2521 = vpack.c.b16 %v2515, %v2513
        %v2522 = vpack.c.b16 %v2518, %v2516
        %v2523 = vpack.c.b16 %v2519, %v2517
        %v2546 = vunpack.c.l.b16 %v2492
        %v2547 = vunpack.c.l.b16 %v2493
        %v2548 = vunpack.c.l.b16 %v2494
        %v2549 = vunpack.c.l.b16 %v2495
        %v2550 = vunpack.c.l.b16 %v2496
        %v2551 = vunpack.c.l.b16 %v2497
        %v2552 = vunpack.c.l.b16 %v2498
        %v2553 = vunpack.c.l.b16 %v2499
        %v2554 = vunpack.c.l.b16 %v2500
        %v2555 = vunpack.c.l.b16 %v2501
        %v2556 = vunpack.c.l.b16 %v2502
        %v2557 = vunpack.c.l.b16 %v2503
        %v2558 = vunpack.c.l.b16 %v2504
        %v2559 = vunpack.c.l.b16 %v2505
        %v2560 = vunpack.c.l.b16 %v2506
        %v2561 = vunpack.c.l.b16 %v2507
        %v2562 = vunpack.c.l.b16 %v2508
        %v2563 = vunpack.c.l.b16 %v2509
        %v2564 = vunpack.c.l.b16 %v2510
        %v2565 = vunpack.c.l.b16 %v2511
        %v2566 = vpack.c.b16 %v2547, %v2546
        %v2567 = vpack.c.b16 %v2549, %v2548
        %v2568 = vpack.c.b16 %v2551, %v2550
        %v2569 = vpack.c.b16 %v2553, %v2552
        %v2570 = vpack.c.b16 %v2555, %v2554
        %v2571 = vpack.c.b16 %v2557, %v2556
        %v2572 = vpack.c.b16 %v2559, %v2558
        %v2573 = vpack.c.b16 %v2561, %v2560
        %v2574 = vpack.c.b16 %v2563, %v2562
        %v2575 = vpack.c.b16 %v2565, %v2564
        %v2587 = vsel %vm1711, %v2521, 0
        %v2590 = vsel %vm1711, %v2523, 0
        %2592 = vmatprep.subr.bf16.mxu0 0
        %2593 = vmatpush1.bf16.msra.mxu0 %v2566
        %2594 = vmatprep.subr.bf16.mxu0 0
        %2595 = vmatpush1.bf16.msra.mxu0 %v2567
        %2596 = vmatprep.subr.bf16.mxu0 0
        %2597 = vmatpush1.bf16.msra.mxu0 %v2568
        %2598 = vmatprep.subr.bf16.mxu0 0
        %2599 = vmatpush1.bf16.msra.mxu0 %v2569
        %2600 = vmatprep.subr.bf16.mxu0 0
        %2601 = vmatpush1.bf16.msra.mxu0 %v2570
        %2602 = vmatprep.subr.bf16.mxu0 0
        %2603 = vmatpush1.bf16.msra.mxu0 %v2571
        %2604 = vmatprep.subr.bf16.mxu0 0
        %2605 = vmatpush1.bf16.msra.mxu0 %v2572
        %2606 = vmatprep.subr.bf16.mxu0 0
        %2607 = vmatpush1.bf16.msra.mxu0 %v2573
        %2608 = vmatprep.subr.bf16.mxu0 0
        %2609 = vmatpush1.bf16.msra.mxu0 %v2574
        %2610 = vmatprep.subr.bf16.mxu0 0
        %2611 = vmatpush1.bf16.msra.mxu0 %v2575
        %2612 = vmatprep.subr.bf16.mxu0 0
        %2613 = vmatpush1.bf16.msra.mxu0 0
        %2614 = vmatprep.subr.bf16.mxu0 0
        %2615 = vmatpush1.bf16.msra.mxu0 0
        %2616 = vmatprep.subr.bf16.mxu0 0
        %2617 = vmatpush1.bf16.msra.mxu0 0
        %2618 = vmatprep.subr.bf16.mxu0 0
        %2619 = vmatpush1.bf16.msra.mxu0 0
        %2620 = vmatprep.subr.bf16.mxu0 0
        %2621 = vmatpush1.bf16.msra.mxu0 0
        %2622 = vmatprep.subr.bf16.mxu0 0
        %2623 = vmatpush1.bf16.msra.mxu0 0
        %2624 = vmatprep.mubr.bf16.mxu0 %v2587
        %2625 = vmatmul.mubr.bf16.gmra.mrb[0].mxu0 %v2520
        %v2626 = vpop.f32.mrb[0].mxu0
        %v2627 = vadd.f32 0.0, %v2626
        %v2628 = vpop.f32.mrb[0].mxu0
        %v2629 = vpop.f32.mrb[0].mxu0
        %v2630 = vadd.f32 0.0, %v2629
        %v2631 = vpop.f32.mrb[0].mxu0
        %2632 = vmatprep.mubr.bf16.mxu0 %v2590
        %2633 = vmatmul.mubr.bf16.gmra.mrb[0].mxu0 %v2522
        %v2634 = vpop.f32.mrb[0].mxu0
        %v2635 = vadd.f32 0.0, %v2634
        %v2636 = vpop.f32.mrb[0].mxu0
        %v2637 = vpop.f32.mrb[0].mxu0
        %v2638 = vadd.f32 0.0, %v2637
        %v2639 = vpop.f32.mrb[0].mxu0
        %2640 = vdwg.mxu0
        %v2641 = vadd.f32 %v2459, %v2627
        %v2642 = vadd.f32 %v2460, %v2630
        %v2643 = vadd.f32 %v2461, %v2635
        %v2644 = vadd.f32 %v2462, %v2638
        %s2645 = scalar_lea.vmem [#allocation2], 32
        %v2646 = vld [vmem:[%s2645] sm:$0xff]
        %v2647 = vld [vmem:[%s2645 + $0x10] sm:$0xff]
        %v2648 = vld [vmem:[%s2645 + $0x20] sm:$0xff]
        %v2649 = vld [vmem:[%s2645 + $0x30] sm:$0xff]
        %s2650 = scalar_lea.vmem [#allocation3], 480
        %v2651 = vld [vmem:[%s2650] sm:$0xf]
        %v2652 = vld [vmem:[%s2650 + $0x4] sm:$0xf]
        %v2653 = vld [vmem:[%s2650 + $0x8] sm:$0xf]
        %v2654 = vld [vmem:[%s2650 + $0xc] sm:$0xf]
        %v2655 = vld [vmem:[%s2650 + $0x10] sm:$0xf]
        %v2656 = vld [vmem:[%s2650 + $0x14] sm:$0xf]
        %v2657 = vld [vmem:[%s2650 + $0x18] sm:$0xf]
        %v2658 = vld [vmem:[%s2650 + $0x1c] sm:$0xf]
        %v2659 = vld [vmem:[%s2650 + $0x20] sm:$0xf]
        %v2660 = vld [vmem:[%s2650 + $0x24] sm:$0xf]
        %v2661 = vld [vmem:[%s2650 + $0x28] sm:$0xf]
        %v2662 = vld [vmem:[%s2650 + $0x2c] sm:$0xf]
        %v2663 = vld [vmem:[%s2650 + $0x30] sm:$0xf]
        %v2664 = vld [vmem:[%s2650 + $0x34] sm:$0xf]
        %v2665 = vld [vmem:[%s2650 + $0x38] sm:$0xf]
        %v2666 = vld [vmem:[%s2650 + $0x3c] sm:$0xf]
        %v2667 = vld [vmem:[%s2650 + $0x40] sm:$0xf]
        %v2668 = vld [vmem:[%s2650 + $0x44] sm:$0xf]
        %v2669 = vld [vmem:[%s2650 + $0x48] sm:$0xf]
        %v2670 = vld [vmem:[%s2650 + $0x4c] sm:$0xf]
        %v2675 = vunpack.c.l.b16 %v2646
        %v2676 = vunpack.c.h.b16 %v2646
        %v2677 = vunpack.c.l.b16 %v2647
        %v2678 = vunpack.c.h.b16 %v2647
        %v2679 = vunpack.c.l.b16 %v2648
        %v2680 = vunpack.c.h.b16 %v2648
        %v2681 = vunpack.c.l.b16 %v2649
        %v2682 = vunpack.c.h.b16 %v2649
        %v2683 = vpack.c.b16 %v2677, %v2675
        %v2684 = vpack.c.b16 %v2678, %v2676
        %v2685 = vpack.c.b16 %v2681, %v2679
        %v2686 = vpack.c.b16 %v2682, %v2680
        %v2709 = vunpack.c.l.b16 %v2651
        %v2710 = vunpack.c.l.b16 %v2652
        %v2711 = vunpack.c.l.b16 %v2653
        %v2712 = vunpack.c.l.b16 %v2654
        %v2713 = vunpack.c.l.b16 %v2655
        %v2714 = vunpack.c.l.b16 %v2656
        %v2715 = vunpack.c.l.b16 %v2657
        %v2716 = vunpack.c.l.b16 %v2658
        %v2717 = vunpack.c.l.b16 %v2659
        %v2718 = vunpack.c.l.b16 %v2660
        %v2719 = vunpack.c.l.b16 %v2661
        %v2720 = vunpack.c.l.b16 %v2662
        %v2721 = vunpack.c.l.b16 %v2663
        %v2722 = vunpack.c.l.b16 %v2664
        %v2723 = vunpack.c.l.b16 %v2665
        %v2724 = vunpack.c.l.b16 %v2666
        %v2725 = vunpack.c.l.b16 %v2667
        %v2726 = vunpack.c.l.b16 %v2668
        %v2727 = vunpack.c.l.b16 %v2669
        %v2728 = vunpack.c.l.b16 %v2670
        %v2729 = vpack.c.b16 %v2710, %v2709
        %v2730 = vpack.c.b16 %v2712, %v2711
        %v2731 = vpack.c.b16 %v2714, %v2713
        %v2732 = vpack.c.b16 %v2716, %v2715
        %v2733 = vpack.c.b16 %v2718, %v2717
        %v2734 = vpack.c.b16 %v2720, %v2719
        %v2735 = vpack.c.b16 %v2722, %v2721
        %v2736 = vpack.c.b16 %v2724, %v2723
        %v2737 = vpack.c.b16 %v2726, %v2725
        %v2738 = vpack.c.b16 %v2728, %v2727
        %v2750 = vsel %vm1711, %v2684, 0
        %v2753 = vsel %vm1711, %v2686, 0
        %2755 = vmatprep.subr.bf16.mxu0 0
        %2756 = vmatpush1.bf16.msra.mxu0 %v2729
        %2757 = vmatprep.subr.bf16.mxu0 0
        %2758 = vmatpush1.bf16.msra.mxu0 %v2730
        %2759 = vmatprep.subr.bf16.mxu0 0
        %2760 = vmatpush1.bf16.msra.mxu0 %v2731
        %2761 = vmatprep.subr.bf16.mxu0 0
        %2762 = vmatpush1.bf16.msra.mxu0 %v2732
        %2763 = vmatprep.subr.bf16.mxu0 0
        %2764 = vmatpush1.bf16.msra.mxu0 %v2733
        %2765 = vmatprep.subr.bf16.mxu0 0
        %2766 = vmatpush1.bf16.msra.mxu0 %v2734
        %2767 = vmatprep.subr.bf16.mxu0 0
        %2768 = vmatpush1.bf16.msra.mxu0 %v2735
        %2769 = vmatprep.subr.bf16.mxu0 0
        %2770 = vmatpush1.bf16.msra.mxu0 %v2736
        %2771 = vmatprep.subr.bf16.mxu0 0
        %2772 = vmatpush1.bf16.msra.mxu0 %v2737
        %2773 = vmatprep.subr.bf16.mxu0 0
        %2774 = vmatpush1.bf16.msra.mxu0 %v2738
        %2775 = vmatprep.subr.bf16.mxu0 0
        %2776 = vmatpush1.bf16.msra.mxu0 0
        %2777 = vmatprep.subr.bf16.mxu0 0
        %2778 = vmatpush1.bf16.msra.mxu0 0
        %2779 = vmatprep.subr.bf16.mxu0 0
        %2780 = vmatpush1.bf16.msra.mxu0 0
        %2781 = vmatprep.subr.bf16.mxu0 0
        %2782 = vmatpush1.bf16.msra.mxu0 0
        %2783 = vmatprep.subr.bf16.mxu0 0
        %2784 = vmatpush1.bf16.msra.mxu0 0
        %2785 = vmatprep.subr.bf16.mxu0 0
        %2786 = vmatpush1.bf16.msra.mxu0 0
        %2787 = vmatprep.mubr.bf16.mxu0 %v2750
        %2788 = vmatmul.mubr.bf16.gmra.mrb[0].mxu0 %v2683
        %v2789 = vpop.f32.mrb[0].mxu0
        %v2790 = vadd.f32 0.0, %v2789
        %v2791 = vpop.f32.mrb[0].mxu0
        %v2792 = vpop.f32.mrb[0].mxu0
        %v2793 = vadd.f32 0.0, %v2792
        %v2794 = vpop.f32.mrb[0].mxu0
        %2795 = vmatprep.mubr.bf16.mxu0 %v2753
        %2796 = vmatmul.mubr.bf16.gmra.mrb[0].mxu0 %v2685
        %v2797 = vpop.f32.mrb[0].mxu0
        %v2798 = vadd.f32 0.0, %v2797
        %v2799 = vpop.f32.mrb[0].mxu0
        %v2800 = vpop.f32.mrb[0].mxu0
        %v2801 = vadd.f32 0.0, %v2800
        %v2802 = vpop.f32.mrb[0].mxu0
        %2803 = vdwg.mxu0
        %v2804 = vadd.f32 %v2641, %v2790
        %v2805 = vadd.f32 %v2642, %v2793
        %v2806 = vadd.f32 %v2643, %v2798
        %v2807 = vadd.f32 %v2644, %v2801
        %v2808 = vld [vmem:[%s2645] sm:$0xff]
        %v2809 = vld [vmem:[%s2645 + $0x8] sm:$0x11]
        %v2810 = vld [vmem:[%s2645 + $0x10] sm:$0xff]
        %v2811 = vld [vmem:[%s2645 + $0x18] sm:$0x11]
        %v2812 = vld [vmem:[%s2645 + $0x20] sm:$0xff]
        %v2813 = vld [vmem:[%s2645 + $0x28] sm:$0x11]
        %v2814 = vld [vmem:[%s2645 + $0x30] sm:$0xff]
        %v2815 = vld [vmem:[%s2645 + $0x38] sm:$0x11]
        %v2817 = vshrl.u32 %v2808, 16
        %v2819 = vrot.slane %v2817, 4
        %v2820 = vshll.u32 %v2808, 16
        %v2822 = vrot.slane %v2820, 5
        %v2823 = vor.u32 %v2819, %v2822
        %v2824 = vrot.slane %v2823, 4
        %v2826 = vshll.u32 %v2809, 16
        %v2828 = vrot.slane %v2826, 5
        %v2829 = vsel %vm253, %v2824, %v2828
        %v2831 = vshrl.u32 %v2810, 16
        %v2833 = vrot.slane %v2831, 4
        %v2834 = vshll.u32 %v2810, 16
        %v2836 = vrot.slane %v2834, 5
        %v2837 = vor.u32 %v2833, %v2836
        %v2838 = vrot.slane %v2837, 4
        %v2840 = vshll.u32 %v2811, 16
        %v2842 = vrot.slane %v2840, 5
        %v2843 = vsel %vm253, %v2838, %v2842
        %v2845 = vshrl.u32 %v2812, 16
        %v2847 = vrot.slane %v2845, 4
        %v2848 = vshll.u32 %v2812, 16
        %v2850 = vrot.slane %v2848, 5
        %v2851 = vor.u32 %v2847, %v2850
        %v2852 = vrot.slane %v2851, 4
        %v2854 = vshll.u32 %v2813, 16
        %v2856 = vrot.slane %v2854, 5
        %v2857 = vsel %vm253, %v2852, %v2856
        %v2859 = vshrl.u32 %v2814, 16
        %v2861 = vrot.slane %v2859, 4
        %v2862 = vshll.u32 %v2814, 16
        %v2864 = vrot.slane %v2862, 5
        %v2865 = vor.u32 %v2861, %v2864
        %v2866 = vrot.slane %v2865, 4
        %v2868 = vshll.u32 %v2815, 16
        %v2870 = vrot.slane %v2868, 5
        %v2871 = vsel %vm253, %v2866, %v2870
        %s2872 = scalar_lea.vmem [#allocation3], 560
        %v2873 = vld [vmem:[%s2872] sm:$0xf]
        %v2874 = vld [vmem:[%s2872 + $0x4] sm:$0xf]
        %v2875 = vld [vmem:[%s2872 + $0x8] sm:$0xf]
        %v2876 = vld [vmem:[%s2872 + $0xc] sm:$0xf]
        %v2877 = vld [vmem:[%s2872 + $0x10] sm:$0xf]
        %v2878 = vld [vmem:[%s2872 + $0x14] sm:$0xf]
        %v2879 = vld [vmem:[%s2872 + $0x18] sm:$0xf]
        %v2880 = vld [vmem:[%s2872 + $0x1c] sm:$0xf]
        %v2881 = vld [vmem:[%s2872 + $0x20] sm:$0xf]
        %v2882 = vld [vmem:[%s2872 + $0x24] sm:$0xf]
        %v2883 = vld [vmem:[%s2872 + $0x28] sm:$0xf]
        %v2884 = vld [vmem:[%s2872 + $0x2c] sm:$0xf]
        %v2885 = vld [vmem:[%s2872 + $0x30] sm:$0xf]
        %v2886 = vld [vmem:[%s2872 + $0x34] sm:$0xf]
        %v2887 = vld [vmem:[%s2872 + $0x38] sm:$0xf]
        %v2888 = vld [vmem:[%s2872 + $0x3c] sm:$0xf]
        %v2889 = vld [vmem:[%s2872 + $0x40] sm:$0xf]
        %v2890 = vld [vmem:[%s2872 + $0x44] sm:$0xf]
        %v2891 = vld [vmem:[%s2872 + $0x48] sm:$0xf]
        %v2892 = vld [vmem:[%s2872 + $0x4c] sm:$0xf]
        %v2893 = vunpack.c.l.b16 %v2829
        %v2894 = vunpack.c.h.b16 %v2829
        %v2895 = vunpack.c.l.b16 %v2843
        %v2896 = vunpack.c.h.b16 %v2843
        %v2897 = vunpack.c.l.b16 %v2857
        %v2898 = vunpack.c.h.b16 %v2857
        %v2899 = vunpack.c.l.b16 %v2871
        %v2900 = vunpack.c.h.b16 %v2871
        %v2901 = vpack.c.b16 %v2895, %v2893
        %v2902 = vpack.c.b16 %v2896, %v2894
        %v2903 = vpack.c.b16 %v2899, %v2897
        %v2904 = vpack.c.b16 %v2900, %v2898
        %v2927 = vunpack.c.l.b16 %v2873
        %v2928 = vunpack.c.l.b16 %v2874
        %v2929 = vunpack.c.l.b16 %v2875
        %v2930 = vunpack.c.l.b16 %v2876
        %v2931 = vunpack.c.l.b16 %v2877
        %v2932 = vunpack.c.l.b16 %v2878
        %v2933 = vunpack.c.l.b16 %v2879
        %v2934 = vunpack.c.l.b16 %v2880
        %v2935 = vunpack.c.l.b16 %v2881
        %v2936 = vunpack.c.l.b16 %v2882
        %v2937 = vunpack.c.l.b16 %v2883
        %v2938 = vunpack.c.l.b16 %v2884
        %v2939 = vunpack.c.l.b16 %v2885
        %v2940 = vunpack.c.l.b16 %v2886
        %v2941 = vunpack.c.l.b16 %v2887
        %v2942 = vunpack.c.l.b16 %v2888
        %v2943 = vunpack.c.l.b16 %v2889
        %v2944 = vunpack.c.l.b16 %v2890
        %v2945 = vunpack.c.l.b16 %v2891
        %v2946 = vunpack.c.l.b16 %v2892
        %v2947 = vpack.c.b16 %v2928, %v2927
        %v2948 = vpack.c.b16 %v2930, %v2929
        %v2949 = vpack.c.b16 %v2932, %v2931
        %v2950 = vpack.c.b16 %v2934, %v2933
        %v2951 = vpack.c.b16 %v2936, %v2935
        %v2952 = vpack.c.b16 %v2938, %v2937
        %v2953 = vpack.c.b16 %v2940, %v2939
        %v2954 = vpack.c.b16 %v2942, %v2941
        %v2955 = vpack.c.b16 %v2944, %v2943
        %v2956 = vpack.c.b16 %v2946, %v2945
        %v2968 = vsel %vm1711, %v2902, 0
        %v2971 = vsel %vm1711, %v2904, 0
        %2973 = vmatprep.subr.bf16.mxu0 0
        %2974 = vmatpush1.bf16.msra.mxu0 %v2947
        %2975 = vmatprep.subr.bf16.mxu0 0
        %2976 = vmatpush1.bf16.msra.mxu0 %v2948
        %2977 = vmatprep.subr.bf16.mxu0 0
        %2978 = vmatpush1.bf16.msra.mxu0 %v2949
        %2979 = vmatprep.subr.bf16.mxu0 0
        %2980 = vmatpush1.bf16.msra.mxu0 %v2950
        %2981 = vmatprep.subr.bf16.mxu0 0
        %2982 = vmatpush1.bf16.msra.mxu0 %v2951
        %2983 = vmatprep.subr.bf16.mxu0 0
        %2984 = vmatpush1.bf16.msra.mxu0 %v2952
        %2985 = vmatprep.subr.bf16.mxu0 0
        %2986 = vmatpush1.bf16.msra.mxu0 %v2953
        %2987 = vmatprep.subr.bf16.mxu0 0
        %2988 = vmatpush1.bf16.msra.mxu0 %v2954
        %2989 = vmatprep.subr.bf16.mxu0 0
        %2990 = vmatpush1.bf16.msra.mxu0 %v2955
        %2991 = vmatprep.subr.bf16.mxu0 0
        %2992 = vmatpush1.bf16.msra.mxu0 %v2956
        %2993 = vmatprep.subr.bf16.mxu0 0
        %2994 = vmatpush1.bf16.msra.mxu0 0
        %2995 = vmatprep.subr.bf16.mxu0 0
        %2996 = vmatpush1.bf16.msra.mxu0 0
        %2997 = vmatprep.subr.bf16.mxu0 0
        %2998 = vmatpush1.bf16.msra.mxu0 0
        %2999 = vmatprep.subr.bf16.mxu0 0
        %3000 = vmatpush1.bf16.msra.mxu0 0
        %3001 = vmatprep.subr.bf16.mxu0 0
        %3002 = vmatpush1.bf16.msra.mxu0 0
        %3003 = vmatprep.subr.bf16.mxu0 0
        %3004 = vmatpush1.bf16.msra.mxu0 0
        %3005 = vmatprep.mubr.bf16.mxu0 %v2968
        %3006 = vmatmul.mubr.bf16.gmra.mrb[0].mxu0 %v2901
        %v3007 = vpop.f32.mrb[0].mxu0
        %v3008 = vadd.f32 0.0, %v3007
        %v3009 = vpop.f32.mrb[0].mxu0
        %v3010 = vpop.f32.mrb[0].mxu0
        %v3011 = vadd.f32 0.0, %v3010
        %v3012 = vpop.f32.mrb[0].mxu0
        %3013 = vmatprep.mubr.bf16.mxu0 %v2971
        %3014 = vmatmul.mubr.bf16.gmra.mrb[0].mxu0 %v2903
        %v3015 = vpop.f32.mrb[0].mxu0
        %v3016 = vadd.f32 0.0, %v3015
        %v3017 = vpop.f32.mrb[0].mxu0
        %v3018 = vpop.f32.mrb[0].mxu0
        %v3019 = vadd.f32 0.0, %v3018
        %v3020 = vpop.f32.mrb[0].mxu0
        %3021 = vdwg.mxu0
        %v3022 = vadd.f32 %v2804, %v3008
        %v3023 = vadd.f32 %v2805, %v3011
        %v3024 = vadd.f32 %v2806, %v3016
        %v3025 = vadd.f32 %v2807, %v3019
        %v3026 = vld [vmem:[%s2645] sm:$0xee]
        %v3027 = vld [vmem:[%s2645 + $0x10] sm:$0xee]
        %v3028 = vld [vmem:[%s2645 + $0x20] sm:$0xee]
        %v3029 = vld [vmem:[%s2645 + $0x30] sm:$0xee]
        %v3038 = vrot.slane %v3026, 5
        %v3039 = vrot.slane %v3038, 4
        %v3040 = vrot.slane %v2809, 5
        %v3041 = vsel %vm485, %v3039, %v3040
        %v3042 = vrot.slane %v3027, 5
        %v3043 = vrot.slane %v3042, 4
        %v3044 = vrot.slane %v2811, 5
        %v3045 = vsel %vm485, %v3043, %v3044
        %v3046 = vrot.slane %v3028, 5
        %v3047 = vrot.slane %v3046, 4
        %v3048 = vrot.slane %v2813, 5
        %v3049 = vsel %vm485, %v3047, %v3048
        %v3050 = vrot.slane %v3029, 5
        %v3051 = vrot.slane %v3050, 4
        %v3052 = vrot.slane %v2815, 5
        %v3053 = vsel %vm485, %v3051, %v3052
        %s3054 = scalar_lea.vmem [#allocation3], 640
        %v3055 = vld [vmem:[%s3054] sm:$0xf]
        %v3056 = vld [vmem:[%s3054 + $0x4] sm:$0xf]
        %v3057 = vld [vmem:[%s3054 + $0x8] sm:$0xf]
        %v3058 = vld [vmem:[%s3054 + $0xc] sm:$0xf]
        %v3059 = vld [vmem:[%s3054 + $0x10] sm:$0xf]
        %v3060 = vld [vmem:[%s3054 + $0x14] sm:$0xf]
        %v3061 = vld [vmem:[%s3054 + $0x18] sm:$0xf]
        %v3062 = vld [vmem:[%s3054 + $0x1c] sm:$0xf]
        %v3063 = vld [vmem:[%s3054 + $0x20] sm:$0xf]
        %v3064 = vld [vmem:[%s3054 + $0x24] sm:$0xf]
        %v3065 = vld [vmem:[%s3054 + $0x28] sm:$0xf]
        %v3066 = vld [vmem:[%s3054 + $0x2c] sm:$0xf]
        %v3067 = vld [vmem:[%s3054 + $0x30] sm:$0xf]
        %v3068 = vld [vmem:[%s3054 + $0x34] sm:$0xf]
        %v3069 = vld [vmem:[%s3054 + $0x38] sm:$0xf]
        %v3070 = vld [vmem:[%s3054 + $0x3c] sm:$0xf]
        %v3071 = vld [vmem:[%s3054 + $0x40] sm:$0xf]
        %v3072 = vld [vmem:[%s3054 + $0x44] sm:$0xf]
        %v3073 = vld [vmem:[%s3054 + $0x48] sm:$0xf]
        %v3074 = vld [vmem:[%s3054 + $0x4c] sm:$0xf]
        %v3075 = vunpack.c.l.b16 %v3041
        %v3076 = vunpack.c.h.b16 %v3041
        %v3077 = vunpack.c.l.b16 %v3045
        %v3078 = vunpack.c.h.b16 %v3045
        %v3079 = vunpack.c.l.b16 %v3049
        %v3080 = vunpack.c.h.b16 %v3049
        %v3081 = vunpack.c.l.b16 %v3053
        %v3082 = vunpack.c.h.b16 %v3053
        %v3083 = vpack.c.b16 %v3077, %v3075
        %v3084 = vpack.c.b16 %v3078, %v3076
        %v3085 = vpack.c.b16 %v3081, %v3079
        %v3086 = vpack.c.b16 %v3082, %v3080
        %v3109 = vunpack.c.l.b16 %v3055
        %v3110 = vunpack.c.l.b16 %v3056
        %v3111 = vunpack.c.l.b16 %v3057
        %v3112 = vunpack.c.l.b16 %v3058
        %v3113 = vunpack.c.l.b16 %v3059
        %v3114 = vunpack.c.l.b16 %v3060
        %v3115 = vunpack.c.l.b16 %v3061
        %v3116 = vunpack.c.l.b16 %v3062
        %v3117 = vunpack.c.l.b16 %v3063
        %v3118 = vunpack.c.l.b16 %v3064
        %v3119 = vunpack.c.l.b16 %v3065
        %v3120 = vunpack.c.l.b16 %v3066
        %v3121 = vunpack.c.l.b16 %v3067
        %v3122 = vunpack.c.l.b16 %v3068
        %v3123 = vunpack.c.l.b16 %v3069
        %v3124 = vunpack.c.l.b16 %v3070
        %v3125 = vunpack.c.l.b16 %v3071
        %v3126 = vunpack.c.l.b16 %v3072
        %v3127 = vunpack.c.l.b16 %v3073
        %v3128 = vunpack.c.l.b16 %v3074
        %v3129 = vpack.c.b16 %v3110, %v3109
        %v3130 = vpack.c.b16 %v3112, %v3111
        %v3131 = vpack.c.b16 %v3114, %v3113
        %v3132 = vpack.c.b16 %v3116, %v3115
        %v3133 = vpack.c.b16 %v3118, %v3117
        %v3134 = vpack.c.b16 %v3120, %v3119
        %v3135 = vpack.c.b16 %v3122, %v3121
        %v3136 = vpack.c.b16 %v3124, %v3123
        %v3137 = vpack.c.b16 %v3126, %v3125
        %v3138 = vpack.c.b16 %v3128, %v3127
        %v3150 = vsel %vm1711, %v3084, 0
        %v3153 = vsel %vm1711, %v3086, 0
        %3155 = vmatprep.subr.bf16.mxu0 0
        %3156 = vmatpush1.bf16.msra.mxu0 %v3129
        %3157 = vmatprep.subr.bf16.mxu0 0
        %3158 = vmatpush1.bf16.msra.mxu0 %v3130
        %3159 = vmatprep.subr.bf16.mxu0 0
        %3160 = vmatpush1.bf16.msra.mxu0 %v3131
        %3161 = vmatprep.subr.bf16.mxu0 0
        %3162 = vmatpush1.bf16.msra.mxu0 %v3132
        %3163 = vmatprep.subr.bf16.mxu0 0
        %3164 = vmatpush1.bf16.msra.mxu0 %v3133
        %3165 = vmatprep.subr.bf16.mxu0 0
        %3166 = vmatpush1.bf16.msra.mxu0 %v3134
        %3167 = vmatprep.subr.bf16.mxu0 0
        %3168 = vmatpush1.bf16.msra.mxu0 %v3135
        %3169 = vmatprep.subr.bf16.mxu0 0
        %3170 = vmatpush1.bf16.msra.mxu0 %v3136
        %3171 = vmatprep.subr.bf16.mxu0 0
        %3172 = vmatpush1.bf16.msra.mxu0 %v3137
        %3173 = vmatprep.subr.bf16.mxu0 0
        %3174 = vmatpush1.bf16.msra.mxu0 %v3138
        %3175 = vmatprep.subr.bf16.mxu0 0
        %3176 = vmatpush1.bf16.msra.mxu0 0
        %3177 = vmatprep.subr.bf16.mxu0 0
        %3178 = vmatpush1.bf16.msra.mxu0 0
        %3179 = vmatprep.subr.bf16.mxu0 0
        %3180 = vmatpush1.bf16.msra.mxu0 0
        %3181 = vmatprep.subr.bf16.mxu0 0
        %3182 = vmatpush1.bf16.msra.mxu0 0
        %3183 = vmatprep.subr.bf16.mxu0 0
        %3184 = vmatpush1.bf16.msra.mxu0 0
        %3185 = vmatprep.subr.bf16.mxu0 0
        %3186 = vmatpush1.bf16.msra.mxu0 0
        %3187 = vmatprep.mubr.bf16.mxu0 %v3150
        %3188 = vmatmul.mubr.bf16.gmra.mrb[0].mxu0 %v3083
        %v3189 = vpop.f32.mrb[0].mxu0
        %v3190 = vadd.f32 0.0, %v3189
        %v3191 = vpop.f32.mrb[0].mxu0
        %v3192 = vpop.f32.mrb[0].mxu0
        %v3193 = vadd.f32 0.0, %v3192
        %v3194 = vpop.f32.mrb[0].mxu0
        %3195 = vmatprep.mubr.bf16.mxu0 %v3153
        %3196 = vmatmul.mubr.bf16.gmra.mrb[0].mxu0 %v3085
        %v3197 = vpop.f32.mrb[0].mxu0
        %v3198 = vadd.f32 0.0, %v3197
        %v3199 = vpop.f32.mrb[0].mxu0
        %v3200 = vpop.f32.mrb[0].mxu0
        %v3201 = vadd.f32 0.0, %v3200
        %v3202 = vpop.f32.mrb[0].mxu0
        %3203 = vdwg.mxu0
        %v3204 = vadd.f32 %v3022, %v3190
        %v3205 = vadd.f32 %v3023, %v3193
        %v3206 = vadd.f32 %v3024, %v3198
        %v3207 = vadd.f32 %v3025, %v3201
        %v3208 = vld [vmem:[%s4] sm:$0x1]
        %v3210 = vlaneseq
        %v3211 = vshrl.u32 %v3210, 7
        %v3212 = vsub.s32 0, %v3211
        %v3213 = vrot.slane %v3208, %v3212
        %v3215 = vadd.f32 %v3204, %v3213
        %v3216 = vadd.f32 %v3205, %v3213
        %v3217 = vadd.f32 %v3206, %v3213
        %v3218 = vadd.f32 %v3207, %v3213
        %v3219 = vmax.f32 %v3215, 0.0
        %v3220 = vmax.f32 %v3216, 0.0
        %v3221 = vmax.f32 %v3217, 0.0
        %v3222 = vmax.f32 %v3218, 0.0
        %3223 = vst [vmem:[%s232] sm:$0xff] %v3219
        %3224 = vst [vmem:[%s232 + $0x8] sm:$0xff] %v3220
        %3225 = vst [vmem:[%s232 + $0x10] sm:$0xff] %v3221
        %3226 = vst [vmem:[%s232 + $0x18] sm:$0xff] %v3222
        %s3227 = sand.u32 %s138, 1
        %s3228 = scalar_lea.sflag [#allocation5], %s3227
        %s3229 = sand.u32 %s138, 1
        %s3230 = smul.addr %s3229, 32
        %s3231 = scalar_lea.vmem [#allocation6], %s3230
        // Predicated region
        $region45: #{tpu_custom_call.1} parent=39 // pred_check
          %p3232 = pneg %p148
        $region46: #{tpu_custom_call.1} parent=39 // pred_check_branch
          %3234 = sbr.rel (%p3232) target = $region48
        $region47: #{tpu_custom_call.1} parent=39 // pred_region
          %s3236 = ssub.s32 512, 512
          %3237 = vsyncadd %s3228, %s3236
          %s3238 = smul.addr %s20, 4
          %s3239 = smul.addr %s3238, 128
          %s3240 = scalar_lea.hbm %s5, %s3239
          %s3241 = sshll.u32 %s3231, 4
          %s3242 = int_to_ptr.vmem [resolvable:$true] %s3241
          %3247 = dma.vmem_to_hbm [thread:$0]  %s3242, 512, %s3240, %s3228, 128, 128, 8
        $region48: #{tpu_custom_call.1} parent=39 // pred_fallthru
          _
      $region40: #{tpu_custom_call.1} parent=5 // pred_fallthru
        _
      %p3248 = scmp.le.s32.totalorder 2, %s15
      // Predicated region
      $region49: #{tpu_custom_call.1} parent=5 // pred_check
        %p3249 = pneg %p3248
      $region50: #{tpu_custom_call.1} parent=5 // pred_check_branch
        %3251 = sbr.rel (%p3249) target = $region52
      $region51: #{tpu_custom_call.1} parent=5 // pred_region
        %s3252 = ssub.s32 %s15, 2
        // Predicated region
        $region53: #{tpu_custom_call.1} parent=51 // pred_check
          %p3253 = pneg %p154
        $region54: #{tpu_custom_call.1} parent=51 // pred_check_branch
          %3255 = sbr.rel (%p3253) target = $region56
        $region55: #{tpu_custom_call.1} parent=51 // pred_region
          %s3256 = sand.u32 %s139, 1
          %s3257 = scalar_lea.sflag [#allocation5], %s3256
          %s3258 = sand.u32 %s139, 1
          %s3259 = smul.addr %s3258, 32
          %s3260 = scalar_lea.vmem [#allocation6], %s3259
          %3261 = dma.done %s3257, 512
        $region56: #{tpu_custom_call.1} parent=51 // pred_fallthru
          _
      $region52: #{tpu_custom_call.1} parent=5 // pred_fallthru
        _
    $region6: #{tpu_custom_call.1} parent=1 // loop_footer
      %s19 = sadd.s32 1, %s15
    $region7: #{tpu_custom_call.1} parent=1 // loop_footer_branch
      %14 = sbr.rel target = $region3
    $region8: #{tpu_custom_call.1} parent=1 // loop_exit
      _
    %3262 = vsyncpa [#allocation4], 1
    %s3263 = scalar_lea.sflag [#allocation4], 1
    %3264 = vsyncpa %s3263, 1
    %3265 = vsyncpa [#allocation5], 1
    %s3266 = scalar_lea.sflag [#allocation5], 1
    %3267 = vsyncpa %s3266, 1

</llo_original>
